<compile_context>
chip_gen: v6e
topology: v6e:2x2x1
jax: 0.10.0
libtpu: 0.0.40
codegen_flags: <defaults>
</compile_context>

<pallas_src>
import functools

import numpy as np
import jax
import jax.numpy as jnp
from jax.experimental import pallas as pl
from jax.experimental.pallas import tpu as pltpu


# ----------------------------------------------------------------------------
# InceptionDWConv2d as "unified taps" over a channels-last feature map
# ----------------------------------------------------------------------------
_SQ = 3          # square kernel size
_BAND = 11       # band kernel size
_PAD = _BAND // 2


def build_inception_taps(dim, gc, w3, b3, ww, bw, wh, bh):
    """Collapse the 4 Inception branches into per-tap, per-channel weights.

    Returns (offsets, wtap, bias):
      offsets: python list of (dh, dw) tap offsets (25 entries)
      wtap:    (n_taps, dim) f32 -- weight of tap t for channel c
      bias:    (1, dim) f32
    Channel order matches torch.cat((identity, 3x3, 1x11, 11x1)).
    """
    c_id = dim - 3 * gc
    r = _SQ // 2
    offs = sorted({(dh, dw) for dh in range(-r, r + 1) for dw in range(-r, r + 1)}
                  | {(0, dw) for dw in range(-_PAD, _PAD + 1)}
                  | {(dh, 0) for dh in range(-_PAD, _PAD + 1)})
    idx = {o: i for i, o in enumerate(offs)}

    wt = np.zeros((len(offs), dim), np.float32)
    bias = np.zeros((dim,), np.float32)
    w3, ww, wh = np.asarray(w3), np.asarray(ww), np.asarray(wh)

    wt[idx[(0, 0)], :c_id] = 1.0                                   # identity
    for i in range(_SQ):                                           # 3x3 dw
        for j in range(_SQ):
            wt[idx[(i - r, j - r)], c_id:c_id + gc] = w3[:, i, j]
    bias[c_id:c_id + gc] = np.asarray(b3)
    for j in range(_BAND):                                         # 1x11 dw
        wt[idx[(0, j - _PAD)], c_id + gc:c_id + 2 * gc] = ww[:, j]
    bias[c_id + gc:c_id + 2 * gc] = np.asarray(bw)
    for i in range(_BAND):                                         # 11x1 dw
        wt[idx[(i - _PAD, 0)], c_id + 2 * gc:c_id + 3 * gc] = wh[:, i]
    bias[c_id + 2 * gc:] = np.asarray(bh)
    return offs, jnp.asarray(wt), jnp.asarray(bias).reshape(1, dim)


def _inception_dw_kernel(x_ref, wtap_ref, bias_ref, o_ref, xpad_ref,
                         *, taps, H, W, pad):
    # x_ref    : (1, H, W, Cb)      VMEM
    # wtap_ref : (n_taps, Cb)       VMEM
    # bias_ref : (1, Cb)            VMEM
    # o_ref    : (1, H, W, Cb)      VMEM
    # xpad_ref : (H+2p, W+2p, Cb)   VMEM scratch (zero border; no HBM padding)
    xpad_ref[...] = jnp.zeros_like(xpad_ref)
    xpad_ref[pad:pad + H, pad:pad + W, :] = x_ref[0]

    acc = jnp.zeros((H, W, x_ref.shape[-1]), jnp.float32)
    for t, (dh, dw) in enumerate(taps):          # 25 full-lane-width VPU FMAs
        acc = acc + (xpad_ref[pad + dh:pad + dh + H, pad + dw:pad + dw + W, :]
                     * wtap_ref[t])
    o_ref[0] = (acc + bias_ref[0]).astype(o_ref.dtype)


def inception_dwconv2d(x_nhwc, tap_offsets, wtap, bias):
    B, H, W, C = x_nhwc.shape
    n_taps = wtap.shape[0]
    pad = max(max(abs(dh), abs(dw)) for dh, dw in tap_offsets)

    # Tile the channel axis onto the grid so blocks fit VMEM (64 MiB on v7x).
    c_blk = 128 if C % 128 == 0 else C
    n_cb = C // c_blk

    blk = H * W * c_blk * 4
    need = (2 * (2 * blk + (n_taps + 1) * c_blk * 4)
            + (H + 2 * pad) * (W + 2 * pad) * c_blk * 4 + (4 << 20))
    vmem_limit = int(min(max(need, 32 << 20), 64 << 20))

    kern = functools.partial(_inception_dw_kernel, taps=tap_offsets,
                             H=H, W=W, pad=pad)
    return pl.pallas_call(
        kern,
        out_shape=jax.ShapeDtypeStruct((B, H, W, C), x_nhwc.dtype),
        grid=(B, n_cb),
        in_specs=[
            pl.BlockSpec((1, H, W, c_blk), lambda b, c: (b, 0, 0, c)),
            pl.BlockSpec((n_taps, c_blk), lambda b, c: (0, c)),
            pl.BlockSpec((1, c_blk), lambda b, c: (0, c)),
        ],
        out_specs=pl.BlockSpec((1, H, W, c_blk), lambda b, c: (b, 0, 0, c)),
        scratch_shapes=[pltpu.VMEM((H + 2 * pad, W + 2 * pad, c_blk),
                                   x_nhwc.dtype)],
        compiler_params=pltpu.CompilerParams(
            dimension_semantics=("parallel", "parallel"),
            vmem_limit_bytes=vmem_limit),
    )(x_nhwc, wtap, bias)


# ----------------------------------------------------------------------------
# Fused: v = x @ Wv  ->  mask-average-pool (MXU)  ->  to_out projection
# (k/v are single pooled tokens, softmax over the length-1 axis == 1, so the
#  attention output is exactly v_pool broadcast over all positions.)
# ----------------------------------------------------------------------------
def _pool_project_kernel(x_ref, m_ref, wv_ref, wo_ref, bo_ref, o_ref,
                         acc_ref, area_ref, *, eps, mxu_dtype):
    # x_ref : (1, T, C)   conv features (channels-last)
    # m_ref : (1, 1, T)   mask logits (lane-dense)
    # wv_ref: (C, inner)  v-projection weights (already mxu_dtype)
    # wo_ref: (inner, D)  to_out weights, bo_ref: (1, D) bias
    # o_ref : (1, 1, D)
    t = pl.program_id(1)

    @pl.when(t == 0)
    def _():
        acc_ref[...] = jnp.zeros_like(acc_ref)
        area_ref[...] = jnp.zeros_like(area_ref)

    s = jax.nn.sigmoid(m_ref[0])                                    # (1, T) f32
    v = jnp.dot(x_ref[0].astype(mxu_dtype), wv_ref[...],
                preferred_element_type=jnp.float32)                 # (T, inner)
    acc_ref[...] += jnp.dot(s, v, preferred_element_type=jnp.float32)  # (1, inner)
    area_ref[...] += jnp.sum(s)

    @pl.when(t == pl.num_programs(1) - 1)
    def _():
        inv = pl.reciprocal(area_ref[...] + eps, approx=True)       # EUP
        pooled = acc_ref[...] * inv                                 # (1, inner)
        y = jnp.dot(pooled, wo_ref[...],
                    preferred_element_type=jnp.float32) + bo_ref[...]
        o_ref[0] = y.astype(o_ref.dtype)


def masked_pool_and_project(x_flat, mask_row, w_v, w_out_t, b_out_row,
                            *, eps=0.0005, mxu_dtype=jnp.bfloat16):
    B, HW, C = x_flat.shape
    inner = w_v.shape[1]
    D = w_out_t.shape[1]

    t_hw = HW
    for cand in (1024, 512, 256, 128):       # largest M-tile that divides HW
        if HW % cand == 0:
            t_hw = cand
            break
    n_t = HW // t_hw

    kern = functools.partial(_pool_project_kernel, eps=eps, mxu_dtype=mxu_dtype)
    return pl.pallas_call(
        kern,
        out_shape=jax.ShapeDtypeStruct((B, 1, D), x_flat.dtype),
        grid=(B, n_t),                        # reduction (HW tiles) last
        in_specs=[
            pl.BlockSpec((1, t_hw, C), lambda b, t: (b, t, 0)),
            pl.BlockSpec((1, 1, t_hw), lambda b, t: (b, 0, t)),
            pl.BlockSpec((C, inner), lambda b, t: (0, 0)),
            pl.BlockSpec((inner, D), lambda b, t: (0, 0)),
            pl.BlockSpec((1, D), lambda b, t: (0, 0)),
        ],
        out_specs=pl.BlockSpec((1, 1, D), lambda b, t: (b, 0, 0)),
        scratch_shapes=[pltpu.VMEM((1, inner), jnp.float32),
                        pltpu.VMEM((1, 1), jnp.float32)],
        compiler_params=pltpu.CompilerParams(
            dimension_semantics=("parallel", "arbitrary")),
    )(x_flat, mask_row, w_v, w_out_t, b_out_row)


# ----------------------------------------------------------------------------
# Parameters
# ----------------------------------------------------------------------------
def make_params(key, dim, heads, dim_head):
    """Torch-layout parameters (as the nn.Module would store them)."""
    inner = heads * dim_head
    gc = int(dim * 0.125)
    ks = jax.random.split(key, 9)
    return {
        'gc': gc,
        'w3': 0.1 * jax.random.normal(ks[0], (gc, 3, 3), jnp.float32),
        'b3': 0.1 * jax.random.normal(ks[1], (gc,), jnp.float32),
        'ww': 0.1 * jax.random.normal(ks[2], (gc, 11), jnp.float32),
        'bw': 0.1 * jax.random.normal(ks[3], (gc,), jnp.float32),
        'wh': 0.1 * jax.random.normal(ks[4], (gc, 11), jnp.float32),
        'bh': 0.1 * jax.random.normal(ks[5], (gc,), jnp.float32),
        # to_qkv Conv2d(dim, 3*inner, 1, bias=False): weight (3*inner, dim)
        'w_qkv': 0.1 * jax.random.normal(ks[6], (3 * inner, dim), jnp.float32),
        # to_out Linear(inner, dim)
        'w_out': 0.1 * jax.random.normal(ks[7], (dim, inner), jnp.float32),
        'b_out': 0.1 * jax.random.normal(ks[8], (dim,), jnp.float32),
    }


def prepare_params(raw, dim, heads, dim_head, *, mxu_dtype=jnp.bfloat16):
    """One-time conversion of torch-layout params to kernel-ready layouts
    (pre-transposed weights, unified conv taps, pre-cast MXU operands)."""
    inner = heads * dim_head
    offs, wtap, bias = build_inception_taps(
        dim, raw['gc'], raw['w3'], raw['b3'], raw['ww'], raw['bw'],
        raw['wh'], raw['bh'])
    w_v = jnp.asarray(raw['w_qkv'])[2 * inner:, :].T      # (dim, inner)
    return {
        'tap_offsets': offs,
        'wtap': wtap,
        'bias_tap': bias,
        'w_v': w_v.astype(mxu_dtype),                     # feeds MXU (bf16)
        'w_out_t': jnp.asarray(raw['w_out']).T,           # (inner, dim) f32
        'b_out': jnp.asarray(raw['b_out']).reshape(1, -1),
        'mxu_dtype': mxu_dtype,
    }


# ----------------------------------------------------------------------------
# KAEM_layer forward
# ----------------------------------------------------------------------------
def kaem_layer_forward(x, mask, params, *, heads, dim_head):
    """x: (B, dim, H, W) NCHW (torch layout); mask: (B, 1, H, W).
    Returns (B, H*W, dim), matching KAEM_layer.forward."""
    B, C, H, W = x.shape
    inner = heads * dim_head
    assert params['w_v'].shape == (C, inner)

    # single NCHW -> NHWC layout change; every kernel below is channels-last
    x_nhwc = jnp.transpose(x, (0, 2, 3, 1))

    # 1) InceptionDWConv2d
    x_conv = inception_dwconv2d(x_nhwc, params['tap_offsets'],
                                params['wtap'], params['bias_tap'])
    x_flat = x_conv.reshape(B, H * W, C)      # contiguous reshape (free)

    # 2) WTConv2d(1, 1) on the mask
    # TODO(synk): WTConv2d (wavelet depthwise conv) source not provided in the
    # module spec; applied as identity on the mask.
    mask_row = mask.reshape(B, 1, H * W)

    # 3-6) to_qkv / MaskAveragePooling / attention / to_out, fused.
    # k and v are pooled to a single token; softmax over the length-1 key axis
    # is exactly 1.0, so the attention output equals v_pool at every query
    # position (q, k, scale are dead code).  Only the v columns of to_qkv are
    # computed, fused with the pooling + output projection, then broadcast.
    y_vec = masked_pool_and_project(
        x_flat, mask_row, params['w_v'], params['w_out_t'], params['b_out'],
        mxu_dtype=params['mxu_dtype'])        # (B, 1, dim)

    D = params['w_out_t'].shape[1]
    return jnp.broadcast_to(y_vec, (B, H * W, D))


# ----------------------------------------------------------------------------
# Smoke test
# ----------------------------------------------------------------------------
if __name__ == "__main__":
    B, dim, H, W = 2, 16, 16, 16
    heads, dim_head = 2, 8

    key = jax.random.PRNGKey(0)
    kx, km, kp = jax.random.split(key, 3)
    x = jax.random.normal(kx, (B, dim, H, W), jnp.float32)    # NCHW, like torch
    mask = jax.random.normal(km, (B, 1, H, W), jnp.float32)

    raw = make_params(kp, dim, heads, dim_head)
    params = prepare_params(raw, dim, heads, dim_head)

    y = kaem_layer_forward(x, mask, params, heads=heads, dim_head=dim_head)
    jax.block_until_ready(y)
    assert y.shape == (B, H * W, dim)
    assert bool(jnp.all(jnp.isfinite(y)))
    print("KERNEL_OK")
</pallas_src>

<mosaic_0001>
module attributes {stable_mosaic.version = 11 : i64} {
  func.func @_inception_dw_kernel(%arg0: i32, %arg1: i32, %arg2: memref<1x16x16x16xf32, #tpu.memory_space<vmem>>, %arg3: memref<25x16xf32, #tpu.memory_space<vmem>>, %arg4: memref<1x16xf32, #tpu.memory_space<vmem>>, %arg5: memref<1x16x16x16xf32, #tpu.memory_space<vmem>>, %arg6: memref<26x26x16xf32, #tpu.memory_space<vmem>>) attributes {dimension_semantics = [#tpu.dimension_semantics<parallel>, #tpu.dimension_semantics<parallel>], iteration_bounds = array<i64: 2, 1>, scalar_prefetch = 0 : i64, scratch_operands = 1 : i64, tpu.core_type = #tpu.core_type<tc>, window_params = [{transform_indices = @transform_0, window_bounds = array<i64: 1, 16, 16, 16>}, {transform_indices = @transform_1, window_bounds = array<i64: 25, 16>}, {transform_indices = @transform_2, window_bounds = array<i64: 1, 16>}, {transform_indices = @transform_3, window_bounds = array<i64: 1, 16, 16, 16>}]} {
    %cst = arith.constant 0.000000e+00 : f32
    %0 = vector.broadcast %cst : f32 to vector<26x26x16xf32>
    %c0 = arith.constant 0 : index
    %c0_0 = arith.constant 0 : index
    %c0_1 = arith.constant 0 : index
    %1 = vector.load %arg6[%c0, %c0_0, %c0_1] : memref<26x26x16xf32, #tpu.memory_space<vmem>>, vector<26x26x16xf32>
    tpu.vector_store %arg6[%c0, %c0_0, %c0_1], %0 {strides = array<i32>} : memref<26x26x16xf32, #tpu.memory_space<vmem>>, vector<26x26x16xf32>,
    %c0_2 = arith.constant 0 : index
    %c0_3 = arith.constant 0 : index
    %c0_4 = arith.constant 0 : index
    %c0_5 = arith.constant 0 : index
    %2 = vector.load %arg2[%c0_2, %c0_3, %c0_4, %c0_5] : memref<1x16x16x16xf32, #tpu.memory_space<vmem>>, vector<1x16x16x16xf32>
    %3 = vector.shape_cast %2 : vector<1x16x16x16xf32> to vector<16x16x16xf32>
    %c5 = arith.constant 5 : index
    %c5_6 = arith.constant 5 : index
    %c0_7 = arith.constant 0 : index
    %4 = vector.load %arg6[%c5, %c5_6, %c0_7] : memref<26x26x16xf32, #tpu.memory_space<vmem>>, vector<16x16x16xf32>
    tpu.vector_store %arg6[%c5, %c5_6, %c0_7], %3 {strides = array<i32>} : memref<26x26x16xf32, #tpu.memory_space<vmem>>, vector<16x16x16xf32>,
    %cst_8 = arith.constant 0.000000e+00 : f32
    %5 = vector.broadcast %cst_8 : f32 to vector<16x16x16xf32>
    %c0_9 = arith.constant 0 : index
    %c5_10 = arith.constant 5 : index
    %c0_11 = arith.constant 0 : index
    %6 = vector.load %arg6[%c0_9, %c5_10, %c0_11] : memref<26x26x16xf32, #tpu.memory_space<vmem>>, vector<16x16x16xf32>
    %c0_12 = arith.constant 0 : index
    %c0_13 = arith.constant 0 : index
    %7 = vector.load %arg3[%c0_12, %c0_13] : memref<25x16xf32, #tpu.memory_space<vmem>>, vector<1x16xf32>
    %8 = vector.shape_cast %7 : vector<1x16xf32> to vector<16xf32>
    %9 = vector.shape_cast %8 : vector<16xf32> to vector<1x1x16xf32>
    %10 = vector.broadcast %9 : vector<1x1x16xf32> to vector<16x16x16xf32>
    %11 = arith.mulf %6, %10 : vector<16x16x16xf32>
    %12 = arith.addf %5, %11 : vector<16x16x16xf32>
    %c1 = arith.constant 1 : index
    %c5_14 = arith.constant 5 : index
    %c0_15 = arith.constant 0 : index
    %13 = vector.load %arg6[%c1, %c5_14, %c0_15] : memref<26x26x16xf32, #tpu.memory_space<vmem>>, vector<16x16x16xf32>
    %c1_16 = arith.constant 1 : index
    %c0_17 = arith.constant 0 : index
    %14 = vector.load %arg3[%c1_16, %c0_17] : memref<25x16xf32, #tpu.memory_space<vmem>>, vector<1x16xf32>
    %15 = vector.shape_cast %14 : vector<1x16xf32> to vector<16xf32>
    %16 = vector.shape_cast %15 : vector<16xf32> to vector<1x1x16xf32>
    %17 = vector.broadcast %16 : vector<1x1x16xf32> to vector<16x16x16xf32>
    %18 = arith.mulf %13, %17 : vector<16x16x16xf32>
    %19 = arith.addf %12, %18 : vector<16x16x16xf32>
    %c2 = arith.constant 2 : index
    %c5_18 = arith.constant 5 : index
    %c0_19 = arith.constant 0 : index
    %20 = vector.load %arg6[%c2, %c5_18, %c0_19] : memref<26x26x16xf32, #tpu.memory_space<vmem>>, vector<16x16x16xf32>
    %c2_20 = arith.constant 2 : index
    %c0_21 = arith.constant 0 : index
    %21 = vector.load %arg3[%c2_20, %c0_21] : memref<25x16xf32, #tpu.memory_space<vmem>>, vector<1x16xf32>
    %22 = vector.shape_cast %21 : vector<1x16xf32> to vector<16xf32>
    %23 = vector.shape_cast %22 : vector<16xf32> to vector<1x1x16xf32>
    %24 = vector.broadcast %23 : vector<1x1x16xf32> to vector<16x16x16xf32>
    %25 = arith.mulf %20, %24 : vector<16x16x16xf32>
    %26 = arith.addf %19, %25 : vector<16x16x16xf32>
    %c3 = arith.constant 3 : index
    %c5_22 = arith.constant 5 : index
    %c0_23 = arith.constant 0 : index
    %27 = vector.load %arg6[%c3, %c5_22, %c0_23] : memref<26x26x16xf32, #tpu.memory_space<vmem>>, vector<16x16x16xf32>
    %c3_24 = arith.constant 3 : index
    %c0_25 = arith.constant 0 : index
    %28 = vector.load %arg3[%c3_24, %c0_25] : memref<25x16xf32, #tpu.memory_space<vmem>>, vector<1x16xf32>
    %29 = vector.shape_cast %28 : vector<1x16xf32> to vector<16xf32>
    %30 = vector.shape_cast %29 : vector<16xf32> to vector<1x1x16xf32>
    %31 = vector.broadcast %30 : vector<1x1x16xf32> to vector<16x16x16xf32>
    %32 = arith.mulf %27, %31 : vector<16x16x16xf32>
    %33 = arith.addf %26, %32 : vector<16x16x16xf32>
    %c4 = arith.constant 4 : index
    %c4_26 = arith.constant 4 : index
    %c0_27 = arith.constant 0 : index
    %34 = vector.load %arg6[%c4, %c4_26, %c0_27] : memref<26x26x16xf32, #tpu.memory_space<vmem>>, vector<16x16x16xf32>
    %c4_28 = arith.constant 4 : index
    %c0_29 = arith.constant 0 : index
    %35 = vector.load %arg3[%c4_28, %c0_29] : memref<25x16xf32, #tpu.memory_space<vmem>>, vector<1x16xf32>
    %36 = vector.shape_cast %35 : vector<1x16xf32> to vector<16xf32>
    %37 = vector.shape_cast %36 : vector<16xf32> to vector<1x1x16xf32>
    %38 = vector.broadcast %37 : vector<1x1x16xf32> to vector<16x16x16xf32>
    %39 = arith.mulf %34, %38 : vector<16x16x16xf32>
    %40 = arith.addf %33, %39 : vector<16x16x16xf32>
    %c4_30 = arith.constant 4 : index
    %c5_31 = arith.constant 5 : index
    %c0_32 = arith.constant 0 : index
    %41 = vector.load %arg6[%c4_30, %c5_31, %c0_32] : memref<26x26x16xf32, #tpu.memory_space<vmem>>, vector<16x16x16xf32>
    %c5_33 = arith.constant 5 : index
    %c0_34 = arith.constant 0 : index
    %42 = vector.load %arg3[%c5_33, %c0_34] : memref<25x16xf32, #tpu.memory_space<vmem>>, vector<1x16xf32>
    %43 = vector.shape_cast %42 : vector<1x16xf32> to vector<16xf32>
    %44 = vector.shape_cast %43 : vector<16xf32> to vector<1x1x16xf32>
    %45 = vector.broadcast %44 : vector<1x1x16xf32> to vector<16x16x16xf32>
    %46 = arith.mulf %41, %45 : vector<16x16x16xf32>
    %47 = arith.addf %40, %46 : vector<16x16x16xf32>
    %c4_35 = arith.constant 4 : index
    %c6 = arith.constant 6 : index
    %c0_36 = arith.constant 0 : index
    %48 = vector.load %arg6[%c4_35, %c6, %c0_36] : memref<26x26x16xf32, #tpu.memory_space<vmem>>, vector<16x16x16xf32>
    %c6_37 = arith.constant 6 : index
    %c0_38 = arith.constant 0 : index
    %49 = vector.load %arg3[%c6_37, %c0_38] : memref<25x16xf32, #tpu.memory_space<vmem>>, vector<1x16xf32>
    %50 = vector.shape_cast %49 : vector<1x16xf32> to vector<16xf32>
    %51 = vector.shape_cast %50 : vector<16xf32> to vector<1x1x16xf32>
    %52 = vector.broadcast %51 : vector<1x1x16xf32> to vector<16x16x16xf32>
    %53 = arith.mulf %48, %52 : vector<16x16x16xf32>
    %54 = arith.addf %47, %53 : vector<16x16x16xf32>
    %c5_39 = arith.constant 5 : index
    %c0_40 = arith.constant 0 : index
    %c0_41 = arith.constant 0 : index
    %55 = vector.load %arg6[%c5_39, %c0_40, %c0_41] : memref<26x26x16xf32, #tpu.memory_space<vmem>>, vector<16x16x16xf32>
    %c7 = arith.constant 7 : index
    %c0_42 = arith.constant 0 : index
    %56 = vector.load %arg3[%c7, %c0_42] : memref<25x16xf32, #tpu.memory_space<vmem>>, vector<1x16xf32>
    %57 = vector.shape_cast %56 : vector<1x16xf32> to vector<16xf32>
    %58 = vector.shape_cast %57 : vector<16xf32> to vector<1x1x16xf32>
    %59 = vector.broadcast %58 : vector<1x1x16xf32> to vector<16x16x16xf32>
    %60 = arith.mulf %55, %59 : vector<16x16x16xf32>
    %61 = arith.addf %54, %60 : vector<16x16x16xf32>
    %c5_43 = arith.constant 5 : index
    %c1_44 = arith.constant 1 : index
    %c0_45 = arith.constant 0 : index
    %62 = vector.load %arg6[%c5_43, %c1_44, %c0_45] : memref<26x26x16xf32, #tpu.memory_space<vmem>>, vector<16x16x16xf32>
    %c8 = arith.constant 8 : index
    %c0_46 = arith.constant 0 : index
    %63 = vector.load %arg3[%c8, %c0_46] : memref<25x16xf32, #tpu.memory_space<vmem>>, vector<1x16xf32>
    %64 = vector.shape_cast %63 : vector<1x16xf32> to vector<16xf32>
    %65 = vector.shape_cast %64 : vector<16xf32> to vector<1x1x16xf32>
    %66 = vector.broadcast %65 : vector<1x1x16xf32> to vector<16x16x16xf32>
    %67 = arith.mulf %62, %66 : vector<16x16x16xf32>
    %68 = arith.addf %61, %67 : vector<16x16x16xf32>
    %c5_47 = arith.constant 5 : index
    %c2_48 = arith.constant 2 : index
    %c0_49 = arith.constant 0 : index
    %69 = vector.load %arg6[%c5_47, %c2_48, %c0_49] : memref<26x26x16xf32, #tpu.memory_space<vmem>>, vector<16x16x16xf32>
    %c9 = arith.constant 9 : index
    %c0_50 = arith.constant 0 : index
    %70 = vector.load %arg3[%c9, %c0_50] : memref<25x16xf32, #tpu.memory_space<vmem>>, vector<1x16xf32>
    %71 = vector.shape_cast %70 : vector<1x16xf32> to vector<16xf32>
    %72 = vector.shape_cast %71 : vector<16xf32> to vector<1x1x16xf32>
    %73 = vector.broadcast %72 : vector<1x1x16xf32> to vector<16x16x16xf32>
    %74 = arith.mulf %69, %73 : vector<16x16x16xf32>
    %75 = arith.addf %68, %74 : vector<16x16x16xf32>
    %c5_51 = arith.constant 5 : index
    %c3_52 = arith.constant 3 : index
    %c0_53 = arith.constant 0 : index
    %76 = vector.load %arg6[%c5_51, %c3_52, %c0_53] : memref<26x26x16xf32, #tpu.memory_space<vmem>>, vector<16x16x16xf32>
    %c10 = arith.constant 10 : index
    %c0_54 = arith.constant 0 : index
    %77 = vector.load %arg3[%c10, %c0_54] : memref<25x16xf32, #tpu.memory_space<vmem>>, vector<1x16xf32>
    %78 = vector.shape_cast %77 : vector<1x16xf32> to vector<16xf32>
    %79 = vector.shape_cast %78 : vector<16xf32> to vector<1x1x16xf32>
    %80 = vector.broadcast %79 : vector<1x1x16xf32> to vector<16x16x16xf32>
    %81 = arith.mulf %76, %80 : vector<16x16x16xf32>
    %82 = arith.addf %75, %81 : vector<16x16x16xf32>
    %c5_55 = arith.constant 5 : index
    %c4_56 = arith.constant 4 : index
    %c0_57 = arith.constant 0 : index
    %83 = vector.load %arg6[%c5_55, %c4_56, %c0_57] : memref<26x26x16xf32, #tpu.memory_space<vmem>>, vector<16x16x16xf32>
    %c11 = arith.constant 11 : index
    %c0_58 = arith.constant 0 : index
    %84 = vector.load %arg3[%c11, %c0_58] : memref<25x16xf32, #tpu.memory_space<vmem>>, vector<1x16xf32>
    %85 = vector.shape_cast %84 : vector<1x16xf32> to vector<16xf32>
    %86 = vector.shape_cast %85 : vector<16xf32> to vector<1x1x16xf32>
    %87 = vector.broadcast %86 : vector<1x1x16xf32> to vector<16x16x16xf32>
    %88 = arith.mulf %83, %87 : vector<16x16x16xf32>
    %89 = arith.addf %82, %88 : vector<16x16x16xf32>
    %c5_59 = arith.constant 5 : index
    %c5_60 = arith.constant 5 : index
    %c0_61 = arith.constant 0 : index
    %90 = vector.load %arg6[%c5_59, %c5_60, %c0_61] : memref<26x26x16xf32, #tpu.memory_space<vmem>>, vector<16x16x16xf32>
    %c12 = arith.constant 12 : index
    %c0_62 = arith.constant 0 : index
    %91 = vector.load %arg3[%c12, %c0_62] : memref<25x16xf32, #tpu.memory_space<vmem>>, vector<1x16xf32>
    %92 = vector.shape_cast %91 : vector<1x16xf32> to vector<16xf32>
    %93 = vector.shape_cast %92 : vector<16xf32> to vector<1x1x16xf32>
    %94 = vector.broadcast %93 : vector<1x1x16xf32> to vector<16x16x16xf32>
    %95 = arith.mulf %90, %94 : vector<16x16x16xf32>
    %96 = arith.addf %89, %95 : vector<16x16x16xf32>
    %c5_63 = arith.constant 5 : index
    %c6_64 = arith.constant 6 : index
    %c0_65 = arith.constant 0 : index
    %97 = vector.load %arg6[%c5_63, %c6_64, %c0_65] : memref<26x26x16xf32, #tpu.memory_space<vmem>>, vector<16x16x16xf32>
    %c13 = arith.constant 13 : index
    %c0_66 = arith.constant 0 : index
    %98 = vector.load %arg3[%c13, %c0_66] : memref<25x16xf32, #tpu.memory_space<vmem>>, vector<1x16xf32>
    %99 = vector.shape_cast %98 : vector<1x16xf32> to vector<16xf32>
    %100 = vector.shape_cast %99 : vector<16xf32> to vector<1x1x16xf32>
    %101 = vector.broadcast %100 : vector<1x1x16xf32> to vector<16x16x16xf32>
    %102 = arith.mulf %97, %101 : vector<16x16x16xf32>
    %103 = arith.addf %96, %102 : vector<16x16x16xf32>
    %c5_67 = arith.constant 5 : index
    %c7_68 = arith.constant 7 : index
    %c0_69 = arith.constant 0 : index
    %104 = vector.load %arg6[%c5_67, %c7_68, %c0_69] : memref<26x26x16xf32, #tpu.memory_space<vmem>>, vector<16x16x16xf32>
    %c14 = arith.constant 14 : index
    %c0_70 = arith.constant 0 : index
    %105 = vector.load %arg3[%c14, %c0_70] : memref<25x16xf32, #tpu.memory_space<vmem>>, vector<1x16xf32>
    %106 = vector.shape_cast %105 : vector<1x16xf32> to vector<16xf32>
    %107 = vector.shape_cast %106 : vector<16xf32> to vector<1x1x16xf32>
    %108 = vector.broadcast %107 : vector<1x1x16xf32> to vector<16x16x16xf32>
    %109 = arith.mulf %104, %108 : vector<16x16x16xf32>
    %110 = arith.addf %103, %109 : vector<16x16x16xf32>
    %c5_71 = arith.constant 5 : index
    %c8_72 = arith.constant 8 : index
    %c0_73 = arith.constant 0 : index
    %111 = vector.load %arg6[%c5_71, %c8_72, %c0_73] : memref<26x26x16xf32, #tpu.memory_space<vmem>>, vector<16x16x16xf32>
    %c15 = arith.constant 15 : index
    %c0_74 = arith.constant 0 : index
    %112 = vector.load %arg3[%c15, %c0_74] : memref<25x16xf32, #tpu.memory_space<vmem>>, vector<1x16xf32>
    %113 = vector.shape_cast %112 : vector<1x16xf32> to vector<16xf32>
    %114 = vector.shape_cast %113 : vector<16xf32> to vector<1x1x16xf32>
    %115 = vector.broadcast %114 : vector<1x1x16xf32> to vector<16x16x16xf32>
    %116 = arith.mulf %111, %115 : vector<16x16x16xf32>
    %117 = arith.addf %110, %116 : vector<16x16x16xf32>
    %c5_75 = arith.constant 5 : index
    %c9_76 = arith.constant 9 : index
    %c0_77 = arith.constant 0 : index
    %118 = vector.load %arg6[%c5_75, %c9_76, %c0_77] : memref<26x26x16xf32, #tpu.memory_space<vmem>>, vector<16x16x16xf32>
    %c16 = arith.constant 16 : index
    %c0_78 = arith.constant 0 : index
    %119 = vector.load %arg3[%c16, %c0_78] : memref<25x16xf32, #tpu.memory_space<vmem>>, vector<1x16xf32>
    %120 = vector.shape_cast %119 : vector<1x16xf32> to vector<16xf32>
    %121 = vector.shape_cast %120 : vector<16xf32> to vector<1x1x16xf32>
    %122 = vector.broadcast %121 : vector<1x1x16xf32> to vector<16x16x16xf32>
    %123 = arith.mulf %118, %122 : vector<16x16x16xf32>
    %124 = arith.addf %117, %123 : vector<16x16x16xf32>
    %c5_79 = arith.constant 5 : index
    %c10_80 = arith.constant 10 : index
    %c0_81 = arith.constant 0 : index
    %125 = vector.load %arg6[%c5_79, %c10_80, %c0_81] : memref<26x26x16xf32, #tpu.memory_space<vmem>>, vector<16x16x16xf32>
    %c17 = arith.constant 17 : index
    %c0_82 = arith.constant 0 : index
    %126 = vector.load %arg3[%c17, %c0_82] : memref<25x16xf32, #tpu.memory_space<vmem>>, vector<1x16xf32>
    %127 = vector.shape_cast %126 : vector<1x16xf32> to vector<16xf32>
    %128 = vector.shape_cast %127 : vector<16xf32> to vector<1x1x16xf32>
    %129 = vector.broadcast %128 : vector<1x1x16xf32> to vector<16x16x16xf32>
    %130 = arith.mulf %125, %129 : vector<16x16x16xf32>
    %131 = arith.addf %124, %130 : vector<16x16x16xf32>
    %c6_83 = arith.constant 6 : index
    %c4_84 = arith.constant 4 : index
    %c0_85 = arith.constant 0 : index
    %132 = vector.load %arg6[%c6_83, %c4_84, %c0_85] : memref<26x26x16xf32, #tpu.memory_space<vmem>>, vector<16x16x16xf32>
    %c18 = arith.constant 18 : index
    %c0_86 = arith.constant 0 : index
    %133 = vector.load %arg3[%c18, %c0_86] : memref<25x16xf32, #tpu.memory_space<vmem>>, vector<1x16xf32>
    %134 = vector.shape_cast %133 : vector<1x16xf32> to vector<16xf32>
    %135 = vector.shape_cast %134 : vector<16xf32> to vector<1x1x16xf32>
    %136 = vector.broadcast %135 : vector<1x1x16xf32> to vector<16x16x16xf32>
    %137 = arith.mulf %132, %136 : vector<16x16x16xf32>
    %138 = arith.addf %131, %137 : vector<16x16x16xf32>
    %c6_87 = arith.constant 6 : index
    %c5_88 = arith.constant 5 : index
    %c0_89 = arith.constant 0 : index
    %139 = vector.load %arg6[%c6_87, %c5_88, %c0_89] : memref<26x26x16xf32, #tpu.memory_space<vmem>>, vector<16x16x16xf32>
    %c19 = arith.constant 19 : index
    %c0_90 = arith.constant 0 : index
    %140 = vector.load %arg3[%c19, %c0_90] : memref<25x16xf32, #tpu.memory_space<vmem>>, vector<1x16xf32>
    %141 = vector.shape_cast %140 : vector<1x16xf32> to vector<16xf32>
    %142 = vector.shape_cast %141 : vector<16xf32> to vector<1x1x16xf32>
    %143 = vector.broadcast %142 : vector<1x1x16xf32> to vector<16x16x16xf32>
    %144 = arith.mulf %139, %143 : vector<16x16x16xf32>
    %145 = arith.addf %138, %144 : vector<16x16x16xf32>
    %c6_91 = arith.constant 6 : index
    %c6_92 = arith.constant 6 : index
    %c0_93 = arith.constant 0 : index
    %146 = vector.load %arg6[%c6_91, %c6_92, %c0_93] : memref<26x26x16xf32, #tpu.memory_space<vmem>>, vector<16x16x16xf32>
    %c20 = arith.constant 20 : index
    %c0_94 = arith.constant 0 : index
    %147 = vector.load %arg3[%c20, %c0_94] : memref<25x16xf32, #tpu.memory_space<vmem>>, vector<1x16xf32>
    %148 = vector.shape_cast %147 : vector<1x16xf32> to vector<16xf32>
    %149 = vector.shape_cast %148 : vector<16xf32> to vector<1x1x16xf32>
    %150 = vector.broadcast %149 : vector<1x1x16xf32> to vector<16x16x16xf32>
    %151 = arith.mulf %146, %150 : vector<16x16x16xf32>
    %152 = arith.addf %145, %151 : vector<16x16x16xf32>
    %c7_95 = arith.constant 7 : index
    %c5_96 = arith.constant 5 : index
    %c0_97 = arith.constant 0 : index
    %153 = vector.load %arg6[%c7_95, %c5_96, %c0_97] : memref<26x26x16xf32, #tpu.memory_space<vmem>>, vector<16x16x16xf32>
    %c21 = arith.constant 21 : index
    %c0_98 = arith.constant 0 : index
    %154 = vector.load %arg3[%c21, %c0_98] : memref<25x16xf32, #tpu.memory_space<vmem>>, vector<1x16xf32>
    %155 = vector.shape_cast %154 : vector<1x16xf32> to vector<16xf32>
    %156 = vector.shape_cast %155 : vector<16xf32> to vector<1x1x16xf32>
    %157 = vector.broadcast %156 : vector<1x1x16xf32> to vector<16x16x16xf32>
    %158 = arith.mulf %153, %157 : vector<16x16x16xf32>
    %159 = arith.addf %152, %158 : vector<16x16x16xf32>
    %c8_99 = arith.constant 8 : index
    %c5_100 = arith.constant 5 : index
    %c0_101 = arith.constant 0 : index
    %160 = vector.load %arg6[%c8_99, %c5_100, %c0_101] : memref<26x26x16xf32, #tpu.memory_space<vmem>>, vector<16x16x16xf32>
    %c22 = arith.constant 22 : index
    %c0_102 = arith.constant 0 : index
    %161 = vector.load %arg3[%c22, %c0_102] : memref<25x16xf32, #tpu.memory_space<vmem>>, vector<1x16xf32>
    %162 = vector.shape_cast %161 : vector<1x16xf32> to vector<16xf32>
    %163 = vector.shape_cast %162 : vector<16xf32> to vector<1x1x16xf32>
    %164 = vector.broadcast %163 : vector<1x1x16xf32> to vector<16x16x16xf32>
    %165 = arith.mulf %160, %164 : vector<16x16x16xf32>
    %166 = arith.addf %159, %165 : vector<16x16x16xf32>
    %c9_103 = arith.constant 9 : index
    %c5_104 = arith.constant 5 : index
    %c0_105 = arith.constant 0 : index
    %167 = vector.load %arg6[%c9_103, %c5_104, %c0_105] : memref<26x26x16xf32, #tpu.memory_space<vmem>>, vector<16x16x16xf32>
    %c23 = arith.constant 23 : index
    %c0_106 = arith.constant 0 : index
    %168 = vector.load %arg3[%c23, %c0_106] : memref<25x16xf32, #tpu.memory_space<vmem>>, vector<1x16xf32>
    %169 = vector.shape_cast %168 : vector<1x16xf32> to vector<16xf32>
    %170 = vector.shape_cast %169 : vector<16xf32> to vector<1x1x16xf32>
    %171 = vector.broadcast %170 : vector<1x1x16xf32> to vector<16x16x16xf32>
    %172 = arith.mulf %167, %171 : vector<16x16x16xf32>
    %173 = arith.addf %166, %172 : vector<16x16x16xf32>
    %c10_107 = arith.constant 10 : index
    %c5_108 = arith.constant 5 : index
    %c0_109 = arith.constant 0 : index
    %174 = vector.load %arg6[%c10_107, %c5_108, %c0_109] : memref<26x26x16xf32, #tpu.memory_space<vmem>>, vector<16x16x16xf32>
    %c24 = arith.constant 24 : index
    %c0_110 = arith.constant 0 : index
    %175 = vector.load %arg3[%c24, %c0_110] : memref<25x16xf32, #tpu.memory_space<vmem>>, vector<1x16xf32>
    %176 = vector.shape_cast %175 : vector<1x16xf32> to vector<16xf32>
    %177 = vector.shape_cast %176 : vector<16xf32> to vector<1x1x16xf32>
    %178 = vector.broadcast %177 : vector<1x1x16xf32> to vector<16x16x16xf32>
    %179 = arith.mulf %174, %178 : vector<16x16x16xf32>
    %180 = arith.addf %173, %179 : vector<16x16x16xf32>
    %c0_111 = arith.constant 0 : index
    %c0_112 = arith.constant 0 : index
    %181 = vector.load %arg4[%c0_111, %c0_112] : memref<1x16xf32, #tpu.memory_space<vmem>>, vector<1x16xf32>
    %182 = vector.shape_cast %181 : vector<1x16xf32> to vector<16xf32>
    %183 = vector.shape_cast %182 : vector<16xf32> to vector<1x1x16xf32>
    %184 = vector.broadcast %183 : vector<1x1x16xf32> to vector<16x16x16xf32>
    %185 = arith.addf %180, %184 : vector<16x16x16xf32>
    %c0_113 = arith.constant 0 : index
    %c0_114 = arith.constant 0 : index
    %c0_115 = arith.constant 0 : index
    %c0_116 = arith.constant 0 : index
    %186 = vector.load %arg5[%c0_113, %c0_114, %c0_115, %c0_116] : memref<1x16x16x16xf32, #tpu.memory_space<vmem>>, vector<1x16x16x16xf32>
    %187 = vector.shape_cast %186 : vector<1x16x16x16xf32> to vector<16x16x16xf32>
    %188 = vector.shape_cast %185 : vector<16x16x16xf32> to vector<1x16x16x16xf32>
    tpu.vector_store %arg5[%c0_113, %c0_114, %c0_115, %c0_116], %188 {strides = array<i32>} : memref<1x16x16x16xf32, #tpu.memory_space<vmem>>, vector<1x16x16x16xf32>,
    return
  }
  func.func @transform_0(%arg0: i32, %arg1: i32) -> (i32, i32, i32, i32) {
    %c0_i32 = arith.constant 0 : i32
    %c0_i32_0 = arith.constant 0 : i32
    %c0_i32_1 = arith.constant 0 : i32
    return %arg0, %c0_i32, %c0_i32_0, %arg1 : i32, i32, i32, i32
  }
  func.func @transform_1(%arg0: i32, %arg1: i32) -> (i32, i32) {
    %c0_i32 = arith.constant 0 : i32
    %c0_i32_0 = arith.constant 0 : i32
    return %c0_i32, %arg1 : i32, i32
  }
  func.func @transform_2(%arg0: i32, %arg1: i32) -> (i32, i32) {
    %c0_i32 = arith.constant 0 : i32
    %c0_i32_0 = arith.constant 0 : i32
    return %c0_i32, %arg1 : i32, i32
  }
  func.func @transform_3(%arg0: i32, %arg1: i32) -> (i32, i32, i32, i32) {
    %c0_i32 = arith.constant 0 : i32
    %c0_i32_0 = arith.constant 0 : i32
    %c0_i32_1 = arith.constant 0 : i32
    return %arg0, %c0_i32, %c0_i32_0, %arg1 : i32, i32, i32, i32
  }
}

</mosaic_0001>

<llo_original>
// kernel: tpu_custom_call.1
$region0: #{tpu_custom_call.1}
  #allocation0 [shape = 'u32[]', space=smem, size = 0x4, offset = 0x4, fixed_abs, tag = 'smem constant byte address 0x4 - core index']
  #allocation1 [shape = 'u32[144,128]{1,0:T(1,128)}', space=vmem, size = 0x12000, scoped, tag = 'internal scratch']
  #allocation2 [shape = 'f32[26,26,16]{2,1,0:T(8,128)}', space=vmem, size = 0x68000, scoped, tag = 'scratch operand']
  %s0 = inlined_call_operand.hbm [shape: f32[2,16,16,16], index: 0, kind: input, shape index: {}]
  %s1 = inlined_call_operand.vmem [shape: f32[25,16], index: 1, kind: input, shape index: {}]
  %s2 = inlined_call_operand.vmem [shape: f32[1,16], index: 2, kind: input, shape index: {}]
  %s3 = inlined_call_operand.hbm [shape: f32[2,16,16,16], index: 3, kind: output, shape index: {}]
  %s4 = sld [smem:[#allocation0]]
  $region49: #{tpu_custom_call.1} parent=0
    _
  %s6 = ssub.s32 1, %s4
  %s7 = scalar_select 0, %s6, %s4
  $region1: #{tpu_custom_call.1} parent=0
    #allocation3 [shape = 'u8[262144]{0}', space=vmem, size = 0x40000, scoped, tag = 'input window, operand 0']
    #allocation4 [shape = 's32[2]{0}', space=sflag, size = 0x8, scoped, tag = 'scoped memory for tpu_custom_call.1']
    #allocation5 [shape = 's32[2]{0}', space=sflag, size = 0x8, scoped, tag = 'scoped memory for tpu_custom_call.1']
    #allocation6 [shape = 'u8[262144]{0}', space=vmem, size = 0x40000, scoped, tag = 'output window, operand 0']
    %8 = vsyncpa [#allocation4], 0
    %s9 = scalar_lea.sflag [#allocation4], 1
    %10 = vsyncpa %s9, 0
    %11 = vsyncpa [#allocation5], 0
    %s12 = scalar_lea.sflag [#allocation5], 1
    %13 = vsyncpa %s12, 0
    loop: start=0, step=1, limit=4
    $region2: #{tpu_custom_call.1} parent=1 // loop_pre_header
      _
    $region3: #{tpu_custom_call.1} parent=1 // loop_header
      %s15 = sphi 0, %s19
      %p16 = scmp.ge.s32.totalorder %s15, 4
      %s22 = sphi 0, %s34
      %s23 = sphi 0, %s30
      %s24 = sphi 0, %s22
      %s25 = sphi 0, %s23
      %s26 = sphi 0, %s24
      %s27 = sphi 0, %s25
      %s39 = sphi 0, %s41
      %s42 = sphi 0, %s39
      %s43 = sphi 0, %s42
      %s59 = sphi 0, %s43
      %s65 = sphi 0, %s67
      %s68 = sphi 0, %s65
      %s69 = sphi 0, %s68
      %s85 = sphi 0, %s69
      %s91 = sphi 0, %s93
      %s94 = sphi 0, %s91
      %s95 = sphi 0, %s94
      %s111 = sphi 0, %s95
      %s119 = sphi 0, %s121
      %s122 = sphi 0, %s119
      %s123 = sphi 0, %s122
      %s139 = sphi 0, %s123
    $region4: #{tpu_custom_call.1} parent=1 // loop_header_branch
      %18 = sbr.rel (%p16) target = $region8
    $region5: #{tpu_custom_call.1} parent=1 // loop_body
      %s20 = ssub.s32 %s15, 1
      %s21 = ssub.s32 %s15, 2
      %s28 = sadd.s32 1, %s23
      %p29 = scmp.ge.s32.totalorder %s28, 1
      %s30 = scalar_select %p29, 0, %s28
      %s31 = sadd.s32 1, %s22
      %s32 = scalar_select %p29, %s31, %s22
      %p33 = scmp.ge.s32.totalorder %s32, 2
      %s34 = scalar_select %p33, 0, %s32
      %s35 = ssub.s32 %s22, %s34
      %s36 = ssub.s32 %s23, %s30
      %s37 = sor.u32 %s35, %s36
      %p38 = scmp.eq.s32.totalorder %s37, 0
      %s40 = sadd.s32 %s39, 1
      %s41 = scalar_select %p38, %s39, %s40
      %p44 = pneg %p38
      %p45 = scmp.eq.s32.totalorder %s15, 1
      %p46 = por %p44, %p45
      %p47 = scmp.ne.s32.totalorder %s39, %s42
      %p48 = scmp.eq.s32.totalorder %s15, 0
      %p49 = por %p47, %p48
      %p50 = scmp.ne.s32.totalorder %s39, %s42
      %p51 = scmp.eq.s32.totalorder %s20, 1
      %p52 = por %p50, %p51
      %p53 = scmp.ne.s32.totalorder %s42, %s43
      %p54 = scmp.eq.s32.totalorder %s20, 0
      %p55 = por %p53, %p54
      %p56 = scmp.ne.s32.totalorder %s42, %s43
      %p57 = scmp.eq.s32.totalorder %s21, 1
      %p58 = por %p56, %p57
      %p60 = scmp.ne.s32.totalorder %s43, %s59
      %p61 = scmp.eq.s32.totalorder %s21, 0
      %p62 = por %p60, %p61
      %s63 = ssub.s32 %s23, %s30
      %p64 = scmp.eq.s32.totalorder %s63, 0
      %s66 = sadd.s32 %s65, 1
      %s67 = scalar_select %p64, %s65, %s66
      %p70 = pneg %p64
      %p71 = scmp.eq.s32.totalorder %s15, 1
      %p72 = por %p70, %p71
      %p73 = scmp.ne.s32.totalorder %s65, %s68
      %p74 = scmp.eq.s32.totalorder %s15, 0
      %p75 = por %p73, %p74
      %p76 = scmp.ne.s32.totalorder %s65, %s68
      %p77 = scmp.eq.s32.totalorder %s20, 1
      %p78 = por %p76, %p77
      %p79 = scmp.ne.s32.totalorder %s68, %s69
      %p80 = scmp.eq.s32.totalorder %s20, 0
      %p81 = por %p79, %p80
      %p82 = scmp.ne.s32.totalorder %s68, %s69
      %p83 = scmp.eq.s32.totalorder %s21, 1
      %p84 = por %p82, %p83
      %p86 = scmp.ne.s32.totalorder %s69, %s85
      %p87 = scmp.eq.s32.totalorder %s21, 0
      %p88 = por %p86, %p87
      %s89 = ssub.s32 %s23, %s30
      %p90 = scmp.eq.s32.totalorder %s89, 0
      %s92 = sadd.s32 %s91, 1
      %s93 = scalar_select %p90, %s91, %s92
      %p96 = pneg %p90
      %p97 = scmp.eq.s32.totalorder %s15, 1
      %p98 = por %p96, %p97
      %p99 = scmp.ne.s32.totalorder %s91, %s94
      %p100 = scmp.eq.s32.totalorder %s15, 0
      %p101 = por %p99, %p100
      %p102 = scmp.ne.s32.totalorder %s91, %s94
      %p103 = scmp.eq.s32.totalorder %s20, 1
      %p104 = por %p102, %p103
      %p105 = scmp.ne.s32.totalorder %s94, %s95
      %p106 = scmp.eq.s32.totalorder %s20, 0
      %p107 = por %p105, %p106
      %p108 = scmp.ne.s32.totalorder %s94, %s95
      %p109 = scmp.eq.s32.totalorder %s21, 1
      %p110 = por %p108, %p109
      %p112 = scmp.ne.s32.totalorder %s95, %s111
      %p113 = scmp.eq.s32.totalorder %s21, 0
      %p114 = por %p112, %p113
      %s115 = ssub.s32 %s22, %s34
      %s116 = ssub.s32 %s23, %s30
      %s117 = sor.u32 %s115, %s116
      %p118 = scmp.eq.s32.totalorder %s117, 0
      %s120 = sadd.s32 %s119, 1
      %s121 = scalar_select %p118, %s119, %s120
      %p124 = pneg %p118
      %p125 = scmp.eq.s32.totalorder %s15, 1
      %p126 = por %p124, %p125
      %p127 = scmp.ne.s32.totalorder %s119, %s122
      %p128 = scmp.eq.s32.totalorder %s15, 0
      %p129 = por %p127, %p128
      %p130 = scmp.ne.s32.totalorder %s119, %s122
      %p131 = scmp.eq.s32.totalorder %s20, 1
      %p132 = por %p130, %p131
      %p133 = scmp.ne.s32.totalorder %s122, %s123
      %p134 = scmp.eq.s32.totalorder %s20, 0
      %p135 = por %p133, %p134
      %p136 = scmp.ne.s32.totalorder %s122, %s123
      %p137 = scmp.eq.s32.totalorder %s21, 1
      %p138 = por %p136, %p137
      %p140 = scmp.ne.s32.totalorder %s123, %s139
      %p141 = scmp.eq.s32.totalorder %s21, 0
      %p142 = por %p140, %p141
      %p143 = scmp.le.s32.totalorder 1, %s15
      %p144 = scmp.lt.s32.totalorder %s15, 3
      %p145 = pnand %p143, %p144
      %p146 = pneg %p145
      // Predicated region
      $region9: #{tpu_custom_call.1} parent=5 // pred_check
        _
      $region10: #{tpu_custom_call.1} parent=5 // pred_check_branch
        %148 = sbr.rel (%p145) target = $region12
      $region11: #{tpu_custom_call.1} parent=5 // pred_region
        %s149 = ssub.s32 %s15, 1
        // Predicated region
        $region13: #{tpu_custom_call.1} parent=11 // pred_check
          %p150 = pneg %p81
        $region14: #{tpu_custom_call.1} parent=11 // pred_check_branch
          %152 = sbr.rel (%p150) target = $region16
        $region15: #{tpu_custom_call.1} parent=11 // pred_region
          %p153 = scmp.lt.s32.totalorder %s25, 0
          %s154 = scalar_select %p153, %s25, 0
          %s155 = smul.addr %s154, 8
          %s156 = scalar_lea.vmem %s1, %s155
        $region16: #{tpu_custom_call.1} parent=11 // pred_fallthru
          _
        // Predicated region
        $region17: #{tpu_custom_call.1} parent=11 // pred_check
          %p157 = pneg %p107
        $region18: #{tpu_custom_call.1} parent=11 // pred_check_branch
          %159 = sbr.rel (%p157) target = $region20
        $region19: #{tpu_custom_call.1} parent=11 // pred_region
          %p160 = scmp.lt.s32.totalorder %s25, 0
          %s161 = scalar_select %p160, %s25, 0
          %s162 = scalar_lea.vmem %s2, %s161
        $region20: #{tpu_custom_call.1} parent=11 // pred_fallthru
          _
      $region12: #{tpu_custom_call.1} parent=5 // pred_fallthru
        _
      %p163 = scmp.lt.s32.totalorder %s15, 2
      // Predicated region
      $region21: #{tpu_custom_call.1} parent=5 // pred_check
        %p164 = pneg %p163
      $region22: #{tpu_custom_call.1} parent=5 // pred_check_branch
        %166 = sbr.rel (%p164) target = $region24
      $region23: #{tpu_custom_call.1} parent=5 // pred_region
        // Predicated region
        $region25: #{tpu_custom_call.1} parent=23 // pred_check
          %p167 = pneg %p49
        $region26: #{tpu_custom_call.1} parent=23 // pred_check_branch
          %169 = sbr.rel (%p167) target = $region28
        $region27: #{tpu_custom_call.1} parent=23 // pred_region
          %s170 = sand.u32 %s39, 1
          %s171 = scalar_lea.sflag [#allocation4], %s170
          %s172 = sand.u32 %s39, 1
          %s173 = smul.addr %s172, 256
          %s174 = scalar_lea.vmem [#allocation3], %s173
          %s176 = ssub.s32 4096, 4096
          %177 = vsyncadd %s171, %s176
          %s178 = smul.addr %s22, 32
          %s179 = sadd.s32 %s23, %s178
          %s180 = smul.addr %s179, 128
          %s181 = scalar_lea.hbm %s0, %s180
          %s182 = sshll.u32 %s174, 4
          %s183 = int_to_ptr.vmem [resolvable:$true] %s182
          %188 = dma.hbm_to_vmem [thread:$0]  %s181, 4096, %s183, %s171, 128, 128, 8
        $region28: #{tpu_custom_call.1} parent=23 // pred_fallthru
          _
      $region24: #{tpu_custom_call.1} parent=5 // pred_fallthru
        _
      %p189 = scmp.le.s32.totalorder 1, %s15
      %p190 = scmp.lt.s32.totalorder %s15, 3
      %p191 = pnand %p189, %p190
      %p192 = pneg %p191
      // Predicated region
      $region29: #{tpu_custom_call.1} parent=5 // pred_check
        _
      $region30: #{tpu_custom_call.1} parent=5 // pred_check_branch
        %194 = sbr.rel (%p191) target = $region32
      $region31: #{tpu_custom_call.1} parent=5 // pred_region
        %s195 = ssub.s32 %s15, 1
        %s196 = sand.u32 %s42, 1
        %s197 = scalar_lea.sflag [#allocation4], %s196
        %s198 = sand.u32 %s42, 1
        %s199 = smul.addr %s198, 256
        %s200 = scalar_lea.vmem [#allocation3], %s199
        // Predicated region
        $region33: #{tpu_custom_call.1} parent=31 // pred_check
          %p201 = pneg %p55
        $region34: #{tpu_custom_call.1} parent=31 // pred_check_branch
          %203 = sbr.rel (%p201) target = $region36
        $region35: #{tpu_custom_call.1} parent=31 // pred_region
          %204 = dma.done %s197, 4096
        $region36: #{tpu_custom_call.1} parent=31 // pred_fallthru
          _
        %s205 = sand.u32 %s42, 1
        %s206 = scalar_lea.sflag [#allocation4], %s205
        %s207 = sand.u32 %s42, 1
        %s208 = smul.addr %s207, 256
        %s209 = scalar_lea.vmem [#allocation3], %s208
        %p210 = pneg %p55
        %p211 = pneg %p52
        %p212 = scmp.lt.s32.totalorder %s25, 0
        %s213 = scalar_select %p212, %s25, 0
        %s214 = smul.addr %s213, 8
        %s215 = scalar_lea.vmem %s1, %s214
        %p216 = pneg %p81
        %p217 = pneg %p78
        %p218 = scmp.lt.s32.totalorder %s25, 0
        %s219 = scalar_select %p218, %s25, 0
        %s220 = scalar_lea.vmem %s2, %s219
        %p221 = pneg %p107
        %p222 = pneg %p104
        %p223 = pneg %p135
        %p224 = pneg %p132
        %s225 = sand.u32 %s122, 1
        %s226 = scalar_lea.sflag [#allocation5], %s225
        %s227 = sand.u32 %s122, 1
        %s228 = smul.addr %s227, 256
        %s229 = scalar_lea.vmem [#allocation6], %s228
        %p230 = scmp.lt.s32.totalorder %s25, 0
        %s231 = scalar_select %p230, %s25, 0
        %s232 = smul.addr %s231, 8
        %s233 = scalar_lea.vmem %s1, %s232
        %p234 = scmp.lt.s32.totalorder %s25, 0
        %s235 = scalar_select %p234, %s25, 0
        %s236 = scalar_lea.vmem %s2, %s235
        %vm237 = vcmask 130048
        %238 = vst.msk [vmem:[#allocation2] sm:$0xff] %vm237, 0.0
        %239 = vst.msk [vmem:[#allocation2 + $0x8] sm:$0xff] %vm237, 0.0
        %240 = vst.msk [vmem:[#allocation2 + $0x10] sm:$0xff] %vm237, 0.0
        %vm241 = vcmask 123904
        %242 = vst.msk [vmem:[#allocation2 + $0x18] sm:$0x3] %vm241, 0.0
        %243 = vst.msk [vmem:[#allocation2 + $0x20] sm:$0xff] %vm237, 0.0
        %244 = vst.msk [vmem:[#allocation2 + $0x28] sm:$0xff] %vm237, 0.0
        %245 = vst.msk [vmem:[#allocation2 + $0x30] sm:$0xff] %vm237, 0.0
        %246 = vst.msk [vmem:[#allocation2 + $0x38] sm:$0x3] %vm241, 0.0
        %247 = vst.msk [vmem:[#allocation2 + $0x40] sm:$0xff] %vm237, 0.0
        %248 = vst.msk [vmem:[#allocation2 + $0x48] sm:$0xff] %vm237, 0.0
        %249 = vst.msk [vmem:[#allocation2 + $0x50] sm:$0xff] %vm237, 0.0
        %250 = vst.msk [vmem:[#allocation2 + $0x58] sm:$0x3] %vm241, 0.0
        %251 = vst.msk [vmem:[#allocation2 + $0x60] sm:$0xff] %vm237, 0.0
        %252 = vst.msk [vmem:[#allocation2 + $0x68] sm:$0xff] %vm237, 0.0
        %253 = vst.msk [vmem:[#allocation2 + $0x70] sm:$0xff] %vm237, 0.0
        %254 = vst.msk [vmem:[#allocation2 + $0x78] sm:$0x3] %vm241, 0.0
        %255 = vst.msk [vmem:[#allocation2 + $0x80] sm:$0xff] %vm237, 0.0
        %256 = vst.msk [vmem:[#allocation2 + $0x88] sm:$0xff] %vm237, 0.0
        %257 = vst.msk [vmem:[#allocation2 + $0x90] sm:$0xff] %vm237, 0.0
        %258 = vst.msk [vmem:[#allocation2 + $0x98] sm:$0x3] %vm241, 0.0
        %259 = vst.msk [vmem:[#allocation2 + $0xa0] sm:$0xff] %vm237, 0.0
        %260 = vst.msk [vmem:[#allocation2 + $0xa8] sm:$0xff] %vm237, 0.0
        %261 = vst.msk [vmem:[#allocation2 + $0xb0] sm:$0xff] %vm237, 0.0
        %262 = vst.msk [vmem:[#allocation2 + $0xb8] sm:$0x3] %vm241, 0.0
        %263 = vst.msk [vmem:[#allocation2 + $0xc0] sm:$0xff] %vm237, 0.0
        %264 = vst.msk [vmem:[#allocation2 + $0xc8] sm:$0xff] %vm237, 0.0
        %265 = vst.msk [vmem:[#allocation2 + $0xd0] sm:$0xff] %vm237, 0.0
        %266 = vst.msk [vmem:[#allocation2 + $0xd8] sm:$0x3] %vm241, 0.0
        %267 = vst.msk [vmem:[#allocation2 + $0xe0] sm:$0xff] %vm237, 0.0
        %268 = vst.msk [vmem:[#allocation2 + $0xe8] sm:$0xff] %vm237, 0.0
        %269 = vst.msk [vmem:[#allocation2 + $0xf0] sm:$0xff] %vm237, 0.0
        %270 = vst.msk [vmem:[#allocation2 + $0xf8] sm:$0x3] %vm241, 0.0
        %271 = vst.msk [vmem:[#allocation2 + $0x100] sm:$0xff] %vm237, 0.0
        %272 = vst.msk [vmem:[#allocation2 + $0x108] sm:$0xff] %vm237, 0.0
        %273 = vst.msk [vmem:[#allocation2 + $0x110] sm:$0xff] %vm237, 0.0
        %274 = vst.msk [vmem:[#allocation2 + $0x118] sm:$0x3] %vm241, 0.0
        %275 = vst.msk [vmem:[#allocation2 + $0x120] sm:$0xff] %vm237, 0.0
        %276 = vst.msk [vmem:[#allocation2 + $0x128] sm:$0xff] %vm237, 0.0
        %277 = vst.msk [vmem:[#allocation2 + $0x130] sm:$0xff] %vm237, 0.0
        %278 = vst.msk [vmem:[#allocation2 + $0x138] sm:$0x3] %vm241, 0.0
        %279 = vst.msk [vmem:[#allocation2 + $0x140] sm:$0xff] %vm237, 0.0
        %280 = vst.msk [vmem:[#allocation2 + $0x148] sm:$0xff] %vm237, 0.0
        %281 = vst.msk [vmem:[#allocation2 + $0x150] sm:$0xff] %vm237, 0.0
        %282 = vst.msk [vmem:[#allocation2 + $0x158] sm:$0x3] %vm241, 0.0
        %283 = vst.msk [vmem:[#allocation2 + $0x160] sm:$0xff] %vm237, 0.0
        %284 = vst.msk [vmem:[#allocation2 + $0x168] sm:$0xff] %vm237, 0.0
        %285 = vst.msk [vmem:[#allocation2 + $0x170] sm:$0xff] %vm237, 0.0
        %286 = vst.msk [vmem:[#allocation2 + $0x178] sm:$0x3] %vm241, 0.0
        %287 = vst.msk [vmem:[#allocation2 + $0x180] sm:$0xff] %vm237, 0.0
        %288 = vst.msk [vmem:[#allocation2 + $0x188] sm:$0xff] %vm237, 0.0
        %289 = vst.msk [vmem:[#allocation2 + $0x190] sm:$0xff] %vm237, 0.0
        %290 = vst.msk [vmem:[#allocation2 + $0x198] sm:$0x3] %vm241, 0.0
        %291 = vst.msk [vmem:[#allocation2 + $0x1a0] sm:$0xff] %vm237, 0.0
        %292 = vst.msk [vmem:[#allocation2 + $0x1a8] sm:$0xff] %vm237, 0.0
        %293 = vst.msk [vmem:[#allocation2 + $0x1b0] sm:$0xff] %vm237, 0.0
        %294 = vst.msk [vmem:[#allocation2 + $0x1b8] sm:$0x3] %vm241, 0.0
        %295 = vst.msk [vmem:[#allocation2 + $0x1c0] sm:$0xff] %vm237, 0.0
        %296 = vst.msk [vmem:[#allocation2 + $0x1c8] sm:$0xff] %vm237, 0.0
        %297 = vst.msk [vmem:[#allocation2 + $0x1d0] sm:$0xff] %vm237, 0.0
        %298 = vst.msk [vmem:[#allocation2 + $0x1d8] sm:$0x3] %vm241, 0.0
        %299 = vst.msk [vmem:[#allocation2 + $0x1e0] sm:$0xff] %vm237, 0.0
        %300 = vst.msk [vmem:[#allocation2 + $0x1e8] sm:$0xff] %vm237, 0.0
        %301 = vst.msk [vmem:[#allocation2 + $0x1f0] sm:$0xff] %vm237, 0.0
        %302 = vst.msk [vmem:[#allocation2 + $0x1f8] sm:$0x3] %vm241, 0.0
        %303 = vst.msk [vmem:[#allocation2 + $0x200] sm:$0xff] %vm237, 0.0
        %304 = vst.msk [vmem:[#allocation2 + $0x208] sm:$0xff] %vm237, 0.0
        %305 = vst.msk [vmem:[#allocation2 + $0x210] sm:$0xff] %vm237, 0.0
        %306 = vst.msk [vmem:[#allocation2 + $0x218] sm:$0x3] %vm241, 0.0
        %307 = vst.msk [vmem:[#allocation2 + $0x220] sm:$0xff] %vm237, 0.0
        %308 = vst.msk [vmem:[#allocation2 + $0x228] sm:$0xff] %vm237, 0.0
        %309 = vst.msk [vmem:[#allocation2 + $0x230] sm:$0xff] %vm237, 0.0
        %310 = vst.msk [vmem:[#allocation2 + $0x238] sm:$0x3] %vm241, 0.0
        %311 = vst.msk [vmem:[#allocation2 + $0x240] sm:$0xff] %vm237, 0.0
        %312 = vst.msk [vmem:[#allocation2 + $0x248] sm:$0xff] %vm237, 0.0
        %313 = vst.msk [vmem:[#allocation2 + $0x250] sm:$0xff] %vm237, 0.0
        %314 = vst.msk [vmem:[#allocation2 + $0x258] sm:$0x3] %vm241, 0.0
        %315 = vst.msk [vmem:[#allocation2 + $0x260] sm:$0xff] %vm237, 0.0
        %316 = vst.msk [vmem:[#allocation2 + $0x268] sm:$0xff] %vm237, 0.0
        %317 = vst.msk [vmem:[#allocation2 + $0x270] sm:$0xff] %vm237, 0.0
        %318 = vst.msk [vmem:[#allocation2 + $0x278] sm:$0x3] %vm241, 0.0
        %319 = vst.msk [vmem:[#allocation2 + $0x280] sm:$0xff] %vm237, 0.0
        %320 = vst.msk [vmem:[#allocation2 + $0x288] sm:$0xff] %vm237, 0.0
        %321 = vst.msk [vmem:[#allocation2 + $0x290] sm:$0xff] %vm237, 0.0
        %322 = vst.msk [vmem:[#allocation2 + $0x298] sm:$0x3] %vm241, 0.0
        %323 = vst.msk [vmem:[#allocation2 + $0x2a0] sm:$0xff] %vm237, 0.0
        %324 = vst.msk [vmem:[#allocation2 + $0x2a8] sm:$0xff] %vm237, 0.0
        %325 = vst.msk [vmem:[#allocation2 + $0x2b0] sm:$0xff] %vm237, 0.0
        %326 = vst.msk [vmem:[#allocation2 + $0x2b8] sm:$0x3] %vm241, 0.0
        %327 = vst.msk [vmem:[#allocation2 + $0x2c0] sm:$0xff] %vm237, 0.0
        %328 = vst.msk [vmem:[#allocation2 + $0x2c8] sm:$0xff] %vm237, 0.0
        %329 = vst.msk [vmem:[#allocation2 + $0x2d0] sm:$0xff] %vm237, 0.0
        %330 = vst.msk [vmem:[#allocation2 + $0x2d8] sm:$0x3] %vm241, 0.0
        %331 = vst.msk [vmem:[#allocation2 + $0x2e0] sm:$0xff] %vm237, 0.0
        %332 = vst.msk [vmem:[#allocation2 + $0x2e8] sm:$0xff] %vm237, 0.0
        %333 = vst.msk [vmem:[#allocation2 + $0x2f0] sm:$0xff] %vm237, 0.0
        %334 = vst.msk [vmem:[#allocation2 + $0x2f8] sm:$0x3] %vm241, 0.0
        %335 = vst.msk [vmem:[#allocation2 + $0x300] sm:$0xff] %vm237, 0.0
        %336 = vst.msk [vmem:[#allocation2 + $0x308] sm:$0xff] %vm237, 0.0
        %337 = vst.msk [vmem:[#allocation2 + $0x310] sm:$0xff] %vm237, 0.0
        %338 = vst.msk [vmem:[#allocation2 + $0x318] sm:$0x3] %vm241, 0.0
        %339 = vst.msk [vmem:[#allocation2 + $0x320] sm:$0xff] %vm237, 0.0
        %340 = vst.msk [vmem:[#allocation2 + $0x328] sm:$0xff] %vm237, 0.0
        %341 = vst.msk [vmem:[#allocation2 + $0x330] sm:$0xff] %vm237, 0.0
        %342 = vst.msk [vmem:[#allocation2 + $0x338] sm:$0x3] %vm241, 0.0
        %v343 = vld [vmem:[%s200] sm:$0xff]
        %v344 = vld [vmem:[%s200 + $0x8] sm:$0xff]
        %v345 = vld [vmem:[%s200 + $0x10] sm:$0xff]
        %v346 = vld [vmem:[%s200 + $0x18] sm:$0xff]
        %v347 = vld [vmem:[%s200 + $0x20] sm:$0xff]
        %v348 = vld [vmem:[%s200 + $0x28] sm:$0xff]
        %v349 = vld [vmem:[%s200 + $0x30] sm:$0xff]
        %v350 = vld [vmem:[%s200 + $0x38] sm:$0xff]
        %v351 = vld [vmem:[%s200 + $0x40] sm:$0xff]
        %v352 = vld [vmem:[%s200 + $0x48] sm:$0xff]
        %v353 = vld [vmem:[%s200 + $0x50] sm:$0xff]
        %v354 = vld [vmem:[%s200 + $0x58] sm:$0xff]
        %v355 = vld [vmem:[%s200 + $0x60] sm:$0xff]
        %v356 = vld [vmem:[%s200 + $0x68] sm:$0xff]
        %v357 = vld [vmem:[%s200 + $0x70] sm:$0xff]
        %v358 = vld [vmem:[%s200 + $0x78] sm:$0xff]
        %v359 = vld [vmem:[%s200 + $0x80] sm:$0xff]
        %v360 = vld [vmem:[%s200 + $0x88] sm:$0xff]
        %v361 = vld [vmem:[%s200 + $0x90] sm:$0xff]
        %v362 = vld [vmem:[%s200 + $0x98] sm:$0xff]
        %v363 = vld [vmem:[%s200 + $0xa0] sm:$0xff]
        %v364 = vld [vmem:[%s200 + $0xa8] sm:$0xff]
        %v365 = vld [vmem:[%s200 + $0xb0] sm:$0xff]
        %v366 = vld [vmem:[%s200 + $0xb8] sm:$0xff]
        %v367 = vld [vmem:[%s200 + $0xc0] sm:$0xff]
        %v368 = vld [vmem:[%s200 + $0xc8] sm:$0xff]
        %v369 = vld [vmem:[%s200 + $0xd0] sm:$0xff]
        %v370 = vld [vmem:[%s200 + $0xd8] sm:$0xff]
        %v371 = vld [vmem:[%s200 + $0xe0] sm:$0xff]
        %v372 = vld [vmem:[%s200 + $0xe8] sm:$0xff]
        %v373 = vld [vmem:[%s200 + $0xf0] sm:$0xff]
        %v374 = vld [vmem:[%s200 + $0xf8] sm:$0xff]
        %s375 = scalar_lea.vmem [#allocation2], 160
        %376 = vst.msk [vmem:[%s375 + $0x5] sm:$0xff] %vm237, %v343
        %377 = vst.msk [vmem:[%s375 + $0xd] sm:$0xff] %vm237, %v344
        %378 = vst.msk [vmem:[%s375 + $0x25] sm:$0xff] %vm237, %v345
        %379 = vst.msk [vmem:[%s375 + $0x2d] sm:$0xff] %vm237, %v346
        %380 = vst.msk [vmem:[%s375 + $0x45] sm:$0xff] %vm237, %v347
        %381 = vst.msk [vmem:[%s375 + $0x4d] sm:$0xff] %vm237, %v348
        %382 = vst.msk [vmem:[%s375 + $0x65] sm:$0xff] %vm237, %v349
        %383 = vst.msk [vmem:[%s375 + $0x6d] sm:$0xff] %vm237, %v350
        %384 = vst.msk [vmem:[%s375 + $0x85] sm:$0xff] %vm237, %v351
        %385 = vst.msk [vmem:[%s375 + $0x8d] sm:$0xff] %vm237, %v352
        %386 = vst.msk [vmem:[%s375 + $0xa5] sm:$0xff] %vm237, %v353
        %387 = vst.msk [vmem:[%s375 + $0xad] sm:$0xff] %vm237, %v354
        %388 = vst.msk [vmem:[%s375 + $0xc5] sm:$0xff] %vm237, %v355
        %389 = vst.msk [vmem:[%s375 + $0xcd] sm:$0xff] %vm237, %v356
        %390 = vst.msk [vmem:[%s375 + $0xe5] sm:$0xff] %vm237, %v357
        %391 = vst.msk [vmem:[%s375 + $0xed] sm:$0xff] %vm237, %v358
        %392 = vst.msk [vmem:[%s375 + $0x105] sm:$0xff] %vm237, %v359
        %393 = vst.msk [vmem:[%s375 + $0x10d] sm:$0xff] %vm237, %v360
        %394 = vst.msk [vmem:[%s375 + $0x125] sm:$0xff] %vm237, %v361
        %395 = vst.msk [vmem:[%s375 + $0x12d] sm:$0xff] %vm237, %v362
        %396 = vst.msk [vmem:[%s375 + $0x145] sm:$0xff] %vm237, %v363
        %397 = vst.msk [vmem:[%s375 + $0x14d] sm:$0xff] %vm237, %v364
        %398 = vst.msk [vmem:[%s375 + $0x165] sm:$0xff] %vm237, %v365
        %399 = vst.msk [vmem:[%s375 + $0x16d] sm:$0xff] %vm237, %v366
        %400 = vst.msk [vmem:[%s375 + $0x185] sm:$0xff] %vm237, %v367
        %401 = vst.msk [vmem:[%s375 + $0x18d] sm:$0xff] %vm237, %v368
        %402 = vst.msk [vmem:[%s375 + $0x1a5] sm:$0xff] %vm237, %v369
        %403 = vst.msk [vmem:[%s375 + $0x1ad] sm:$0xff] %vm237, %v370
        %404 = vst.msk [vmem:[%s375 + $0x1c5] sm:$0xff] %vm237, %v371
        %405 = vst.msk [vmem:[%s375 + $0x1cd] sm:$0xff] %vm237, %v372
        %406 = vst.msk [vmem:[%s375 + $0x1e5] sm:$0xff] %vm237, %v373
        %407 = vst.msk [vmem:[%s375 + $0x1ed] sm:$0xff] %vm237, %v374
        %v408 = vld [vmem:[#allocation2 + $0x5] sm:$0xff]
        %v409 = vld [vmem:[#allocation2 + $0xd] sm:$0xff]
        %v410 = vld [vmem:[#allocation2 + $0x25] sm:$0xff]
        %v411 = vld [vmem:[#allocation2 + $0x2d] sm:$0xff]
        %v412 = vld [vmem:[#allocation2 + $0x45] sm:$0xff]
        %v413 = vld [vmem:[#allocation2 + $0x4d] sm:$0xff]
        %v414 = vld [vmem:[#allocation2 + $0x65] sm:$0xff]
        %v415 = vld [vmem:[#allocation2 + $0x6d] sm:$0xff]
        %v416 = vld [vmem:[#allocation2 + $0x85] sm:$0xff]
        %v417 = vld [vmem:[#allocation2 + $0x8d] sm:$0xff]
        %v418 = vld [vmem:[#allocation2 + $0xa5] sm:$0xff]
        %v419 = vld [vmem:[#allocation2 + $0xad] sm:$0xff]
        %v420 = vld [vmem:[#allocation2 + $0xc5] sm:$0xff]
        %v421 = vld [vmem:[#allocation2 + $0xcd] sm:$0xff]
        %v422 = vld [vmem:[#allocation2 + $0xe5] sm:$0xff]
        %v423 = vld [vmem:[#allocation2 + $0xed] sm:$0xff]
        %v424 = vld [vmem:[#allocation2 + $0x105] sm:$0xff]
        %v425 = vld [vmem:[#allocation2 + $0x10d] sm:$0xff]
        %v426 = vld [vmem:[#allocation2 + $0x125] sm:$0xff]
        %v427 = vld [vmem:[#allocation2 + $0x12d] sm:$0xff]
        %v428 = vld [vmem:[#allocation2 + $0x145] sm:$0xff]
        %v429 = vld [vmem:[#allocation2 + $0x14d] sm:$0xff]
        %v430 = vld [vmem:[#allocation2 + $0x165] sm:$0xff]
        %v431 = vld [vmem:[#allocation2 + $0x16d] sm:$0xff]
        %v432 = vld [vmem:[#allocation2 + $0x185] sm:$0xff]
        %v433 = vld [vmem:[#allocation2 + $0x18d] sm:$0xff]
        %v434 = vld [vmem:[#allocation2 + $0x1a5] sm:$0xff]
        %v435 = vld [vmem:[#allocation2 + $0x1ad] sm:$0xff]
        %v436 = vld [vmem:[#allocation2 + $0x1c5] sm:$0xff]
        %v437 = vld [vmem:[#allocation2 + $0x1cd] sm:$0xff]
        %v438 = vld [vmem:[#allocation2 + $0x1e5] sm:$0xff]
        %v439 = vld [vmem:[#allocation2 + $0x1ed] sm:$0xff]
        %v440 = vld [vmem:[%s233] sm:$0x1]
        %v441 = vlaneseq
        %v442 = vshrl.u32 %v441, 7
        %v443 = vsub.s32 0, %v442
        %v444 = vrot.slane %v440, %v443
        %v445 = vmul.f32 %v408, %v444
        %v446 = vmul.f32 %v409, %v444
        %v447 = vmul.f32 %v410, %v444
        %v448 = vmul.f32 %v411, %v444
        %v449 = vmul.f32 %v412, %v444
        %v450 = vmul.f32 %v413, %v444
        %v451 = vmul.f32 %v414, %v444
        %v452 = vmul.f32 %v415, %v444
        %v453 = vmul.f32 %v416, %v444
        %v454 = vmul.f32 %v417, %v444
        %v455 = vmul.f32 %v418, %v444
        %v456 = vmul.f32 %v419, %v444
        %v457 = vmul.f32 %v420, %v444
        %v458 = vmul.f32 %v421, %v444
        %v459 = vmul.f32 %v422, %v444
        %v460 = vmul.f32 %v423, %v444
        %v461 = vmul.f32 %v424, %v444
        %v462 = vmul.f32 %v425, %v444
        %v463 = vmul.f32 %v426, %v444
        %v464 = vmul.f32 %v427, %v444
        %v465 = vmul.f32 %v428, %v444
        %v466 = vmul.f32 %v429, %v444
        %v467 = vmul.f32 %v430, %v444
        %v468 = vmul.f32 %v431, %v444
        %v469 = vmul.f32 %v432, %v444
        %v470 = vmul.f32 %v433, %v444
        %v471 = vmul.f32 %v434, %v444
        %v472 = vmul.f32 %v435, %v444
        %v473 = vmul.f32 %v436, %v444
        %v474 = vmul.f32 %v437, %v444
        %v475 = vmul.f32 %v438, %v444
        %v476 = vmul.f32 %v439, %v444
        %v477 = vadd.f32 %v445, 0.0
        %v478 = vadd.f32 %v446, 0.0
        %v479 = vadd.f32 %v447, 0.0
        %v480 = vadd.f32 %v448, 0.0
        %v481 = vadd.f32 %v449, 0.0
        %v482 = vadd.f32 %v450, 0.0
        %v483 = vadd.f32 %v451, 0.0
        %v484 = vadd.f32 %v452, 0.0
        %v485 = vadd.f32 %v453, 0.0
        %v486 = vadd.f32 %v454, 0.0
        %v487 = vadd.f32 %v455, 0.0
        %v488 = vadd.f32 %v456, 0.0
        %v489 = vadd.f32 %v457, 0.0
        %v490 = vadd.f32 %v458, 0.0
        %v491 = vadd.f32 %v459, 0.0
        %v492 = vadd.f32 %v460, 0.0
        %v493 = vadd.f32 %v461, 0.0
        %v494 = vadd.f32 %v462, 0.0
        %v495 = vadd.f32 %v463, 0.0
        %v496 = vadd.f32 %v464, 0.0
        %v497 = vadd.f32 %v465, 0.0
        %v498 = vadd.f32 %v466, 0.0
        %v499 = vadd.f32 %v467, 0.0
        %v500 = vadd.f32 %v468, 0.0
        %v501 = vadd.f32 %v469, 0.0
        %v502 = vadd.f32 %v470, 0.0
        %v503 = vadd.f32 %v471, 0.0
        %v504 = vadd.f32 %v472, 0.0
        %v505 = vadd.f32 %v473, 0.0
        %v506 = vadd.f32 %v474, 0.0
        %v507 = vadd.f32 %v475, 0.0
        %v508 = vadd.f32 %v476, 0.0
        %s509 = scalar_lea.vmem [#allocation2], 32
        %v510 = vld [vmem:[%s509 + $0x5] sm:$0xff]
        %v511 = vld [vmem:[%s509 + $0xd] sm:$0xff]
        %v512 = vld [vmem:[%s509 + $0x25] sm:$0xff]
        %v513 = vld [vmem:[%s509 + $0x2d] sm:$0xff]
        %v514 = vld [vmem:[%s509 + $0x45] sm:$0xff]
        %v515 = vld [vmem:[%s509 + $0x4d] sm:$0xff]
        %v516 = vld [vmem:[%s509 + $0x65] sm:$0xff]
        %v517 = vld [vmem:[%s509 + $0x6d] sm:$0xff]
        %v518 = vld [vmem:[%s509 + $0x85] sm:$0xff]
        %v519 = vld [vmem:[%s509 + $0x8d] sm:$0xff]
        %v520 = vld [vmem:[%s509 + $0xa5] sm:$0xff]
        %v521 = vld [vmem:[%s509 + $0xad] sm:$0xff]
        %v522 = vld [vmem:[%s509 + $0xc5] sm:$0xff]
        %v523 = vld [vmem:[%s509 + $0xcd] sm:$0xff]
        %v524 = vld [vmem:[%s509 + $0xe5] sm:$0xff]
        %v525 = vld [vmem:[%s509 + $0xed] sm:$0xff]
        %v526 = vld [vmem:[%s509 + $0x105] sm:$0xff]
        %v527 = vld [vmem:[%s509 + $0x10d] sm:$0xff]
        %v528 = vld [vmem:[%s509 + $0x125] sm:$0xff]
        %v529 = vld [vmem:[%s509 + $0x12d] sm:$0xff]
        %v530 = vld [vmem:[%s509 + $0x145] sm:$0xff]
        %v531 = vld [vmem:[%s509 + $0x14d] sm:$0xff]
        %v532 = vld [vmem:[%s509 + $0x165] sm:$0xff]
        %v533 = vld [vmem:[%s509 + $0x16d] sm:$0xff]
        %v534 = vld [vmem:[%s509 + $0x185] sm:$0xff]
        %v535 = vld [vmem:[%s509 + $0x18d] sm:$0xff]
        %v536 = vld [vmem:[%s509 + $0x1a5] sm:$0xff]
        %v537 = vld [vmem:[%s509 + $0x1ad] sm:$0xff]
        %v538 = vld [vmem:[%s509 + $0x1c5] sm:$0xff]
        %v539 = vld [vmem:[%s509 + $0x1cd] sm:$0xff]
        %v540 = vld [vmem:[%s509 + $0x1e5] sm:$0xff]
        %v541 = vld [vmem:[%s509 + $0x1ed] sm:$0xff]
        %v542 = vld [vmem:[%s233 + $0x1] sm:$0x1]
        %v543 = vlaneseq
        %v544 = vshrl.u32 %v543, 7
        %v545 = vsub.s32 0, %v544
        %v546 = vrot.slane %v542, %v545
        %v547 = vmul.f32 %v510, %v546
        %v548 = vmul.f32 %v511, %v546
        %v549 = vmul.f32 %v512, %v546
        %v550 = vmul.f32 %v513, %v546
        %v551 = vmul.f32 %v514, %v546
        %v552 = vmul.f32 %v515, %v546
        %v553 = vmul.f32 %v516, %v546
        %v554 = vmul.f32 %v517, %v546
        %v555 = vmul.f32 %v518, %v546
        %v556 = vmul.f32 %v519, %v546
        %v557 = vmul.f32 %v520, %v546
        %v558 = vmul.f32 %v521, %v546
        %v559 = vmul.f32 %v522, %v546
        %v560 = vmul.f32 %v523, %v546
        %v561 = vmul.f32 %v524, %v546
        %v562 = vmul.f32 %v525, %v546
        %v563 = vmul.f32 %v526, %v546
        %v564 = vmul.f32 %v527, %v546
        %v565 = vmul.f32 %v528, %v546
        %v566 = vmul.f32 %v529, %v546
        %v567 = vmul.f32 %v530, %v546
        %v568 = vmul.f32 %v531, %v546
        %v569 = vmul.f32 %v532, %v546
        %v570 = vmul.f32 %v533, %v546
        %v571 = vmul.f32 %v534, %v546
        %v572 = vmul.f32 %v535, %v546
        %v573 = vmul.f32 %v536, %v546
        %v574 = vmul.f32 %v537, %v546
        %v575 = vmul.f32 %v538, %v546
        %v576 = vmul.f32 %v539, %v546
        %v577 = vmul.f32 %v540, %v546
        %v578 = vmul.f32 %v541, %v546
        %v579 = vadd.f32 %v477, %v547
        %v580 = vadd.f32 %v478, %v548
        %v581 = vadd.f32 %v479, %v549
        %v582 = vadd.f32 %v480, %v550
        %v583 = vadd.f32 %v481, %v551
        %v584 = vadd.f32 %v482, %v552
        %v585 = vadd.f32 %v483, %v553
        %v586 = vadd.f32 %v484, %v554
        %v587 = vadd.f32 %v485, %v555
        %v588 = vadd.f32 %v486, %v556
        %v589 = vadd.f32 %v487, %v557
        %v590 = vadd.f32 %v488, %v558
        %v591 = vadd.f32 %v489, %v559
        %v592 = vadd.f32 %v490, %v560
        %v593 = vadd.f32 %v491, %v561
        %v594 = vadd.f32 %v492, %v562
        %v595 = vadd.f32 %v493, %v563
        %v596 = vadd.f32 %v494, %v564
        %v597 = vadd.f32 %v495, %v565
        %v598 = vadd.f32 %v496, %v566
        %v599 = vadd.f32 %v497, %v567
        %v600 = vadd.f32 %v498, %v568
        %v601 = vadd.f32 %v499, %v569
        %v602 = vadd.f32 %v500, %v570
        %v603 = vadd.f32 %v501, %v571
        %v604 = vadd.f32 %v502, %v572
        %v605 = vadd.f32 %v503, %v573
        %v606 = vadd.f32 %v504, %v574
        %v607 = vadd.f32 %v505, %v575
        %v608 = vadd.f32 %v506, %v576
        %v609 = vadd.f32 %v507, %v577
        %v610 = vadd.f32 %v508, %v578
        %s611 = scalar_lea.vmem [#allocation2], 64
        %v612 = vld [vmem:[%s611 + $0x5] sm:$0xff]
        %v613 = vld [vmem:[%s611 + $0xd] sm:$0xff]
        %v614 = vld [vmem:[%s611 + $0x25] sm:$0xff]
        %v615 = vld [vmem:[%s611 + $0x2d] sm:$0xff]
        %v616 = vld [vmem:[%s611 + $0x45] sm:$0xff]
        %v617 = vld [vmem:[%s611 + $0x4d] sm:$0xff]
        %v618 = vld [vmem:[%s611 + $0x65] sm:$0xff]
        %v619 = vld [vmem:[%s611 + $0x6d] sm:$0xff]
        %v620 = vld [vmem:[%s611 + $0x85] sm:$0xff]
        %v621 = vld [vmem:[%s611 + $0x8d] sm:$0xff]
        %v622 = vld [vmem:[%s611 + $0xa5] sm:$0xff]
        %v623 = vld [vmem:[%s611 + $0xad] sm:$0xff]
        %v624 = vld [vmem:[%s611 + $0xc5] sm:$0xff]
        %v625 = vld [vmem:[%s611 + $0xcd] sm:$0xff]
        %v626 = vld [vmem:[%s611 + $0xe5] sm:$0xff]
        %v627 = vld [vmem:[%s611 + $0xed] sm:$0xff]
        %v628 = vld [vmem:[%s611 + $0x105] sm:$0xff]
        %v629 = vld [vmem:[%s611 + $0x10d] sm:$0xff]
        %v630 = vld [vmem:[%s611 + $0x125] sm:$0xff]
        %v631 = vld [vmem:[%s611 + $0x12d] sm:$0xff]
        %v632 = vld [vmem:[%s611 + $0x145] sm:$0xff]
        %v633 = vld [vmem:[%s611 + $0x14d] sm:$0xff]
        %v634 = vld [vmem:[%s611 + $0x165] sm:$0xff]
        %v635 = vld [vmem:[%s611 + $0x16d] sm:$0xff]
        %v636 = vld [vmem:[%s611 + $0x185] sm:$0xff]
        %v637 = vld [vmem:[%s611 + $0x18d] sm:$0xff]
        %v638 = vld [vmem:[%s611 + $0x1a5] sm:$0xff]
        %v639 = vld [vmem:[%s611 + $0x1ad] sm:$0xff]
        %v640 = vld [vmem:[%s611 + $0x1c5] sm:$0xff]
        %v641 = vld [vmem:[%s611 + $0x1cd] sm:$0xff]
        %v642 = vld [vmem:[%s611 + $0x1e5] sm:$0xff]
        %v643 = vld [vmem:[%s611 + $0x1ed] sm:$0xff]
        %v644 = vld [vmem:[%s233 + $0x2] sm:$0x1]
        %v645 = vlaneseq
        %v646 = vshrl.u32 %v645, 7
        %v647 = vsub.s32 0, %v646
        %v648 = vrot.slane %v644, %v647
        %v649 = vmul.f32 %v612, %v648
        %v650 = vmul.f32 %v613, %v648
        %v651 = vmul.f32 %v614, %v648
        %v652 = vmul.f32 %v615, %v648
        %v653 = vmul.f32 %v616, %v648
        %v654 = vmul.f32 %v617, %v648
        %v655 = vmul.f32 %v618, %v648
        %v656 = vmul.f32 %v619, %v648
        %v657 = vmul.f32 %v620, %v648
        %v658 = vmul.f32 %v621, %v648
        %v659 = vmul.f32 %v622, %v648
        %v660 = vmul.f32 %v623, %v648
        %v661 = vmul.f32 %v624, %v648
        %v662 = vmul.f32 %v625, %v648
        %v663 = vmul.f32 %v626, %v648
        %v664 = vmul.f32 %v627, %v648
        %v665 = vmul.f32 %v628, %v648
        %v666 = vmul.f32 %v629, %v648
        %v667 = vmul.f32 %v630, %v648
        %v668 = vmul.f32 %v631, %v648
        %v669 = vmul.f32 %v632, %v648
        %v670 = vmul.f32 %v633, %v648
        %v671 = vmul.f32 %v634, %v648
        %v672 = vmul.f32 %v635, %v648
        %v673 = vmul.f32 %v636, %v648
        %v674 = vmul.f32 %v637, %v648
        %v675 = vmul.f32 %v638, %v648
        %v676 = vmul.f32 %v639, %v648
        %v677 = vmul.f32 %v640, %v648
        %v678 = vmul.f32 %v641, %v648
        %v679 = vmul.f32 %v642, %v648
        %v680 = vmul.f32 %v643, %v648
        %v681 = vadd.f32 %v579, %v649
        %v682 = vadd.f32 %v580, %v650
        %v683 = vadd.f32 %v581, %v651
        %v684 = vadd.f32 %v582, %v652
        %v685 = vadd.f32 %v583, %v653
        %v686 = vadd.f32 %v584, %v654
        %v687 = vadd.f32 %v585, %v655
        %v688 = vadd.f32 %v586, %v656
        %v689 = vadd.f32 %v587, %v657
        %v690 = vadd.f32 %v588, %v658
        %v691 = vadd.f32 %v589, %v659
        %v692 = vadd.f32 %v590, %v660
        %v693 = vadd.f32 %v591, %v661
        %v694 = vadd.f32 %v592, %v662
        %v695 = vadd.f32 %v593, %v663
        %v696 = vadd.f32 %v594, %v664
        %v697 = vadd.f32 %v595, %v665
        %v698 = vadd.f32 %v596, %v666
        %v699 = vadd.f32 %v597, %v667
        %v700 = vadd.f32 %v598, %v668
        %v701 = vadd.f32 %v599, %v669
        %v702 = vadd.f32 %v600, %v670
        %v703 = vadd.f32 %v601, %v671
        %v704 = vadd.f32 %v602, %v672
        %v705 = vadd.f32 %v603, %v673
        %v706 = vadd.f32 %v604, %v674
        %v707 = vadd.f32 %v605, %v675
        %v708 = vadd.f32 %v606, %v676
        %v709 = vadd.f32 %v607, %v677
        %v710 = vadd.f32 %v608, %v678
        %v711 = vadd.f32 %v609, %v679
        %v712 = vadd.f32 %v610, %v680
        %s713 = scalar_lea.vmem [#allocation2], 96
        %v714 = vld [vmem:[%s713 + $0x5] sm:$0xff]
        %v715 = vld [vmem:[%s713 + $0xd] sm:$0xff]
        %v716 = vld [vmem:[%s713 + $0x25] sm:$0xff]
        %v717 = vld [vmem:[%s713 + $0x2d] sm:$0xff]
        %v718 = vld [vmem:[%s713 + $0x45] sm:$0xff]
        %v719 = vld [vmem:[%s713 + $0x4d] sm:$0xff]
        %v720 = vld [vmem:[%s713 + $0x65] sm:$0xff]
        %v721 = vld [vmem:[%s713 + $0x6d] sm:$0xff]
        %v722 = vld [vmem:[%s713 + $0x85] sm:$0xff]
        %v723 = vld [vmem:[%s713 + $0x8d] sm:$0xff]
        %v724 = vld [vmem:[%s713 + $0xa5] sm:$0xff]
        %v725 = vld [vmem:[%s713 + $0xad] sm:$0xff]
        %v726 = vld [vmem:[%s713 + $0xc5] sm:$0xff]
        %v727 = vld [vmem:[%s713 + $0xcd] sm:$0xff]
        %v728 = vld [vmem:[%s713 + $0xe5] sm:$0xff]
        %v729 = vld [vmem:[%s713 + $0xed] sm:$0xff]
        %v730 = vld [vmem:[%s713 + $0x105] sm:$0xff]
        %v731 = vld [vmem:[%s713 + $0x10d] sm:$0xff]
        %v732 = vld [vmem:[%s713 + $0x125] sm:$0xff]
        %v733 = vld [vmem:[%s713 + $0x12d] sm:$0xff]
        %v734 = vld [vmem:[%s713 + $0x145] sm:$0xff]
        %v735 = vld [vmem:[%s713 + $0x14d] sm:$0xff]
        %v736 = vld [vmem:[%s713 + $0x165] sm:$0xff]
        %v737 = vld [vmem:[%s713 + $0x16d] sm:$0xff]
        %v738 = vld [vmem:[%s713 + $0x185] sm:$0xff]
        %v739 = vld [vmem:[%s713 + $0x18d] sm:$0xff]
        %v740 = vld [vmem:[%s713 + $0x1a5] sm:$0xff]
        %v741 = vld [vmem:[%s713 + $0x1ad] sm:$0xff]
        %v742 = vld [vmem:[%s713 + $0x1c5] sm:$0xff]
        %v743 = vld [vmem:[%s713 + $0x1cd] sm:$0xff]
        %v744 = vld [vmem:[%s713 + $0x1e5] sm:$0xff]
        %v745 = vld [vmem:[%s713 + $0x1ed] sm:$0xff]
        %v746 = vld [vmem:[%s233 + $0x3] sm:$0x1]
        %v747 = vlaneseq
        %v748 = vshrl.u32 %v747, 7
        %v749 = vsub.s32 0, %v748
        %v750 = vrot.slane %v746, %v749
        %v751 = vmul.f32 %v714, %v750
        %v752 = vmul.f32 %v715, %v750
        %v753 = vmul.f32 %v716, %v750
        %v754 = vmul.f32 %v717, %v750
        %v755 = vmul.f32 %v718, %v750
        %v756 = vmul.f32 %v719, %v750
        %v757 = vmul.f32 %v720, %v750
        %v758 = vmul.f32 %v721, %v750
        %v759 = vmul.f32 %v722, %v750
        %v760 = vmul.f32 %v723, %v750
        %v761 = vmul.f32 %v724, %v750
        %v762 = vmul.f32 %v725, %v750
        %v763 = vmul.f32 %v726, %v750
        %v764 = vmul.f32 %v727, %v750
        %v765 = vmul.f32 %v728, %v750
        %v766 = vmul.f32 %v729, %v750
        %v767 = vmul.f32 %v730, %v750
        %v768 = vmul.f32 %v731, %v750
        %v769 = vmul.f32 %v732, %v750
        %v770 = vmul.f32 %v733, %v750
        %v771 = vmul.f32 %v734, %v750
        %v772 = vmul.f32 %v735, %v750
        %v773 = vmul.f32 %v736, %v750
        %v774 = vmul.f32 %v737, %v750
        %v775 = vmul.f32 %v738, %v750
        %v776 = vmul.f32 %v739, %v750
        %v777 = vmul.f32 %v740, %v750
        %v778 = vmul.f32 %v741, %v750
        %v779 = vmul.f32 %v742, %v750
        %v780 = vmul.f32 %v743, %v750
        %v781 = vmul.f32 %v744, %v750
        %v782 = vmul.f32 %v745, %v750
        %v783 = vadd.f32 %v681, %v751
        %v784 = vadd.f32 %v682, %v752
        %v785 = vadd.f32 %v683, %v753
        %v786 = vadd.f32 %v684, %v754
        %v787 = vadd.f32 %v685, %v755
        %v788 = vadd.f32 %v686, %v756
        %v789 = vadd.f32 %v687, %v757
        %v790 = vadd.f32 %v688, %v758
        %v791 = vadd.f32 %v689, %v759
        %v792 = vadd.f32 %v690, %v760
        %v793 = vadd.f32 %v691, %v761
        %v794 = vadd.f32 %v692, %v762
        %v795 = vadd.f32 %v693, %v763
        %v796 = vadd.f32 %v694, %v764
        %v797 = vadd.f32 %v695, %v765
        %v798 = vadd.f32 %v696, %v766
        %v799 = vadd.f32 %v697, %v767
        %v800 = vadd.f32 %v698, %v768
        %v801 = vadd.f32 %v699, %v769
        %v802 = vadd.f32 %v700, %v770
        %v803 = vadd.f32 %v701, %v771
        %v804 = vadd.f32 %v702, %v772
        %v805 = vadd.f32 %v703, %v773
        %v806 = vadd.f32 %v704, %v774
        %v807 = vadd.f32 %v705, %v775
        %v808 = vadd.f32 %v706, %v776
        %v809 = vadd.f32 %v707, %v777
        %v810 = vadd.f32 %v708, %v778
        %v811 = vadd.f32 %v709, %v779
        %v812 = vadd.f32 %v710, %v780
        %v813 = vadd.f32 %v711, %v781
        %v814 = vadd.f32 %v712, %v782
        %s815 = scalar_lea.vmem [#allocation2], 128
        %v816 = vld [vmem:[%s815 + $0x4] sm:$0xff]
        %v817 = vld [vmem:[%s815 + $0xc] sm:$0xff]
        %v818 = vld [vmem:[%s815 + $0x24] sm:$0xff]
        %v819 = vld [vmem:[%s815 + $0x2c] sm:$0xff]
        %v820 = vld [vmem:[%s815 + $0x44] sm:$0xff]
        %v821 = vld [vmem:[%s815 + $0x4c] sm:$0xff]
        %v822 = vld [vmem:[%s815 + $0x64] sm:$0xff]
        %v823 = vld [vmem:[%s815 + $0x6c] sm:$0xff]
        %v824 = vld [vmem:[%s815 + $0x84] sm:$0xff]
        %v825 = vld [vmem:[%s815 + $0x8c] sm:$0xff]
        %v826 = vld [vmem:[%s815 + $0xa4] sm:$0xff]
        %v827 = vld [vmem:[%s815 + $0xac] sm:$0xff]
        %v828 = vld [vmem:[%s815 + $0xc4] sm:$0xff]
        %v829 = vld [vmem:[%s815 + $0xcc] sm:$0xff]
        %v830 = vld [vmem:[%s815 + $0xe4] sm:$0xff]
        %v831 = vld [vmem:[%s815 + $0xec] sm:$0xff]
        %v832 = vld [vmem:[%s815 + $0x104] sm:$0xff]
        %v833 = vld [vmem:[%s815 + $0x10c] sm:$0xff]
        %v834 = vld [vmem:[%s815 + $0x124] sm:$0xff]
        %v835 = vld [vmem:[%s815 + $0x12c] sm:$0xff]
        %v836 = vld [vmem:[%s815 + $0x144] sm:$0xff]
        %v837 = vld [vmem:[%s815 + $0x14c] sm:$0xff]
        %v838 = vld [vmem:[%s815 + $0x164] sm:$0xff]
        %v839 = vld [vmem:[%s815 + $0x16c] sm:$0xff]
        %v840 = vld [vmem:[%s815 + $0x184] sm:$0xff]
        %v841 = vld [vmem:[%s815 + $0x18c] sm:$0xff]
        %v842 = vld [vmem:[%s815 + $0x1a4] sm:$0xff]
        %v843 = vld [vmem:[%s815 + $0x1ac] sm:$0xff]
        %v844 = vld [vmem:[%s815 + $0x1c4] sm:$0xff]
        %v845 = vld [vmem:[%s815 + $0x1cc] sm:$0xff]
        %v846 = vld [vmem:[%s815 + $0x1e4] sm:$0xff]
        %v847 = vld [vmem:[%s815 + $0x1ec] sm:$0xff]
        %v848 = vld [vmem:[%s233 + $0x4] sm:$0x1]
        %v849 = vlaneseq
        %v850 = vshrl.u32 %v849, 7
        %v851 = vsub.s32 0, %v850
        %v852 = vrot.slane %v848, %v851
        %v853 = vmul.f32 %v816, %v852
        %v854 = vmul.f32 %v817, %v852
        %v855 = vmul.f32 %v818, %v852
        %v856 = vmul.f32 %v819, %v852
        %v857 = vmul.f32 %v820, %v852
        %v858 = vmul.f32 %v821, %v852
        %v859 = vmul.f32 %v822, %v852
        %v860 = vmul.f32 %v823, %v852
        %v861 = vmul.f32 %v824, %v852
        %v862 = vmul.f32 %v825, %v852
        %v863 = vmul.f32 %v826, %v852
        %v864 = vmul.f32 %v827, %v852
        %v865 = vmul.f32 %v828, %v852
        %v866 = vmul.f32 %v829, %v852
        %v867 = vmul.f32 %v830, %v852
        %v868 = vmul.f32 %v831, %v852
        %v869 = vmul.f32 %v832, %v852
        %v870 = vmul.f32 %v833, %v852
        %v871 = vmul.f32 %v834, %v852
        %v872 = vmul.f32 %v835, %v852
        %v873 = vmul.f32 %v836, %v852
        %v874 = vmul.f32 %v837, %v852
        %v875 = vmul.f32 %v838, %v852
        %v876 = vmul.f32 %v839, %v852
        %v877 = vmul.f32 %v840, %v852
        %v878 = vmul.f32 %v841, %v852
        %v879 = vmul.f32 %v842, %v852
        %v880 = vmul.f32 %v843, %v852
        %v881 = vmul.f32 %v844, %v852
        %v882 = vmul.f32 %v845, %v852
        %v883 = vmul.f32 %v846, %v852
        %v884 = vmul.f32 %v847, %v852
        %v885 = vadd.f32 %v783, %v853
        %v886 = vadd.f32 %v784, %v854
        %v887 = vadd.f32 %v785, %v855
        %v888 = vadd.f32 %v786, %v856
        %v889 = vadd.f32 %v787, %v857
        %v890 = vadd.f32 %v788, %v858
        %v891 = vadd.f32 %v789, %v859
        %v892 = vadd.f32 %v790, %v860
        %v893 = vadd.f32 %v791, %v861
        %v894 = vadd.f32 %v792, %v862
        %v895 = vadd.f32 %v793, %v863
        %v896 = vadd.f32 %v794, %v864
        %v897 = vadd.f32 %v795, %v865
        %v898 = vadd.f32 %v796, %v866
        %v899 = vadd.f32 %v797, %v867
        %v900 = vadd.f32 %v798, %v868
        %v901 = vadd.f32 %v799, %v869
        %v902 = vadd.f32 %v800, %v870
        %v903 = vadd.f32 %v801, %v871
        %v904 = vadd.f32 %v802, %v872
        %v905 = vadd.f32 %v803, %v873
        %v906 = vadd.f32 %v804, %v874
        %v907 = vadd.f32 %v805, %v875
        %v908 = vadd.f32 %v806, %v876
        %v909 = vadd.f32 %v807, %v877
        %v910 = vadd.f32 %v808, %v878
        %v911 = vadd.f32 %v809, %v879
        %v912 = vadd.f32 %v810, %v880
        %v913 = vadd.f32 %v811, %v881
        %v914 = vadd.f32 %v812, %v882
        %v915 = vadd.f32 %v813, %v883
        %v916 = vadd.f32 %v814, %v884
        %v917 = vld [vmem:[%s815 + $0x5] sm:$0xff]
        %v918 = vld [vmem:[%s815 + $0xd] sm:$0xff]
        %v919 = vld [vmem:[%s815 + $0x25] sm:$0xff]
        %v920 = vld [vmem:[%s815 + $0x2d] sm:$0xff]
        %v921 = vld [vmem:[%s815 + $0x45] sm:$0xff]
        %v922 = vld [vmem:[%s815 + $0x4d] sm:$0xff]
        %v923 = vld [vmem:[%s815 + $0x65] sm:$0xff]
        %v924 = vld [vmem:[%s815 + $0x6d] sm:$0xff]
        %v925 = vld [vmem:[%s815 + $0x85] sm:$0xff]
        %v926 = vld [vmem:[%s815 + $0x8d] sm:$0xff]
        %v927 = vld [vmem:[%s815 + $0xa5] sm:$0xff]
        %v928 = vld [vmem:[%s815 + $0xad] sm:$0xff]
        %v929 = vld [vmem:[%s815 + $0xc5] sm:$0xff]
        %v930 = vld [vmem:[%s815 + $0xcd] sm:$0xff]
        %v931 = vld [vmem:[%s815 + $0xe5] sm:$0xff]
        %v932 = vld [vmem:[%s815 + $0xed] sm:$0xff]
        %v933 = vld [vmem:[%s815 + $0x105] sm:$0xff]
        %v934 = vld [vmem:[%s815 + $0x10d] sm:$0xff]
        %v935 = vld [vmem:[%s815 + $0x125] sm:$0xff]
        %v936 = vld [vmem:[%s815 + $0x12d] sm:$0xff]
        %v937 = vld [vmem:[%s815 + $0x145] sm:$0xff]
        %v938 = vld [vmem:[%s815 + $0x14d] sm:$0xff]
        %v939 = vld [vmem:[%s815 + $0x165] sm:$0xff]
        %v940 = vld [vmem:[%s815 + $0x16d] sm:$0xff]
        %v941 = vld [vmem:[%s815 + $0x185] sm:$0xff]
        %v942 = vld [vmem:[%s815 + $0x18d] sm:$0xff]
        %v943 = vld [vmem:[%s815 + $0x1a5] sm:$0xff]
        %v944 = vld [vmem:[%s815 + $0x1ad] sm:$0xff]
        %v945 = vld [vmem:[%s815 + $0x1c5] sm:$0xff]
        %v946 = vld [vmem:[%s815 + $0x1cd] sm:$0xff]
        %v947 = vld [vmem:[%s815 + $0x1e5] sm:$0xff]
        %v948 = vld [vmem:[%s815 + $0x1ed] sm:$0xff]
        %v949 = vld [vmem:[%s233 + $0x5] sm:$0x1]
        %v950 = vlaneseq
        %v951 = vshrl.u32 %v950, 7
        %v952 = vsub.s32 0, %v951
        %v953 = vrot.slane %v949, %v952
        %v954 = vmul.f32 %v917, %v953
        %v955 = vmul.f32 %v918, %v953
        %v956 = vmul.f32 %v919, %v953
        %v957 = vmul.f32 %v920, %v953
        %v958 = vmul.f32 %v921, %v953
        %v959 = vmul.f32 %v922, %v953
        %v960 = vmul.f32 %v923, %v953
        %v961 = vmul.f32 %v924, %v953
        %v962 = vmul.f32 %v925, %v953
        %v963 = vmul.f32 %v926, %v953
        %v964 = vmul.f32 %v927, %v953
        %v965 = vmul.f32 %v928, %v953
        %v966 = vmul.f32 %v929, %v953
        %v967 = vmul.f32 %v930, %v953
        %v968 = vmul.f32 %v931, %v953
        %v969 = vmul.f32 %v932, %v953
        %v970 = vmul.f32 %v933, %v953
        %v971 = vmul.f32 %v934, %v953
        %v972 = vmul.f32 %v935, %v953
        %v973 = vmul.f32 %v936, %v953
        %v974 = vmul.f32 %v937, %v953
        %v975 = vmul.f32 %v938, %v953
        %v976 = vmul.f32 %v939, %v953
        %v977 = vmul.f32 %v940, %v953
        %v978 = vmul.f32 %v941, %v953
        %v979 = vmul.f32 %v942, %v953
        %v980 = vmul.f32 %v943, %v953
        %v981 = vmul.f32 %v944, %v953
        %v982 = vmul.f32 %v945, %v953
        %v983 = vmul.f32 %v946, %v953
        %v984 = vmul.f32 %v947, %v953
        %v985 = vmul.f32 %v948, %v953
        %v986 = vadd.f32 %v885, %v954
        %v987 = vadd.f32 %v886, %v955
        %v988 = vadd.f32 %v887, %v956
        %v989 = vadd.f32 %v888, %v957
        %v990 = vadd.f32 %v889, %v958
        %v991 = vadd.f32 %v890, %v959
        %v992 = vadd.f32 %v891, %v960
        %v993 = vadd.f32 %v892, %v961
        %v994 = vadd.f32 %v893, %v962
        %v995 = vadd.f32 %v894, %v963
        %v996 = vadd.f32 %v895, %v964
        %v997 = vadd.f32 %v896, %v965
        %v998 = vadd.f32 %v897, %v966
        %v999 = vadd.f32 %v898, %v967
        %v1000 = vadd.f32 %v899, %v968
        %v1001 = vadd.f32 %v900, %v969
        %v1002 = vadd.f32 %v901, %v970
        %v1003 = vadd.f32 %v902, %v971
        %v1004 = vadd.f32 %v903, %v972
        %v1005 = vadd.f32 %v904, %v973
        %v1006 = vadd.f32 %v905, %v974
        %v1007 = vadd.f32 %v906, %v975
        %v1008 = vadd.f32 %v907, %v976
        %v1009 = vadd.f32 %v908, %v977
        %v1010 = vadd.f32 %v909, %v978
        %v1011 = vadd.f32 %v910, %v979
        %v1012 = vadd.f32 %v911, %v980
        %v1013 = vadd.f32 %v912, %v981
        %v1014 = vadd.f32 %v913, %v982
        %v1015 = vadd.f32 %v914, %v983
        %v1016 = vadd.f32 %v915, %v984
        %v1017 = vadd.f32 %v916, %v985
        %v1018 = vld [vmem:[%s815 + $0x6] sm:$0xff]
        %v1019 = vld [vmem:[%s815 + $0xe] sm:$0xff]
        %v1020 = vld [vmem:[%s815 + $0x26] sm:$0xff]
        %v1021 = vld [vmem:[%s815 + $0x2e] sm:$0xff]
        %v1022 = vld [vmem:[%s815 + $0x46] sm:$0xff]
        %v1023 = vld [vmem:[%s815 + $0x4e] sm:$0xff]
        %v1024 = vld [vmem:[%s815 + $0x66] sm:$0xff]
        %v1025 = vld [vmem:[%s815 + $0x6e] sm:$0xff]
        %v1026 = vld [vmem:[%s815 + $0x86] sm:$0xff]
        %v1027 = vld [vmem:[%s815 + $0x8e] sm:$0xff]
        %v1028 = vld [vmem:[%s815 + $0xa6] sm:$0xff]
        %v1029 = vld [vmem:[%s815 + $0xae] sm:$0xff]
        %v1030 = vld [vmem:[%s815 + $0xc6] sm:$0xff]
        %v1031 = vld [vmem:[%s815 + $0xce] sm:$0xff]
        %v1032 = vld [vmem:[%s815 + $0xe6] sm:$0xff]
        %v1033 = vld [vmem:[%s815 + $0xee] sm:$0xff]
        %v1034 = vld [vmem:[%s815 + $0x106] sm:$0xff]
        %v1035 = vld [vmem:[%s815 + $0x10e] sm:$0xff]
        %v1036 = vld [vmem:[%s815 + $0x126] sm:$0xff]
        %v1037 = vld [vmem:[%s815 + $0x12e] sm:$0xff]
        %v1038 = vld [vmem:[%s815 + $0x146] sm:$0xff]
        %v1039 = vld [vmem:[%s815 + $0x14e] sm:$0xff]
        %v1040 = vld [vmem:[%s815 + $0x166] sm:$0xff]
        %v1041 = vld [vmem:[%s815 + $0x16e] sm:$0xff]
        %v1042 = vld [vmem:[%s815 + $0x186] sm:$0xff]
        %v1043 = vld [vmem:[%s815 + $0x18e] sm:$0xff]
        %v1044 = vld [vmem:[%s815 + $0x1a6] sm:$0xff]
        %v1045 = vld [vmem:[%s815 + $0x1ae] sm:$0xff]
        %v1046 = vld [vmem:[%s815 + $0x1c6] sm:$0xff]
        %v1047 = vld [vmem:[%s815 + $0x1ce] sm:$0xff]
        %v1048 = vld [vmem:[%s815 + $0x1e6] sm:$0xff]
        %v1049 = vld [vmem:[%s815 + $0x1ee] sm:$0xff]
        %v1050 = vld [vmem:[%s233 + $0x6] sm:$0x1]
        %v1051 = vlaneseq
        %v1052 = vshrl.u32 %v1051, 7
        %v1053 = vsub.s32 0, %v1052
        %v1054 = vrot.slane %v1050, %v1053
        %v1055 = vmul.f32 %v1018, %v1054
        %v1056 = vmul.f32 %v1019, %v1054
        %v1057 = vmul.f32 %v1020, %v1054
        %v1058 = vmul.f32 %v1021, %v1054
        %v1059 = vmul.f32 %v1022, %v1054
        %v1060 = vmul.f32 %v1023, %v1054
        %v1061 = vmul.f32 %v1024, %v1054
        %v1062 = vmul.f32 %v1025, %v1054
        %v1063 = vmul.f32 %v1026, %v1054
        %v1064 = vmul.f32 %v1027, %v1054
        %v1065 = vmul.f32 %v1028, %v1054
        %v1066 = vmul.f32 %v1029, %v1054
        %v1067 = vmul.f32 %v1030, %v1054
        %v1068 = vmul.f32 %v1031, %v1054
        %v1069 = vmul.f32 %v1032, %v1054
        %v1070 = vmul.f32 %v1033, %v1054
        %v1071 = vmul.f32 %v1034, %v1054
        %v1072 = vmul.f32 %v1035, %v1054
        %v1073 = vmul.f32 %v1036, %v1054
        %v1074 = vmul.f32 %v1037, %v1054
        %v1075 = vmul.f32 %v1038, %v1054
        %v1076 = vmul.f32 %v1039, %v1054
        %v1077 = vmul.f32 %v1040, %v1054
        %v1078 = vmul.f32 %v1041, %v1054
        %v1079 = vmul.f32 %v1042, %v1054
        %v1080 = vmul.f32 %v1043, %v1054
        %v1081 = vmul.f32 %v1044, %v1054
        %v1082 = vmul.f32 %v1045, %v1054
        %v1083 = vmul.f32 %v1046, %v1054
        %v1084 = vmul.f32 %v1047, %v1054
        %v1085 = vmul.f32 %v1048, %v1054
        %v1086 = vmul.f32 %v1049, %v1054
        %v1087 = vadd.f32 %v986, %v1055
        %v1088 = vadd.f32 %v987, %v1056
        %v1089 = vadd.f32 %v988, %v1057
        %v1090 = vadd.f32 %v989, %v1058
        %v1091 = vadd.f32 %v990, %v1059
        %v1092 = vadd.f32 %v991, %v1060
        %v1093 = vadd.f32 %v992, %v1061
        %v1094 = vadd.f32 %v993, %v1062
        %v1095 = vadd.f32 %v994, %v1063
        %v1096 = vadd.f32 %v995, %v1064
        %v1097 = vadd.f32 %v996, %v1065
        %v1098 = vadd.f32 %v997, %v1066
        %v1099 = vadd.f32 %v998, %v1067
        %v1100 = vadd.f32 %v999, %v1068
        %v1101 = vadd.f32 %v1000, %v1069
        %v1102 = vadd.f32 %v1001, %v1070
        %v1103 = vadd.f32 %v1002, %v1071
        %v1104 = vadd.f32 %v1003, %v1072
        %v1105 = vadd.f32 %v1004, %v1073
        %v1106 = vadd.f32 %v1005, %v1074
        %v1107 = vadd.f32 %v1006, %v1075
        %v1108 = vadd.f32 %v1007, %v1076
        %v1109 = vadd.f32 %v1008, %v1077
        %v1110 = vadd.f32 %v1009, %v1078
        %v1111 = vadd.f32 %v1010, %v1079
        %v1112 = vadd.f32 %v1011, %v1080
        %v1113 = vadd.f32 %v1012, %v1081
        %v1114 = vadd.f32 %v1013, %v1082
        %v1115 = vadd.f32 %v1014, %v1083
        %v1116 = vadd.f32 %v1015, %v1084
        %v1117 = vadd.f32 %v1016, %v1085
        %v1118 = vadd.f32 %v1017, %v1086
        %v1119 = vld [vmem:[%s375] sm:$0xff]
        %v1120 = vld [vmem:[%s375 + $0x8] sm:$0xff]
        %v1121 = vld [vmem:[%s375 + $0x20] sm:$0xff]
        %v1122 = vld [vmem:[%s375 + $0x28] sm:$0xff]
        %v1123 = vld [vmem:[%s375 + $0x40] sm:$0xff]
        %v1124 = vld [vmem:[%s375 + $0x48] sm:$0xff]
        %v1125 = vld [vmem:[%s375 + $0x60] sm:$0xff]
        %v1126 = vld [vmem:[%s375 + $0x68] sm:$0xff]
        %v1127 = vld [vmem:[%s375 + $0x80] sm:$0xff]
        %v1128 = vld [vmem:[%s375 + $0x88] sm:$0xff]
        %v1129 = vld [vmem:[%s375 + $0xa0] sm:$0xff]
        %v1130 = vld [vmem:[%s375 + $0xa8] sm:$0xff]
        %v1131 = vld [vmem:[%s375 + $0xc0] sm:$0xff]
        %v1132 = vld [vmem:[%s375 + $0xc8] sm:$0xff]
        %v1133 = vld [vmem:[%s375 + $0xe0] sm:$0xff]
        %v1134 = vld [vmem:[%s375 + $0xe8] sm:$0xff]
        %v1135 = vld [vmem:[%s375 + $0x100] sm:$0xff]
        %v1136 = vld [vmem:[%s375 + $0x108] sm:$0xff]
        %v1137 = vld [vmem:[%s375 + $0x120] sm:$0xff]
        %v1138 = vld [vmem:[%s375 + $0x128] sm:$0xff]
        %v1139 = vld [vmem:[%s375 + $0x140] sm:$0xff]
        %v1140 = vld [vmem:[%s375 + $0x148] sm:$0xff]
        %v1141 = vld [vmem:[%s375 + $0x160] sm:$0xff]
        %v1142 = vld [vmem:[%s375 + $0x168] sm:$0xff]
        %v1143 = vld [vmem:[%s375 + $0x180] sm:$0xff]
        %v1144 = vld [vmem:[%s375 + $0x188] sm:$0xff]
        %v1145 = vld [vmem:[%s375 + $0x1a0] sm:$0xff]
        %v1146 = vld [vmem:[%s375 + $0x1a8] sm:$0xff]
        %v1147 = vld [vmem:[%s375 + $0x1c0] sm:$0xff]
        %v1148 = vld [vmem:[%s375 + $0x1c8] sm:$0xff]
        %v1149 = vld [vmem:[%s375 + $0x1e0] sm:$0xff]
        %v1150 = vld [vmem:[%s375 + $0x1e8] sm:$0xff]
        %v1151 = vld [vmem:[%s233 + $0x7] sm:$0x1]
        %v1152 = vlaneseq
        %v1153 = vshrl.u32 %v1152, 7
        %v1154 = vsub.s32 0, %v1153
        %v1155 = vrot.slane %v1151, %v1154
        %v1156 = vmul.f32 %v1119, %v1155
        %v1157 = vmul.f32 %v1120, %v1155
        %v1158 = vmul.f32 %v1121, %v1155
        %v1159 = vmul.f32 %v1122, %v1155
        %v1160 = vmul.f32 %v1123, %v1155
        %v1161 = vmul.f32 %v1124, %v1155
        %v1162 = vmul.f32 %v1125, %v1155
        %v1163 = vmul.f32 %v1126, %v1155
        %v1164 = vmul.f32 %v1127, %v1155
        %v1165 = vmul.f32 %v1128, %v1155
        %v1166 = vmul.f32 %v1129, %v1155
        %v1167 = vmul.f32 %v1130, %v1155
        %v1168 = vmul.f32 %v1131, %v1155
        %v1169 = vmul.f32 %v1132, %v1155
        %v1170 = vmul.f32 %v1133, %v1155
        %v1171 = vmul.f32 %v1134, %v1155
        %v1172 = vmul.f32 %v1135, %v1155
        %v1173 = vmul.f32 %v1136, %v1155
        %v1174 = vmul.f32 %v1137, %v1155
        %v1175 = vmul.f32 %v1138, %v1155
        %v1176 = vmul.f32 %v1139, %v1155
        %v1177 = vmul.f32 %v1140, %v1155
        %v1178 = vmul.f32 %v1141, %v1155
        %v1179 = vmul.f32 %v1142, %v1155
        %v1180 = vmul.f32 %v1143, %v1155
        %v1181 = vmul.f32 %v1144, %v1155
        %v1182 = vmul.f32 %v1145, %v1155
        %v1183 = vmul.f32 %v1146, %v1155
        %v1184 = vmul.f32 %v1147, %v1155
        %v1185 = vmul.f32 %v1148, %v1155
        %v1186 = vmul.f32 %v1149, %v1155
        %v1187 = vmul.f32 %v1150, %v1155
        %v1188 = vadd.f32 %v1087, %v1156
        %v1189 = vadd.f32 %v1088, %v1157
        %v1190 = vadd.f32 %v1089, %v1158
        %v1191 = vadd.f32 %v1090, %v1159
        %v1192 = vadd.f32 %v1091, %v1160
        %v1193 = vadd.f32 %v1092, %v1161
        %v1194 = vadd.f32 %v1093, %v1162
        %v1195 = vadd.f32 %v1094, %v1163
        %v1196 = vadd.f32 %v1095, %v1164
        %v1197 = vadd.f32 %v1096, %v1165
        %v1198 = vadd.f32 %v1097, %v1166
        %v1199 = vadd.f32 %v1098, %v1167
        %v1200 = vadd.f32 %v1099, %v1168
        %v1201 = vadd.f32 %v1100, %v1169
        %v1202 = vadd.f32 %v1101, %v1170
        %v1203 = vadd.f32 %v1102, %v1171
        %v1204 = vadd.f32 %v1103, %v1172
        %v1205 = vadd.f32 %v1104, %v1173
        %v1206 = vadd.f32 %v1105, %v1174
        %v1207 = vadd.f32 %v1106, %v1175
        %v1208 = vadd.f32 %v1107, %v1176
        %v1209 = vadd.f32 %v1108, %v1177
        %v1210 = vadd.f32 %v1109, %v1178
        %v1211 = vadd.f32 %v1110, %v1179
        %v1212 = vadd.f32 %v1111, %v1180
        %v1213 = vadd.f32 %v1112, %v1181
        %v1214 = vadd.f32 %v1113, %v1182
        %v1215 = vadd.f32 %v1114, %v1183
        %v1216 = vadd.f32 %v1115, %v1184
        %v1217 = vadd.f32 %v1116, %v1185
        %v1218 = vadd.f32 %v1117, %v1186
        %v1219 = vadd.f32 %v1118, %v1187
        %v1220 = vld [vmem:[%s375 + $0x1] sm:$0xff]
        %v1221 = vld [vmem:[%s375 + $0x9] sm:$0xff]
        %v1222 = vld [vmem:[%s375 + $0x21] sm:$0xff]
        %v1223 = vld [vmem:[%s375 + $0x29] sm:$0xff]
        %v1224 = vld [vmem:[%s375 + $0x41] sm:$0xff]
        %v1225 = vld [vmem:[%s375 + $0x49] sm:$0xff]
        %v1226 = vld [vmem:[%s375 + $0x61] sm:$0xff]
        %v1227 = vld [vmem:[%s375 + $0x69] sm:$0xff]
        %v1228 = vld [vmem:[%s375 + $0x81] sm:$0xff]
        %v1229 = vld [vmem:[%s375 + $0x89] sm:$0xff]
        %v1230 = vld [vmem:[%s375 + $0xa1] sm:$0xff]
        %v1231 = vld [vmem:[%s375 + $0xa9] sm:$0xff]
        %v1232 = vld [vmem:[%s375 + $0xc1] sm:$0xff]
        %v1233 = vld [vmem:[%s375 + $0xc9] sm:$0xff]
        %v1234 = vld [vmem:[%s375 + $0xe1] sm:$0xff]
        %v1235 = vld [vmem:[%s375 + $0xe9] sm:$0xff]
        %v1236 = vld [vmem:[%s375 + $0x101] sm:$0xff]
        %v1237 = vld [vmem:[%s375 + $0x109] sm:$0xff]
        %v1238 = vld [vmem:[%s375 + $0x121] sm:$0xff]
        %v1239 = vld [vmem:[%s375 + $0x129] sm:$0xff]
        %v1240 = vld [vmem:[%s375 + $0x141] sm:$0xff]
        %v1241 = vld [vmem:[%s375 + $0x149] sm:$0xff]
        %v1242 = vld [vmem:[%s375 + $0x161] sm:$0xff]
        %v1243 = vld [vmem:[%s375 + $0x169] sm:$0xff]
        %v1244 = vld [vmem:[%s375 + $0x181] sm:$0xff]
        %v1245 = vld [vmem:[%s375 + $0x189] sm:$0xff]
        %v1246 = vld [vmem:[%s375 + $0x1a1] sm:$0xff]
        %v1247 = vld [vmem:[%s375 + $0x1a9] sm:$0xff]
        %v1248 = vld [vmem:[%s375 + $0x1c1] sm:$0xff]
        %v1249 = vld [vmem:[%s375 + $0x1c9] sm:$0xff]
        %v1250 = vld [vmem:[%s375 + $0x1e1] sm:$0xff]
        %v1251 = vld [vmem:[%s375 + $0x1e9] sm:$0xff]
        %v1252 = vld [vmem:[%s233 + $0x8] sm:$0x1]
        %v1253 = vlaneseq
        %v1254 = vshrl.u32 %v1253, 7
        %v1255 = vsub.s32 0, %v1254
        %v1256 = vrot.slane %v1252, %v1255
        %v1257 = vmul.f32 %v1220, %v1256
        %v1258 = vmul.f32 %v1221, %v1256
        %v1259 = vmul.f32 %v1222, %v1256
        %v1260 = vmul.f32 %v1223, %v1256
        %v1261 = vmul.f32 %v1224, %v1256
        %v1262 = vmul.f32 %v1225, %v1256
        %v1263 = vmul.f32 %v1226, %v1256
        %v1264 = vmul.f32 %v1227, %v1256
        %v1265 = vmul.f32 %v1228, %v1256
        %v1266 = vmul.f32 %v1229, %v1256
        %v1267 = vmul.f32 %v1230, %v1256
        %v1268 = vmul.f32 %v1231, %v1256
        %v1269 = vmul.f32 %v1232, %v1256
        %v1270 = vmul.f32 %v1233, %v1256
        %v1271 = vmul.f32 %v1234, %v1256
        %v1272 = vmul.f32 %v1235, %v1256
        %v1273 = vmul.f32 %v1236, %v1256
        %v1274 = vmul.f32 %v1237, %v1256
        %v1275 = vmul.f32 %v1238, %v1256
        %v1276 = vmul.f32 %v1239, %v1256
        %v1277 = vmul.f32 %v1240, %v1256
        %v1278 = vmul.f32 %v1241, %v1256
        %v1279 = vmul.f32 %v1242, %v1256
        %v1280 = vmul.f32 %v1243, %v1256
        %v1281 = vmul.f32 %v1244, %v1256
        %v1282 = vmul.f32 %v1245, %v1256
        %v1283 = vmul.f32 %v1246, %v1256
        %v1284 = vmul.f32 %v1247, %v1256
        %v1285 = vmul.f32 %v1248, %v1256
        %v1286 = vmul.f32 %v1249, %v1256
        %v1287 = vmul.f32 %v1250, %v1256
        %v1288 = vmul.f32 %v1251, %v1256
        %v1289 = vadd.f32 %v1188, %v1257
        %v1290 = vadd.f32 %v1189, %v1258
        %v1291 = vadd.f32 %v1190, %v1259
        %v1292 = vadd.f32 %v1191, %v1260
        %v1293 = vadd.f32 %v1192, %v1261
        %v1294 = vadd.f32 %v1193, %v1262
        %v1295 = vadd.f32 %v1194, %v1263
        %v1296 = vadd.f32 %v1195, %v1264
        %v1297 = vadd.f32 %v1196, %v1265
        %v1298 = vadd.f32 %v1197, %v1266
        %v1299 = vadd.f32 %v1198, %v1267
        %v1300 = vadd.f32 %v1199, %v1268
        %v1301 = vadd.f32 %v1200, %v1269
        %v1302 = vadd.f32 %v1201, %v1270
        %v1303 = vadd.f32 %v1202, %v1271
        %v1304 = vadd.f32 %v1203, %v1272
        %v1305 = vadd.f32 %v1204, %v1273
        %v1306 = vadd.f32 %v1205, %v1274
        %v1307 = vadd.f32 %v1206, %v1275
        %v1308 = vadd.f32 %v1207, %v1276
        %v1309 = vadd.f32 %v1208, %v1277
        %v1310 = vadd.f32 %v1209, %v1278
        %v1311 = vadd.f32 %v1210, %v1279
        %v1312 = vadd.f32 %v1211, %v1280
        %v1313 = vadd.f32 %v1212, %v1281
        %v1314 = vadd.f32 %v1213, %v1282
        %v1315 = vadd.f32 %v1214, %v1283
        %v1316 = vadd.f32 %v1215, %v1284
        %v1317 = vadd.f32 %v1216, %v1285
        %v1318 = vadd.f32 %v1217, %v1286
        %v1319 = vadd.f32 %v1218, %v1287
        %v1320 = vadd.f32 %v1219, %v1288
        %v1321 = vld [vmem:[%s375 + $0x2] sm:$0xff]
        %v1322 = vld [vmem:[%s375 + $0xa] sm:$0xff]
        %v1323 = vld [vmem:[%s375 + $0x22] sm:$0xff]
        %v1324 = vld [vmem:[%s375 + $0x2a] sm:$0xff]
        %v1325 = vld [vmem:[%s375 + $0x42] sm:$0xff]
        %v1326 = vld [vmem:[%s375 + $0x4a] sm:$0xff]
        %v1327 = vld [vmem:[%s375 + $0x62] sm:$0xff]
        %v1328 = vld [vmem:[%s375 + $0x6a] sm:$0xff]
        %v1329 = vld [vmem:[%s375 + $0x82] sm:$0xff]
        %v1330 = vld [vmem:[%s375 + $0x8a] sm:$0xff]
        %v1331 = vld [vmem:[%s375 + $0xa2] sm:$0xff]
        %v1332 = vld [vmem:[%s375 + $0xaa] sm:$0xff]
        %v1333 = vld [vmem:[%s375 + $0xc2] sm:$0xff]
        %v1334 = vld [vmem:[%s375 + $0xca] sm:$0xff]
        %v1335 = vld [vmem:[%s375 + $0xe2] sm:$0xff]
        %v1336 = vld [vmem:[%s375 + $0xea] sm:$0xff]
        %v1337 = vld [vmem:[%s375 + $0x102] sm:$0xff]
        %v1338 = vld [vmem:[%s375 + $0x10a] sm:$0xff]
        %v1339 = vld [vmem:[%s375 + $0x122] sm:$0xff]
        %v1340 = vld [vmem:[%s375 + $0x12a] sm:$0xff]
        %v1341 = vld [vmem:[%s375 + $0x142] sm:$0xff]
        %v1342 = vld [vmem:[%s375 + $0x14a] sm:$0xff]
        %v1343 = vld [vmem:[%s375 + $0x162] sm:$0xff]
        %v1344 = vld [vmem:[%s375 + $0x16a] sm:$0xff]
        %v1345 = vld [vmem:[%s375 + $0x182] sm:$0xff]
        %v1346 = vld [vmem:[%s375 + $0x18a] sm:$0xff]
        %v1347 = vld [vmem:[%s375 + $0x1a2] sm:$0xff]
        %v1348 = vld [vmem:[%s375 + $0x1aa] sm:$0xff]
        %v1349 = vld [vmem:[%s375 + $0x1c2] sm:$0xff]
        %v1350 = vld [vmem:[%s375 + $0x1ca] sm:$0xff]
        %v1351 = vld [vmem:[%s375 + $0x1e2] sm:$0xff]
        %v1352 = vld [vmem:[%s375 + $0x1ea] sm:$0xff]
        %v1353 = vld [vmem:[%s233 + $0x9] sm:$0x1]
        %v1354 = vlaneseq
        %v1355 = vshrl.u32 %v1354, 7
        %v1356 = vsub.s32 0, %v1355
        %v1357 = vrot.slane %v1353, %v1356
        %v1358 = vmul.f32 %v1321, %v1357
        %v1359 = vmul.f32 %v1322, %v1357
        %v1360 = vmul.f32 %v1323, %v1357
        %v1361 = vmul.f32 %v1324, %v1357
        %v1362 = vmul.f32 %v1325, %v1357
        %v1363 = vmul.f32 %v1326, %v1357
        %v1364 = vmul.f32 %v1327, %v1357
        %v1365 = vmul.f32 %v1328, %v1357
        %v1366 = vmul.f32 %v1329, %v1357
        %v1367 = vmul.f32 %v1330, %v1357
        %v1368 = vmul.f32 %v1331, %v1357
        %v1369 = vmul.f32 %v1332, %v1357
        %v1370 = vmul.f32 %v1333, %v1357
        %v1371 = vmul.f32 %v1334, %v1357
        %v1372 = vmul.f32 %v1335, %v1357
        %v1373 = vmul.f32 %v1336, %v1357
        %v1374 = vmul.f32 %v1337, %v1357
        %v1375 = vmul.f32 %v1338, %v1357
        %v1376 = vmul.f32 %v1339, %v1357
        %v1377 = vmul.f32 %v1340, %v1357
        %v1378 = vmul.f32 %v1341, %v1357
        %v1379 = vmul.f32 %v1342, %v1357
        %v1380 = vmul.f32 %v1343, %v1357
        %v1381 = vmul.f32 %v1344, %v1357
        %v1382 = vmul.f32 %v1345, %v1357
        %v1383 = vmul.f32 %v1346, %v1357
        %v1384 = vmul.f32 %v1347, %v1357
        %v1385 = vmul.f32 %v1348, %v1357
        %v1386 = vmul.f32 %v1349, %v1357
        %v1387 = vmul.f32 %v1350, %v1357
        %v1388 = vmul.f32 %v1351, %v1357
        %v1389 = vmul.f32 %v1352, %v1357
        %v1390 = vadd.f32 %v1289, %v1358
        %v1391 = vadd.f32 %v1290, %v1359
        %v1392 = vadd.f32 %v1291, %v1360
        %v1393 = vadd.f32 %v1292, %v1361
        %v1394 = vadd.f32 %v1293, %v1362
        %v1395 = vadd.f32 %v1294, %v1363
        %v1396 = vadd.f32 %v1295, %v1364
        %v1397 = vadd.f32 %v1296, %v1365
        %v1398 = vadd.f32 %v1297, %v1366
        %v1399 = vadd.f32 %v1298, %v1367
        %v1400 = vadd.f32 %v1299, %v1368
        %v1401 = vadd.f32 %v1300, %v1369
        %v1402 = vadd.f32 %v1301, %v1370
        %v1403 = vadd.f32 %v1302, %v1371
        %v1404 = vadd.f32 %v1303, %v1372
        %v1405 = vadd.f32 %v1304, %v1373
        %v1406 = vadd.f32 %v1305, %v1374
        %v1407 = vadd.f32 %v1306, %v1375
        %v1408 = vadd.f32 %v1307, %v1376
        %v1409 = vadd.f32 %v1308, %v1377
        %v1410 = vadd.f32 %v1309, %v1378
        %v1411 = vadd.f32 %v1310, %v1379
        %v1412 = vadd.f32 %v1311, %v1380
        %v1413 = vadd.f32 %v1312, %v1381
        %v1414 = vadd.f32 %v1313, %v1382
        %v1415 = vadd.f32 %v1314, %v1383
        %v1416 = vadd.f32 %v1315, %v1384
        %v1417 = vadd.f32 %v1316, %v1385
        %v1418 = vadd.f32 %v1317, %v1386
        %v1419 = vadd.f32 %v1318, %v1387
        %v1420 = vadd.f32 %v1319, %v1388
        %v1421 = vadd.f32 %v1320, %v1389
        %v1422 = vld [vmem:[%s375 + $0x3] sm:$0xff]
        %v1423 = vld [vmem:[%s375 + $0xb] sm:$0xff]
        %v1424 = vld [vmem:[%s375 + $0x23] sm:$0xff]
        %v1425 = vld [vmem:[%s375 + $0x2b] sm:$0xff]
        %v1426 = vld [vmem:[%s375 + $0x43] sm:$0xff]
        %v1427 = vld [vmem:[%s375 + $0x4b] sm:$0xff]
        %v1428 = vld [vmem:[%s375 + $0x63] sm:$0xff]
        %v1429 = vld [vmem:[%s375 + $0x6b] sm:$0xff]
        %v1430 = vld [vmem:[%s375 + $0x83] sm:$0xff]
        %v1431 = vld [vmem:[%s375 + $0x8b] sm:$0xff]
        %v1432 = vld [vmem:[%s375 + $0xa3] sm:$0xff]
        %v1433 = vld [vmem:[%s375 + $0xab] sm:$0xff]
        %v1434 = vld [vmem:[%s375 + $0xc3] sm:$0xff]
        %v1435 = vld [vmem:[%s375 + $0xcb] sm:$0xff]
        %v1436 = vld [vmem:[%s375 + $0xe3] sm:$0xff]
        %v1437 = vld [vmem:[%s375 + $0xeb] sm:$0xff]
        %v1438 = vld [vmem:[%s375 + $0x103] sm:$0xff]
        %v1439 = vld [vmem:[%s375 + $0x10b] sm:$0xff]
        %v1440 = vld [vmem:[%s375 + $0x123] sm:$0xff]
        %v1441 = vld [vmem:[%s375 + $0x12b] sm:$0xff]
        %v1442 = vld [vmem:[%s375 + $0x143] sm:$0xff]
        %v1443 = vld [vmem:[%s375 + $0x14b] sm:$0xff]
        %v1444 = vld [vmem:[%s375 + $0x163] sm:$0xff]
        %v1445 = vld [vmem:[%s375 + $0x16b] sm:$0xff]
        %v1446 = vld [vmem:[%s375 + $0x183] sm:$0xff]
        %v1447 = vld [vmem:[%s375 + $0x18b] sm:$0xff]
        %v1448 = vld [vmem:[%s375 + $0x1a3] sm:$0xff]
        %v1449 = vld [vmem:[%s375 + $0x1ab] sm:$0xff]
        %v1450 = vld [vmem:[%s375 + $0x1c3] sm:$0xff]
        %v1451 = vld [vmem:[%s375 + $0x1cb] sm:$0xff]
        %v1452 = vld [vmem:[%s375 + $0x1e3] sm:$0xff]
        %v1453 = vld [vmem:[%s375 + $0x1eb] sm:$0xff]
        %v1454 = vld [vmem:[%s233 + $0xa] sm:$0x1]
        %v1455 = vlaneseq
        %v1456 = vshrl.u32 %v1455, 7
        %v1457 = vsub.s32 0, %v1456
        %v1458 = vrot.slane %v1454, %v1457
        %v1459 = vmul.f32 %v1422, %v1458
        %v1460 = vmul.f32 %v1423, %v1458
        %v1461 = vmul.f32 %v1424, %v1458
        %v1462 = vmul.f32 %v1425, %v1458
        %v1463 = vmul.f32 %v1426, %v1458
        %v1464 = vmul.f32 %v1427, %v1458
        %v1465 = vmul.f32 %v1428, %v1458
        %v1466 = vmul.f32 %v1429, %v1458
        %v1467 = vmul.f32 %v1430, %v1458
        %v1468 = vmul.f32 %v1431, %v1458
        %v1469 = vmul.f32 %v1432, %v1458
        %v1470 = vmul.f32 %v1433, %v1458
        %v1471 = vmul.f32 %v1434, %v1458
        %v1472 = vmul.f32 %v1435, %v1458
        %v1473 = vmul.f32 %v1436, %v1458
        %v1474 = vmul.f32 %v1437, %v1458
        %v1475 = vmul.f32 %v1438, %v1458
        %v1476 = vmul.f32 %v1439, %v1458
        %v1477 = vmul.f32 %v1440, %v1458
        %v1478 = vmul.f32 %v1441, %v1458
        %v1479 = vmul.f32 %v1442, %v1458
        %v1480 = vmul.f32 %v1443, %v1458
        %v1481 = vmul.f32 %v1444, %v1458
        %v1482 = vmul.f32 %v1445, %v1458
        %v1483 = vmul.f32 %v1446, %v1458
        %v1484 = vmul.f32 %v1447, %v1458
        %v1485 = vmul.f32 %v1448, %v1458
        %v1486 = vmul.f32 %v1449, %v1458
        %v1487 = vmul.f32 %v1450, %v1458
        %v1488 = vmul.f32 %v1451, %v1458
        %v1489 = vmul.f32 %v1452, %v1458
        %v1490 = vmul.f32 %v1453, %v1458
        %v1491 = vadd.f32 %v1390, %v1459
        %v1492 = vadd.f32 %v1391, %v1460
        %v1493 = vadd.f32 %v1392, %v1461
        %v1494 = vadd.f32 %v1393, %v1462
        %v1495 = vadd.f32 %v1394, %v1463
        %v1496 = vadd.f32 %v1395, %v1464
        %v1497 = vadd.f32 %v1396, %v1465
        %v1498 = vadd.f32 %v1397, %v1466
        %v1499 = vadd.f32 %v1398, %v1467
        %v1500 = vadd.f32 %v1399, %v1468
        %v1501 = vadd.f32 %v1400, %v1469
        %v1502 = vadd.f32 %v1401, %v1470
        %v1503 = vadd.f32 %v1402, %v1471
        %v1504 = vadd.f32 %v1403, %v1472
        %v1505 = vadd.f32 %v1404, %v1473
        %v1506 = vadd.f32 %v1405, %v1474
        %v1507 = vadd.f32 %v1406, %v1475
        %v1508 = vadd.f32 %v1407, %v1476
        %v1509 = vadd.f32 %v1408, %v1477
        %v1510 = vadd.f32 %v1409, %v1478
        %v1511 = vadd.f32 %v1410, %v1479
        %v1512 = vadd.f32 %v1411, %v1480
        %v1513 = vadd.f32 %v1412, %v1481
        %v1514 = vadd.f32 %v1413, %v1482
        %v1515 = vadd.f32 %v1414, %v1483
        %v1516 = vadd.f32 %v1415, %v1484
        %v1517 = vadd.f32 %v1416, %v1485
        %v1518 = vadd.f32 %v1417, %v1486
        %v1519 = vadd.f32 %v1418, %v1487
        %v1520 = vadd.f32 %v1419, %v1488
        %v1521 = vadd.f32 %v1420, %v1489
        %v1522 = vadd.f32 %v1421, %v1490
        %v1523 = vld [vmem:[%s375 + $0x4] sm:$0xff]
        %v1524 = vld [vmem:[%s375 + $0xc] sm:$0xff]
        %v1525 = vld [vmem:[%s375 + $0x24] sm:$0xff]
        %v1526 = vld [vmem:[%s375 + $0x2c] sm:$0xff]
        %v1527 = vld [vmem:[%s375 + $0x44] sm:$0xff]
        %v1528 = vld [vmem:[%s375 + $0x4c] sm:$0xff]
        %v1529 = vld [vmem:[%s375 + $0x64] sm:$0xff]
        %v1530 = vld [vmem:[%s375 + $0x6c] sm:$0xff]
        %v1531 = vld [vmem:[%s375 + $0x84] sm:$0xff]
        %v1532 = vld [vmem:[%s375 + $0x8c] sm:$0xff]
        %v1533 = vld [vmem:[%s375 + $0xa4] sm:$0xff]
        %v1534 = vld [vmem:[%s375 + $0xac] sm:$0xff]
        %v1535 = vld [vmem:[%s375 + $0xc4] sm:$0xff]
        %v1536 = vld [vmem:[%s375 + $0xcc] sm:$0xff]
        %v1537 = vld [vmem:[%s375 + $0xe4] sm:$0xff]
        %v1538 = vld [vmem:[%s375 + $0xec] sm:$0xff]
        %v1539 = vld [vmem:[%s375 + $0x104] sm:$0xff]
        %v1540 = vld [vmem:[%s375 + $0x10c] sm:$0xff]
        %v1541 = vld [vmem:[%s375 + $0x124] sm:$0xff]
        %v1542 = vld [vmem:[%s375 + $0x12c] sm:$0xff]
        %v1543 = vld [vmem:[%s375 + $0x144] sm:$0xff]
        %v1544 = vld [vmem:[%s375 + $0x14c] sm:$0xff]
        %v1545 = vld [vmem:[%s375 + $0x164] sm:$0xff]
        %v1546 = vld [vmem:[%s375 + $0x16c] sm:$0xff]
        %v1547 = vld [vmem:[%s375 + $0x184] sm:$0xff]
        %v1548 = vld [vmem:[%s375 + $0x18c] sm:$0xff]
        %v1549 = vld [vmem:[%s375 + $0x1a4] sm:$0xff]
        %v1550 = vld [vmem:[%s375 + $0x1ac] sm:$0xff]
        %v1551 = vld [vmem:[%s375 + $0x1c4] sm:$0xff]
        %v1552 = vld [vmem:[%s375 + $0x1cc] sm:$0xff]
        %v1553 = vld [vmem:[%s375 + $0x1e4] sm:$0xff]
        %v1554 = vld [vmem:[%s375 + $0x1ec] sm:$0xff]
        %v1555 = vld [vmem:[%s233 + $0xb] sm:$0x1]
        %v1556 = vlaneseq
        %v1557 = vshrl.u32 %v1556, 7
        %v1558 = vsub.s32 0, %v1557
        %v1559 = vrot.slane %v1555, %v1558
        %v1560 = vmul.f32 %v1523, %v1559
        %v1561 = vmul.f32 %v1524, %v1559
        %v1562 = vmul.f32 %v1525, %v1559
        %v1563 = vmul.f32 %v1526, %v1559
        %v1564 = vmul.f32 %v1527, %v1559
        %v1565 = vmul.f32 %v1528, %v1559
        %v1566 = vmul.f32 %v1529, %v1559
        %v1567 = vmul.f32 %v1530, %v1559
        %v1568 = vmul.f32 %v1531, %v1559
        %v1569 = vmul.f32 %v1532, %v1559
        %v1570 = vmul.f32 %v1533, %v1559
        %v1571 = vmul.f32 %v1534, %v1559
        %v1572 = vmul.f32 %v1535, %v1559
        %v1573 = vmul.f32 %v1536, %v1559
        %v1574 = vmul.f32 %v1537, %v1559
        %v1575 = vmul.f32 %v1538, %v1559
        %v1576 = vmul.f32 %v1539, %v1559
        %v1577 = vmul.f32 %v1540, %v1559
        %v1578 = vmul.f32 %v1541, %v1559
        %v1579 = vmul.f32 %v1542, %v1559
        %v1580 = vmul.f32 %v1543, %v1559
        %v1581 = vmul.f32 %v1544, %v1559
        %v1582 = vmul.f32 %v1545, %v1559
        %v1583 = vmul.f32 %v1546, %v1559
        %v1584 = vmul.f32 %v1547, %v1559
        %v1585 = vmul.f32 %v1548, %v1559
        %v1586 = vmul.f32 %v1549, %v1559
        %v1587 = vmul.f32 %v1550, %v1559
        %v1588 = vmul.f32 %v1551, %v1559
        %v1589 = vmul.f32 %v1552, %v1559
        %v1590 = vmul.f32 %v1553, %v1559
        %v1591 = vmul.f32 %v1554, %v1559
        %v1592 = vadd.f32 %v1491, %v1560
        %v1593 = vadd.f32 %v1492, %v1561
        %v1594 = vadd.f32 %v1493, %v1562
        %v1595 = vadd.f32 %v1494, %v1563
        %v1596 = vadd.f32 %v1495, %v1564
        %v1597 = vadd.f32 %v1496, %v1565
        %v1598 = vadd.f32 %v1497, %v1566
        %v1599 = vadd.f32 %v1498, %v1567
        %v1600 = vadd.f32 %v1499, %v1568
        %v1601 = vadd.f32 %v1500, %v1569
        %v1602 = vadd.f32 %v1501, %v1570
        %v1603 = vadd.f32 %v1502, %v1571
        %v1604 = vadd.f32 %v1503, %v1572
        %v1605 = vadd.f32 %v1504, %v1573
        %v1606 = vadd.f32 %v1505, %v1574
        %v1607 = vadd.f32 %v1506, %v1575
        %v1608 = vadd.f32 %v1507, %v1576
        %v1609 = vadd.f32 %v1508, %v1577
        %v1610 = vadd.f32 %v1509, %v1578
        %v1611 = vadd.f32 %v1510, %v1579
        %v1612 = vadd.f32 %v1511, %v1580
        %v1613 = vadd.f32 %v1512, %v1581
        %v1614 = vadd.f32 %v1513, %v1582
        %v1615 = vadd.f32 %v1514, %v1583
        %v1616 = vadd.f32 %v1515, %v1584
        %v1617 = vadd.f32 %v1516, %v1585
        %v1618 = vadd.f32 %v1517, %v1586
        %v1619 = vadd.f32 %v1518, %v1587
        %v1620 = vadd.f32 %v1519, %v1588
        %v1621 = vadd.f32 %v1520, %v1589
        %v1622 = vadd.f32 %v1521, %v1590
        %v1623 = vadd.f32 %v1522, %v1591
        %v1624 = vld [vmem:[%s375 + $0x5] sm:$0xff]
        %v1625 = vld [vmem:[%s375 + $0xd] sm:$0xff]
        %v1626 = vld [vmem:[%s375 + $0x25] sm:$0xff]
        %v1627 = vld [vmem:[%s375 + $0x2d] sm:$0xff]
        %v1628 = vld [vmem:[%s375 + $0x45] sm:$0xff]
        %v1629 = vld [vmem:[%s375 + $0x4d] sm:$0xff]
        %v1630 = vld [vmem:[%s375 + $0x65] sm:$0xff]
        %v1631 = vld [vmem:[%s375 + $0x6d] sm:$0xff]
        %v1632 = vld [vmem:[%s375 + $0x85] sm:$0xff]
        %v1633 = vld [vmem:[%s375 + $0x8d] sm:$0xff]
        %v1634 = vld [vmem:[%s375 + $0xa5] sm:$0xff]
        %v1635 = vld [vmem:[%s375 + $0xad] sm:$0xff]
        %v1636 = vld [vmem:[%s375 + $0xc5] sm:$0xff]
        %v1637 = vld [vmem:[%s375 + $0xcd] sm:$0xff]
        %v1638 = vld [vmem:[%s375 + $0xe5] sm:$0xff]
        %v1639 = vld [vmem:[%s375 + $0xed] sm:$0xff]
        %v1640 = vld [vmem:[%s375 + $0x105] sm:$0xff]
        %v1641 = vld [vmem:[%s375 + $0x10d] sm:$0xff]
        %v1642 = vld [vmem:[%s375 + $0x125] sm:$0xff]
        %v1643 = vld [vmem:[%s375 + $0x12d] sm:$0xff]
        %v1644 = vld [vmem:[%s375 + $0x145] sm:$0xff]
        %v1645 = vld [vmem:[%s375 + $0x14d] sm:$0xff]
        %v1646 = vld [vmem:[%s375 + $0x165] sm:$0xff]
        %v1647 = vld [vmem:[%s375 + $0x16d] sm:$0xff]
        %v1648 = vld [vmem:[%s375 + $0x185] sm:$0xff]
        %v1649 = vld [vmem:[%s375 + $0x18d] sm:$0xff]
        %v1650 = vld [vmem:[%s375 + $0x1a5] sm:$0xff]
        %v1651 = vld [vmem:[%s375 + $0x1ad] sm:$0xff]
        %v1652 = vld [vmem:[%s375 + $0x1c5] sm:$0xff]
        %v1653 = vld [vmem:[%s375 + $0x1cd] sm:$0xff]
        %v1654 = vld [vmem:[%s375 + $0x1e5] sm:$0xff]
        %v1655 = vld [vmem:[%s375 + $0x1ed] sm:$0xff]
        %v1656 = vld [vmem:[%s233 + $0xc] sm:$0x1]
        %v1657 = vlaneseq
        %v1658 = vshrl.u32 %v1657, 7
        %v1659 = vsub.s32 0, %v1658
        %v1660 = vrot.slane %v1656, %v1659
        %v1661 = vmul.f32 %v1624, %v1660
        %v1662 = vmul.f32 %v1625, %v1660
        %v1663 = vmul.f32 %v1626, %v1660
        %v1664 = vmul.f32 %v1627, %v1660
        %v1665 = vmul.f32 %v1628, %v1660
        %v1666 = vmul.f32 %v1629, %v1660
        %v1667 = vmul.f32 %v1630, %v1660
        %v1668 = vmul.f32 %v1631, %v1660
        %v1669 = vmul.f32 %v1632, %v1660
        %v1670 = vmul.f32 %v1633, %v1660
        %v1671 = vmul.f32 %v1634, %v1660
        %v1672 = vmul.f32 %v1635, %v1660
        %v1673 = vmul.f32 %v1636, %v1660
        %v1674 = vmul.f32 %v1637, %v1660
        %v1675 = vmul.f32 %v1638, %v1660
        %v1676 = vmul.f32 %v1639, %v1660
        %v1677 = vmul.f32 %v1640, %v1660
        %v1678 = vmul.f32 %v1641, %v1660
        %v1679 = vmul.f32 %v1642, %v1660
        %v1680 = vmul.f32 %v1643, %v1660
        %v1681 = vmul.f32 %v1644, %v1660
        %v1682 = vmul.f32 %v1645, %v1660
        %v1683 = vmul.f32 %v1646, %v1660
        %v1684 = vmul.f32 %v1647, %v1660
        %v1685 = vmul.f32 %v1648, %v1660
        %v1686 = vmul.f32 %v1649, %v1660
        %v1687 = vmul.f32 %v1650, %v1660
        %v1688 = vmul.f32 %v1651, %v1660
        %v1689 = vmul.f32 %v1652, %v1660
        %v1690 = vmul.f32 %v1653, %v1660
        %v1691 = vmul.f32 %v1654, %v1660
        %v1692 = vmul.f32 %v1655, %v1660
        %v1693 = vadd.f32 %v1592, %v1661
        %v1694 = vadd.f32 %v1593, %v1662
        %v1695 = vadd.f32 %v1594, %v1663
        %v1696 = vadd.f32 %v1595, %v1664
        %v1697 = vadd.f32 %v1596, %v1665
        %v1698 = vadd.f32 %v1597, %v1666
        %v1699 = vadd.f32 %v1598, %v1667
        %v1700 = vadd.f32 %v1599, %v1668
        %v1701 = vadd.f32 %v1600, %v1669
        %v1702 = vadd.f32 %v1601, %v1670
        %v1703 = vadd.f32 %v1602, %v1671
        %v1704 = vadd.f32 %v1603, %v1672
        %v1705 = vadd.f32 %v1604, %v1673
        %v1706 = vadd.f32 %v1605, %v1674
        %v1707 = vadd.f32 %v1606, %v1675
        %v1708 = vadd.f32 %v1607, %v1676
        %v1709 = vadd.f32 %v1608, %v1677
        %v1710 = vadd.f32 %v1609, %v1678
        %v1711 = vadd.f32 %v1610, %v1679
        %v1712 = vadd.f32 %v1611, %v1680
        %v1713 = vadd.f32 %v1612, %v1681
        %v1714 = vadd.f32 %v1613, %v1682
        %v1715 = vadd.f32 %v1614, %v1683
        %v1716 = vadd.f32 %v1615, %v1684
        %v1717 = vadd.f32 %v1616, %v1685
        %v1718 = vadd.f32 %v1617, %v1686
        %v1719 = vadd.f32 %v1618, %v1687
        %v1720 = vadd.f32 %v1619, %v1688
        %v1721 = vadd.f32 %v1620, %v1689
        %v1722 = vadd.f32 %v1621, %v1690
        %v1723 = vadd.f32 %v1622, %v1691
        %v1724 = vadd.f32 %v1623, %v1692
        %v1725 = vld [vmem:[%s375 + $0x6] sm:$0xff]
        %v1726 = vld [vmem:[%s375 + $0xe] sm:$0xff]
        %v1727 = vld [vmem:[%s375 + $0x26] sm:$0xff]
        %v1728 = vld [vmem:[%s375 + $0x2e] sm:$0xff]
        %v1729 = vld [vmem:[%s375 + $0x46] sm:$0xff]
        %v1730 = vld [vmem:[%s375 + $0x4e] sm:$0xff]
        %v1731 = vld [vmem:[%s375 + $0x66] sm:$0xff]
        %v1732 = vld [vmem:[%s375 + $0x6e] sm:$0xff]
        %v1733 = vld [vmem:[%s375 + $0x86] sm:$0xff]
        %v1734 = vld [vmem:[%s375 + $0x8e] sm:$0xff]
        %v1735 = vld [vmem:[%s375 + $0xa6] sm:$0xff]
        %v1736 = vld [vmem:[%s375 + $0xae] sm:$0xff]
        %v1737 = vld [vmem:[%s375 + $0xc6] sm:$0xff]
        %v1738 = vld [vmem:[%s375 + $0xce] sm:$0xff]
        %v1739 = vld [vmem:[%s375 + $0xe6] sm:$0xff]
        %v1740 = vld [vmem:[%s375 + $0xee] sm:$0xff]
        %v1741 = vld [vmem:[%s375 + $0x106] sm:$0xff]
        %v1742 = vld [vmem:[%s375 + $0x10e] sm:$0xff]
        %v1743 = vld [vmem:[%s375 + $0x126] sm:$0xff]
        %v1744 = vld [vmem:[%s375 + $0x12e] sm:$0xff]
        %v1745 = vld [vmem:[%s375 + $0x146] sm:$0xff]
        %v1746 = vld [vmem:[%s375 + $0x14e] sm:$0xff]
        %v1747 = vld [vmem:[%s375 + $0x166] sm:$0xff]
        %v1748 = vld [vmem:[%s375 + $0x16e] sm:$0xff]
        %v1749 = vld [vmem:[%s375 + $0x186] sm:$0xff]
        %v1750 = vld [vmem:[%s375 + $0x18e] sm:$0xff]
        %v1751 = vld [vmem:[%s375 + $0x1a6] sm:$0xff]
        %v1752 = vld [vmem:[%s375 + $0x1ae] sm:$0xff]
        %v1753 = vld [vmem:[%s375 + $0x1c6] sm:$0xff]
        %v1754 = vld [vmem:[%s375 + $0x1ce] sm:$0xff]
        %v1755 = vld [vmem:[%s375 + $0x1e6] sm:$0xff]
        %v1756 = vld [vmem:[%s375 + $0x1ee] sm:$0xff]
        %v1757 = vld [vmem:[%s233 + $0xd] sm:$0x1]
        %v1758 = vlaneseq
        %v1759 = vshrl.u32 %v1758, 7
        %v1760 = vsub.s32 0, %v1759
        %v1761 = vrot.slane %v1757, %v1760
        %v1762 = vmul.f32 %v1725, %v1761
        %v1763 = vmul.f32 %v1726, %v1761
        %v1764 = vmul.f32 %v1727, %v1761
        %v1765 = vmul.f32 %v1728, %v1761
        %v1766 = vmul.f32 %v1729, %v1761
        %v1767 = vmul.f32 %v1730, %v1761
        %v1768 = vmul.f32 %v1731, %v1761
        %v1769 = vmul.f32 %v1732, %v1761
        %v1770 = vmul.f32 %v1733, %v1761
        %v1771 = vmul.f32 %v1734, %v1761
        %v1772 = vmul.f32 %v1735, %v1761
        %v1773 = vmul.f32 %v1736, %v1761
        %v1774 = vmul.f32 %v1737, %v1761
        %v1775 = vmul.f32 %v1738, %v1761
        %v1776 = vmul.f32 %v1739, %v1761
        %v1777 = vmul.f32 %v1740, %v1761
        %v1778 = vmul.f32 %v1741, %v1761
        %v1779 = vmul.f32 %v1742, %v1761
        %v1780 = vmul.f32 %v1743, %v1761
        %v1781 = vmul.f32 %v1744, %v1761
        %v1782 = vmul.f32 %v1745, %v1761
        %v1783 = vmul.f32 %v1746, %v1761
        %v1784 = vmul.f32 %v1747, %v1761
        %v1785 = vmul.f32 %v1748, %v1761
        %v1786 = vmul.f32 %v1749, %v1761
        %v1787 = vmul.f32 %v1750, %v1761
        %v1788 = vmul.f32 %v1751, %v1761
        %v1789 = vmul.f32 %v1752, %v1761
        %v1790 = vmul.f32 %v1753, %v1761
        %v1791 = vmul.f32 %v1754, %v1761
        %v1792 = vmul.f32 %v1755, %v1761
        %v1793 = vmul.f32 %v1756, %v1761
        %v1794 = vadd.f32 %v1693, %v1762
        %v1795 = vadd.f32 %v1694, %v1763
        %v1796 = vadd.f32 %v1695, %v1764
        %v1797 = vadd.f32 %v1696, %v1765
        %v1798 = vadd.f32 %v1697, %v1766
        %v1799 = vadd.f32 %v1698, %v1767
        %v1800 = vadd.f32 %v1699, %v1768
        %v1801 = vadd.f32 %v1700, %v1769
        %v1802 = vadd.f32 %v1701, %v1770
        %v1803 = vadd.f32 %v1702, %v1771
        %v1804 = vadd.f32 %v1703, %v1772
        %v1805 = vadd.f32 %v1704, %v1773
        %v1806 = vadd.f32 %v1705, %v1774
        %v1807 = vadd.f32 %v1706, %v1775
        %v1808 = vadd.f32 %v1707, %v1776
        %v1809 = vadd.f32 %v1708, %v1777
        %v1810 = vadd.f32 %v1709, %v1778
        %v1811 = vadd.f32 %v1710, %v1779
        %v1812 = vadd.f32 %v1711, %v1780
        %v1813 = vadd.f32 %v1712, %v1781
        %v1814 = vadd.f32 %v1713, %v1782
        %v1815 = vadd.f32 %v1714, %v1783
        %v1816 = vadd.f32 %v1715, %v1784
        %v1817 = vadd.f32 %v1716, %v1785
        %v1818 = vadd.f32 %v1717, %v1786
        %v1819 = vadd.f32 %v1718, %v1787
        %v1820 = vadd.f32 %v1719, %v1788
        %v1821 = vadd.f32 %v1720, %v1789
        %v1822 = vadd.f32 %v1721, %v1790
        %v1823 = vadd.f32 %v1722, %v1791
        %v1824 = vadd.f32 %v1723, %v1792
        %v1825 = vadd.f32 %v1724, %v1793
        %v1826 = vld [vmem:[%s375 + $0x7] sm:$0xff]
        %v1827 = vld [vmem:[%s375 + $0xf] sm:$0xff]
        %v1828 = vld [vmem:[%s375 + $0x27] sm:$0xff]
        %v1829 = vld [vmem:[%s375 + $0x2f] sm:$0xff]
        %v1830 = vld [vmem:[%s375 + $0x47] sm:$0xff]
        %v1831 = vld [vmem:[%s375 + $0x4f] sm:$0xff]
        %v1832 = vld [vmem:[%s375 + $0x67] sm:$0xff]
        %v1833 = vld [vmem:[%s375 + $0x6f] sm:$0xff]
        %v1834 = vld [vmem:[%s375 + $0x87] sm:$0xff]
        %v1835 = vld [vmem:[%s375 + $0x8f] sm:$0xff]
        %v1836 = vld [vmem:[%s375 + $0xa7] sm:$0xff]
        %v1837 = vld [vmem:[%s375 + $0xaf] sm:$0xff]
        %v1838 = vld [vmem:[%s375 + $0xc7] sm:$0xff]
        %v1839 = vld [vmem:[%s375 + $0xcf] sm:$0xff]
        %v1840 = vld [vmem:[%s375 + $0xe7] sm:$0xff]
        %v1841 = vld [vmem:[%s375 + $0xef] sm:$0xff]
        %v1842 = vld [vmem:[%s375 + $0x107] sm:$0xff]
        %v1843 = vld [vmem:[%s375 + $0x10f] sm:$0xff]
        %v1844 = vld [vmem:[%s375 + $0x127] sm:$0xff]
        %v1845 = vld [vmem:[%s375 + $0x12f] sm:$0xff]
        %v1846 = vld [vmem:[%s375 + $0x147] sm:$0xff]
        %v1847 = vld [vmem:[%s375 + $0x14f] sm:$0xff]
        %v1848 = vld [vmem:[%s375 + $0x167] sm:$0xff]
        %v1849 = vld [vmem:[%s375 + $0x16f] sm:$0xff]
        %v1850 = vld [vmem:[%s375 + $0x187] sm:$0xff]
        %v1851 = vld [vmem:[%s375 + $0x18f] sm:$0xff]
        %v1852 = vld [vmem:[%s375 + $0x1a7] sm:$0xff]
        %v1853 = vld [vmem:[%s375 + $0x1af] sm:$0xff]
        %v1854 = vld [vmem:[%s375 + $0x1c7] sm:$0xff]
        %v1855 = vld [vmem:[%s375 + $0x1cf] sm:$0xff]
        %v1856 = vld [vmem:[%s375 + $0x1e7] sm:$0xff]
        %v1857 = vld [vmem:[%s375 + $0x1ef] sm:$0xff]
        %v1858 = vld [vmem:[%s233 + $0xe] sm:$0x1]
        %v1859 = vlaneseq
        %v1860 = vshrl.u32 %v1859, 7
        %v1861 = vsub.s32 0, %v1860
        %v1862 = vrot.slane %v1858, %v1861
        %v1863 = vmul.f32 %v1826, %v1862
        %v1864 = vmul.f32 %v1827, %v1862
        %v1865 = vmul.f32 %v1828, %v1862
        %v1866 = vmul.f32 %v1829, %v1862
        %v1867 = vmul.f32 %v1830, %v1862
        %v1868 = vmul.f32 %v1831, %v1862
        %v1869 = vmul.f32 %v1832, %v1862
        %v1870 = vmul.f32 %v1833, %v1862
        %v1871 = vmul.f32 %v1834, %v1862
        %v1872 = vmul.f32 %v1835, %v1862
        %v1873 = vmul.f32 %v1836, %v1862
        %v1874 = vmul.f32 %v1837, %v1862
        %v1875 = vmul.f32 %v1838, %v1862
        %v1876 = vmul.f32 %v1839, %v1862
        %v1877 = vmul.f32 %v1840, %v1862
        %v1878 = vmul.f32 %v1841, %v1862
        %v1879 = vmul.f32 %v1842, %v1862
        %v1880 = vmul.f32 %v1843, %v1862
        %v1881 = vmul.f32 %v1844, %v1862
        %v1882 = vmul.f32 %v1845, %v1862
        %v1883 = vmul.f32 %v1846, %v1862
        %v1884 = vmul.f32 %v1847, %v1862
        %v1885 = vmul.f32 %v1848, %v1862
        %v1886 = vmul.f32 %v1849, %v1862
        %v1887 = vmul.f32 %v1850, %v1862
        %v1888 = vmul.f32 %v1851, %v1862
        %v1889 = vmul.f32 %v1852, %v1862
        %v1890 = vmul.f32 %v1853, %v1862
        %v1891 = vmul.f32 %v1854, %v1862
        %v1892 = vmul.f32 %v1855, %v1862
        %v1893 = vmul.f32 %v1856, %v1862
        %v1894 = vmul.f32 %v1857, %v1862
        %v1895 = vadd.f32 %v1794, %v1863
        %v1896 = vadd.f32 %v1795, %v1864
        %v1897 = vadd.f32 %v1796, %v1865
        %v1898 = vadd.f32 %v1797, %v1866
        %v1899 = vadd.f32 %v1798, %v1867
        %v1900 = vadd.f32 %v1799, %v1868
        %v1901 = vadd.f32 %v1800, %v1869
        %v1902 = vadd.f32 %v1801, %v1870
        %v1903 = vadd.f32 %v1802, %v1871
        %v1904 = vadd.f32 %v1803, %v1872
        %v1905 = vadd.f32 %v1804, %v1873
        %v1906 = vadd.f32 %v1805, %v1874
        %v1907 = vadd.f32 %v1806, %v1875
        %v1908 = vadd.f32 %v1807, %v1876
        %v1909 = vadd.f32 %v1808, %v1877
        %v1910 = vadd.f32 %v1809, %v1878
        %v1911 = vadd.f32 %v1810, %v1879
        %v1912 = vadd.f32 %v1811, %v1880
        %v1913 = vadd.f32 %v1812, %v1881
        %v1914 = vadd.f32 %v1813, %v1882
        %v1915 = vadd.f32 %v1814, %v1883
        %v1916 = vadd.f32 %v1815, %v1884
        %v1917 = vadd.f32 %v1816, %v1885
        %v1918 = vadd.f32 %v1817, %v1886
        %v1919 = vadd.f32 %v1818, %v1887
        %v1920 = vadd.f32 %v1819, %v1888
        %v1921 = vadd.f32 %v1820, %v1889
        %v1922 = vadd.f32 %v1821, %v1890
        %v1923 = vadd.f32 %v1822, %v1891
        %v1924 = vadd.f32 %v1823, %v1892
        %v1925 = vadd.f32 %v1824, %v1893
        %v1926 = vadd.f32 %v1825, %v1894
        %v1927 = vld [vmem:[%s375 + $0x10] sm:$0xff]
        %v1928 = vld [vmem:[%s375 + $0x30] sm:$0xff]
        %v1929 = vld [vmem:[%s375 + $0x50] sm:$0xff]
        %v1930 = vld [vmem:[%s375 + $0x70] sm:$0xff]
        %v1931 = vld [vmem:[%s375 + $0x90] sm:$0xff]
        %v1932 = vld [vmem:[%s375 + $0xb0] sm:$0xff]
        %v1933 = vld [vmem:[%s375 + $0xd0] sm:$0xff]
        %v1934 = vld [vmem:[%s375 + $0xf0] sm:$0xff]
        %v1935 = vld [vmem:[%s375 + $0x110] sm:$0xff]
        %v1936 = vld [vmem:[%s375 + $0x130] sm:$0xff]
        %v1937 = vld [vmem:[%s375 + $0x150] sm:$0xff]
        %v1938 = vld [vmem:[%s375 + $0x170] sm:$0xff]
        %v1939 = vld [vmem:[%s375 + $0x190] sm:$0xff]
        %v1940 = vld [vmem:[%s375 + $0x1b0] sm:$0xff]
        %v1941 = vld [vmem:[%s375 + $0x1d0] sm:$0xff]
        %v1942 = vld [vmem:[%s375 + $0x1f0] sm:$0xff]
        %v1943 = vld [vmem:[%s233 + $0xf] sm:$0x1]
        %v1944 = vlaneseq
        %v1945 = vshrl.u32 %v1944, 7
        %v1946 = vsub.s32 0, %v1945
        %v1947 = vrot.slane %v1943, %v1946
        %v1948 = vmul.f32 %v1120, %v1947
        %v1949 = vmul.f32 %v1927, %v1947
        %v1950 = vmul.f32 %v1122, %v1947
        %v1951 = vmul.f32 %v1928, %v1947
        %v1952 = vmul.f32 %v1124, %v1947
        %v1953 = vmul.f32 %v1929, %v1947
        %v1954 = vmul.f32 %v1126, %v1947
        %v1955 = vmul.f32 %v1930, %v1947
        %v1956 = vmul.f32 %v1128, %v1947
        %v1957 = vmul.f32 %v1931, %v1947
        %v1958 = vmul.f32 %v1130, %v1947
        %v1959 = vmul.f32 %v1932, %v1947
        %v1960 = vmul.f32 %v1132, %v1947
        %v1961 = vmul.f32 %v1933, %v1947
        %v1962 = vmul.f32 %v1134, %v1947
        %v1963 = vmul.f32 %v1934, %v1947
        %v1964 = vmul.f32 %v1136, %v1947
        %v1965 = vmul.f32 %v1935, %v1947
        %v1966 = vmul.f32 %v1138, %v1947
        %v1967 = vmul.f32 %v1936, %v1947
        %v1968 = vmul.f32 %v1140, %v1947
        %v1969 = vmul.f32 %v1937, %v1947
        %v1970 = vmul.f32 %v1142, %v1947
        %v1971 = vmul.f32 %v1938, %v1947
        %v1972 = vmul.f32 %v1144, %v1947
        %v1973 = vmul.f32 %v1939, %v1947
        %v1974 = vmul.f32 %v1146, %v1947
        %v1975 = vmul.f32 %v1940, %v1947
        %v1976 = vmul.f32 %v1148, %v1947
        %v1977 = vmul.f32 %v1941, %v1947
        %v1978 = vmul.f32 %v1150, %v1947
        %v1979 = vmul.f32 %v1942, %v1947
        %v1980 = vadd.f32 %v1895, %v1948
        %v1981 = vadd.f32 %v1896, %v1949
        %v1982 = vadd.f32 %v1897, %v1950
        %v1983 = vadd.f32 %v1898, %v1951
        %v1984 = vadd.f32 %v1899, %v1952
        %v1985 = vadd.f32 %v1900, %v1953
        %v1986 = vadd.f32 %v1901, %v1954
        %v1987 = vadd.f32 %v1902, %v1955
        %v1988 = vadd.f32 %v1903, %v1956
        %v1989 = vadd.f32 %v1904, %v1957
        %v1990 = vadd.f32 %v1905, %v1958
        %v1991 = vadd.f32 %v1906, %v1959
        %v1992 = vadd.f32 %v1907, %v1960
        %v1993 = vadd.f32 %v1908, %v1961
        %v1994 = vadd.f32 %v1909, %v1962
        %v1995 = vadd.f32 %v1910, %v1963
        %v1996 = vadd.f32 %v1911, %v1964
        %v1997 = vadd.f32 %v1912, %v1965
        %v1998 = vadd.f32 %v1913, %v1966
        %v1999 = vadd.f32 %v1914, %v1967
        %v2000 = vadd.f32 %v1915, %v1968
        %v2001 = vadd.f32 %v1916, %v1969
        %v2002 = vadd.f32 %v1917, %v1970
        %v2003 = vadd.f32 %v1918, %v1971
        %v2004 = vadd.f32 %v1919, %v1972
        %v2005 = vadd.f32 %v1920, %v1973
        %v2006 = vadd.f32 %v1921, %v1974
        %v2007 = vadd.f32 %v1922, %v1975
        %v2008 = vadd.f32 %v1923, %v1976
        %v2009 = vadd.f32 %v1924, %v1977
        %v2010 = vadd.f32 %v1925, %v1978
        %v2011 = vadd.f32 %v1926, %v1979
        %v2012 = vld [vmem:[%s375 + $0x11] sm:$0xff]
        %v2013 = vld [vmem:[%s375 + $0x31] sm:$0xff]
        %v2014 = vld [vmem:[%s375 + $0x51] sm:$0xff]
        %v2015 = vld [vmem:[%s375 + $0x71] sm:$0xff]
        %v2016 = vld [vmem:[%s375 + $0x91] sm:$0xff]
        %v2017 = vld [vmem:[%s375 + $0xb1] sm:$0xff]
        %v2018 = vld [vmem:[%s375 + $0xd1] sm:$0xff]
        %v2019 = vld [vmem:[%s375 + $0xf1] sm:$0xff]
        %v2020 = vld [vmem:[%s375 + $0x111] sm:$0xff]
        %v2021 = vld [vmem:[%s375 + $0x131] sm:$0xff]
        %v2022 = vld [vmem:[%s375 + $0x151] sm:$0xff]
        %v2023 = vld [vmem:[%s375 + $0x171] sm:$0xff]
        %v2024 = vld [vmem:[%s375 + $0x191] sm:$0xff]
        %v2025 = vld [vmem:[%s375 + $0x1b1] sm:$0xff]
        %v2026 = vld [vmem:[%s375 + $0x1d1] sm:$0xff]
        %v2027 = vld [vmem:[%s375 + $0x1f1] sm:$0xff]
        %v2028 = vld [vmem:[%s233 + $0x10] sm:$0x1]
        %v2029 = vlaneseq
        %v2030 = vshrl.u32 %v2029, 7
        %v2031 = vsub.s32 0, %v2030
        %v2032 = vrot.slane %v2028, %v2031
        %v2033 = vmul.f32 %v1221, %v2032
        %v2034 = vmul.f32 %v2012, %v2032
        %v2035 = vmul.f32 %v1223, %v2032
        %v2036 = vmul.f32 %v2013, %v2032
        %v2037 = vmul.f32 %v1225, %v2032
        %v2038 = vmul.f32 %v2014, %v2032
        %v2039 = vmul.f32 %v1227, %v2032
        %v2040 = vmul.f32 %v2015, %v2032
        %v2041 = vmul.f32 %v1229, %v2032
        %v2042 = vmul.f32 %v2016, %v2032
        %v2043 = vmul.f32 %v1231, %v2032
        %v2044 = vmul.f32 %v2017, %v2032
        %v2045 = vmul.f32 %v1233, %v2032
        %v2046 = vmul.f32 %v2018, %v2032
        %v2047 = vmul.f32 %v1235, %v2032
        %v2048 = vmul.f32 %v2019, %v2032
        %v2049 = vmul.f32 %v1237, %v2032
        %v2050 = vmul.f32 %v2020, %v2032
        %v2051 = vmul.f32 %v1239, %v2032
        %v2052 = vmul.f32 %v2021, %v2032
        %v2053 = vmul.f32 %v1241, %v2032
        %v2054 = vmul.f32 %v2022, %v2032
        %v2055 = vmul.f32 %v1243, %v2032
        %v2056 = vmul.f32 %v2023, %v2032
        %v2057 = vmul.f32 %v1245, %v2032
        %v2058 = vmul.f32 %v2024, %v2032
        %v2059 = vmul.f32 %v1247, %v2032
        %v2060 = vmul.f32 %v2025, %v2032
        %v2061 = vmul.f32 %v1249, %v2032
        %v2062 = vmul.f32 %v2026, %v2032
        %v2063 = vmul.f32 %v1251, %v2032
        %v2064 = vmul.f32 %v2027, %v2032
        %v2065 = vadd.f32 %v1980, %v2033
        %v2066 = vadd.f32 %v1981, %v2034
        %v2067 = vadd.f32 %v1982, %v2035
        %v2068 = vadd.f32 %v1983, %v2036
        %v2069 = vadd.f32 %v1984, %v2037
        %v2070 = vadd.f32 %v1985, %v2038
        %v2071 = vadd.f32 %v1986, %v2039
        %v2072 = vadd.f32 %v1987, %v2040
        %v2073 = vadd.f32 %v1988, %v2041
        %v2074 = vadd.f32 %v1989, %v2042
        %v2075 = vadd.f32 %v1990, %v2043
        %v2076 = vadd.f32 %v1991, %v2044
        %v2077 = vadd.f32 %v1992, %v2045
        %v2078 = vadd.f32 %v1993, %v2046
        %v2079 = vadd.f32 %v1994, %v2047
        %v2080 = vadd.f32 %v1995, %v2048
        %v2081 = vadd.f32 %v1996, %v2049
        %v2082 = vadd.f32 %v1997, %v2050
        %v2083 = vadd.f32 %v1998, %v2051
        %v2084 = vadd.f32 %v1999, %v2052
        %v2085 = vadd.f32 %v2000, %v2053
        %v2086 = vadd.f32 %v2001, %v2054
        %v2087 = vadd.f32 %v2002, %v2055
        %v2088 = vadd.f32 %v2003, %v2056
        %v2089 = vadd.f32 %v2004, %v2057
        %v2090 = vadd.f32 %v2005, %v2058
        %v2091 = vadd.f32 %v2006, %v2059
        %v2092 = vadd.f32 %v2007, %v2060
        %v2093 = vadd.f32 %v2008, %v2061
        %v2094 = vadd.f32 %v2009, %v2062
        %v2095 = vadd.f32 %v2010, %v2063
        %v2096 = vadd.f32 %v2011, %v2064
        %v2097 = vld [vmem:[%s375 + $0x12] sm:$0xff]
        %v2098 = vld [vmem:[%s375 + $0x32] sm:$0xff]
        %v2099 = vld [vmem:[%s375 + $0x52] sm:$0xff]
        %v2100 = vld [vmem:[%s375 + $0x72] sm:$0xff]
        %v2101 = vld [vmem:[%s375 + $0x92] sm:$0xff]
        %v2102 = vld [vmem:[%s375 + $0xb2] sm:$0xff]
        %v2103 = vld [vmem:[%s375 + $0xd2] sm:$0xff]
        %v2104 = vld [vmem:[%s375 + $0xf2] sm:$0xff]
        %v2105 = vld [vmem:[%s375 + $0x112] sm:$0xff]
        %v2106 = vld [vmem:[%s375 + $0x132] sm:$0xff]
        %v2107 = vld [vmem:[%s375 + $0x152] sm:$0xff]
        %v2108 = vld [vmem:[%s375 + $0x172] sm:$0xff]
        %v2109 = vld [vmem:[%s375 + $0x192] sm:$0xff]
        %v2110 = vld [vmem:[%s375 + $0x1b2] sm:$0xff]
        %v2111 = vld [vmem:[%s375 + $0x1d2] sm:$0xff]
        %v2112 = vld [vmem:[%s375 + $0x1f2] sm:$0xff]
        %v2113 = vld [vmem:[%s233 + $0x11] sm:$0x1]
        %v2114 = vlaneseq
        %v2115 = vshrl.u32 %v2114, 7
        %v2116 = vsub.s32 0, %v2115
        %v2117 = vrot.slane %v2113, %v2116
        %v2118 = vmul.f32 %v1322, %v2117
        %v2119 = vmul.f32 %v2097, %v2117
        %v2120 = vmul.f32 %v1324, %v2117
        %v2121 = vmul.f32 %v2098, %v2117
        %v2122 = vmul.f32 %v1326, %v2117
        %v2123 = vmul.f32 %v2099, %v2117
        %v2124 = vmul.f32 %v1328, %v2117
        %v2125 = vmul.f32 %v2100, %v2117
        %v2126 = vmul.f32 %v1330, %v2117
        %v2127 = vmul.f32 %v2101, %v2117
        %v2128 = vmul.f32 %v1332, %v2117
        %v2129 = vmul.f32 %v2102, %v2117
        %v2130 = vmul.f32 %v1334, %v2117
        %v2131 = vmul.f32 %v2103, %v2117
        %v2132 = vmul.f32 %v1336, %v2117
        %v2133 = vmul.f32 %v2104, %v2117
        %v2134 = vmul.f32 %v1338, %v2117
        %v2135 = vmul.f32 %v2105, %v2117
        %v2136 = vmul.f32 %v1340, %v2117
        %v2137 = vmul.f32 %v2106, %v2117
        %v2138 = vmul.f32 %v1342, %v2117
        %v2139 = vmul.f32 %v2107, %v2117
        %v2140 = vmul.f32 %v1344, %v2117
        %v2141 = vmul.f32 %v2108, %v2117
        %v2142 = vmul.f32 %v1346, %v2117
        %v2143 = vmul.f32 %v2109, %v2117
        %v2144 = vmul.f32 %v1348, %v2117
        %v2145 = vmul.f32 %v2110, %v2117
        %v2146 = vmul.f32 %v1350, %v2117
        %v2147 = vmul.f32 %v2111, %v2117
        %v2148 = vmul.f32 %v1352, %v2117
        %v2149 = vmul.f32 %v2112, %v2117
        %v2150 = vadd.f32 %v2065, %v2118
        %v2151 = vadd.f32 %v2066, %v2119
        %v2152 = vadd.f32 %v2067, %v2120
        %v2153 = vadd.f32 %v2068, %v2121
        %v2154 = vadd.f32 %v2069, %v2122
        %v2155 = vadd.f32 %v2070, %v2123
        %v2156 = vadd.f32 %v2071, %v2124
        %v2157 = vadd.f32 %v2072, %v2125
        %v2158 = vadd.f32 %v2073, %v2126
        %v2159 = vadd.f32 %v2074, %v2127
        %v2160 = vadd.f32 %v2075, %v2128
        %v2161 = vadd.f32 %v2076, %v2129
        %v2162 = vadd.f32 %v2077, %v2130
        %v2163 = vadd.f32 %v2078, %v2131
        %v2164 = vadd.f32 %v2079, %v2132
        %v2165 = vadd.f32 %v2080, %v2133
        %v2166 = vadd.f32 %v2081, %v2134
        %v2167 = vadd.f32 %v2082, %v2135
        %v2168 = vadd.f32 %v2083, %v2136
        %v2169 = vadd.f32 %v2084, %v2137
        %v2170 = vadd.f32 %v2085, %v2138
        %v2171 = vadd.f32 %v2086, %v2139
        %v2172 = vadd.f32 %v2087, %v2140
        %v2173 = vadd.f32 %v2088, %v2141
        %v2174 = vadd.f32 %v2089, %v2142
        %v2175 = vadd.f32 %v2090, %v2143
        %v2176 = vadd.f32 %v2091, %v2144
        %v2177 = vadd.f32 %v2092, %v2145
        %v2178 = vadd.f32 %v2093, %v2146
        %v2179 = vadd.f32 %v2094, %v2147
        %v2180 = vadd.f32 %v2095, %v2148
        %v2181 = vadd.f32 %v2096, %v2149
        %s2182 = scalar_lea.vmem [#allocation2], 192
        %v2183 = vld [vmem:[%s2182 + $0x4] sm:$0xff]
        %v2184 = vld [vmem:[%s2182 + $0xc] sm:$0xff]
        %v2185 = vld [vmem:[%s2182 + $0x24] sm:$0xff]
        %v2186 = vld [vmem:[%s2182 + $0x2c] sm:$0xff]
        %v2187 = vld [vmem:[%s2182 + $0x44] sm:$0xff]
        %v2188 = vld [vmem:[%s2182 + $0x4c] sm:$0xff]
        %v2189 = vld [vmem:[%s2182 + $0x64] sm:$0xff]
        %v2190 = vld [vmem:[%s2182 + $0x6c] sm:$0xff]
        %v2191 = vld [vmem:[%s2182 + $0x84] sm:$0xff]
        %v2192 = vld [vmem:[%s2182 + $0x8c] sm:$0xff]
        %v2193 = vld [vmem:[%s2182 + $0xa4] sm:$0xff]
        %v2194 = vld [vmem:[%s2182 + $0xac] sm:$0xff]
        %v2195 = vld [vmem:[%s2182 + $0xc4] sm:$0xff]
        %v2196 = vld [vmem:[%s2182 + $0xcc] sm:$0xff]
        %v2197 = vld [vmem:[%s2182 + $0xe4] sm:$0xff]
        %v2198 = vld [vmem:[%s2182 + $0xec] sm:$0xff]
        %v2199 = vld [vmem:[%s2182 + $0x104] sm:$0xff]
        %v2200 = vld [vmem:[%s2182 + $0x10c] sm:$0xff]
        %v2201 = vld [vmem:[%s2182 + $0x124] sm:$0xff]
        %v2202 = vld [vmem:[%s2182 + $0x12c] sm:$0xff]
        %v2203 = vld [vmem:[%s2182 + $0x144] sm:$0xff]
        %v2204 = vld [vmem:[%s2182 + $0x14c] sm:$0xff]
        %v2205 = vld [vmem:[%s2182 + $0x164] sm:$0xff]
        %v2206 = vld [vmem:[%s2182 + $0x16c] sm:$0xff]
        %v2207 = vld [vmem:[%s2182 + $0x184] sm:$0xff]
        %v2208 = vld [vmem:[%s2182 + $0x18c] sm:$0xff]
        %v2209 = vld [vmem:[%s2182 + $0x1a4] sm:$0xff]
        %v2210 = vld [vmem:[%s2182 + $0x1ac] sm:$0xff]
        %v2211 = vld [vmem:[%s2182 + $0x1c4] sm:$0xff]
        %v2212 = vld [vmem:[%s2182 + $0x1cc] sm:$0xff]
        %v2213 = vld [vmem:[%s2182 + $0x1e4] sm:$0xff]
        %v2214 = vld [vmem:[%s2182 + $0x1ec] sm:$0xff]
        %v2215 = vld [vmem:[%s233 + $0x12] sm:$0x1]
        %v2216 = vlaneseq
        %v2217 = vshrl.u32 %v2216, 7
        %v2218 = vsub.s32 0, %v2217
        %v2219 = vrot.slane %v2215, %v2218
        %v2220 = vmul.f32 %v2183, %v2219
        %v2221 = vmul.f32 %v2184, %v2219
        %v2222 = vmul.f32 %v2185, %v2219
        %v2223 = vmul.f32 %v2186, %v2219
        %v2224 = vmul.f32 %v2187, %v2219
        %v2225 = vmul.f32 %v2188, %v2219
        %v2226 = vmul.f32 %v2189, %v2219
        %v2227 = vmul.f32 %v2190, %v2219
        %v2228 = vmul.f32 %v2191, %v2219
        %v2229 = vmul.f32 %v2192, %v2219
        %v2230 = vmul.f32 %v2193, %v2219
        %v2231 = vmul.f32 %v2194, %v2219
        %v2232 = vmul.f32 %v2195, %v2219
        %v2233 = vmul.f32 %v2196, %v2219
        %v2234 = vmul.f32 %v2197, %v2219
        %v2235 = vmul.f32 %v2198, %v2219
        %v2236 = vmul.f32 %v2199, %v2219
        %v2237 = vmul.f32 %v2200, %v2219
        %v2238 = vmul.f32 %v2201, %v2219
        %v2239 = vmul.f32 %v2202, %v2219
        %v2240 = vmul.f32 %v2203, %v2219
        %v2241 = vmul.f32 %v2204, %v2219
        %v2242 = vmul.f32 %v2205, %v2219
        %v2243 = vmul.f32 %v2206, %v2219
        %v2244 = vmul.f32 %v2207, %v2219
        %v2245 = vmul.f32 %v2208, %v2219
        %v2246 = vmul.f32 %v2209, %v2219
        %v2247 = vmul.f32 %v2210, %v2219
        %v2248 = vmul.f32 %v2211, %v2219
        %v2249 = vmul.f32 %v2212, %v2219
        %v2250 = vmul.f32 %v2213, %v2219
        %v2251 = vmul.f32 %v2214, %v2219
        %v2252 = vadd.f32 %v2150, %v2220
        %v2253 = vadd.f32 %v2151, %v2221
        %v2254 = vadd.f32 %v2152, %v2222
        %v2255 = vadd.f32 %v2153, %v2223
        %v2256 = vadd.f32 %v2154, %v2224
        %v2257 = vadd.f32 %v2155, %v2225
        %v2258 = vadd.f32 %v2156, %v2226
        %v2259 = vadd.f32 %v2157, %v2227
        %v2260 = vadd.f32 %v2158, %v2228
        %v2261 = vadd.f32 %v2159, %v2229
        %v2262 = vadd.f32 %v2160, %v2230
        %v2263 = vadd.f32 %v2161, %v2231
        %v2264 = vadd.f32 %v2162, %v2232
        %v2265 = vadd.f32 %v2163, %v2233
        %v2266 = vadd.f32 %v2164, %v2234
        %v2267 = vadd.f32 %v2165, %v2235
        %v2268 = vadd.f32 %v2166, %v2236
        %v2269 = vadd.f32 %v2167, %v2237
        %v2270 = vadd.f32 %v2168, %v2238
        %v2271 = vadd.f32 %v2169, %v2239
        %v2272 = vadd.f32 %v2170, %v2240
        %v2273 = vadd.f32 %v2171, %v2241
        %v2274 = vadd.f32 %v2172, %v2242
        %v2275 = vadd.f32 %v2173, %v2243
        %v2276 = vadd.f32 %v2174, %v2244
        %v2277 = vadd.f32 %v2175, %v2245
        %v2278 = vadd.f32 %v2176, %v2246
        %v2279 = vadd.f32 %v2177, %v2247
        %v2280 = vadd.f32 %v2178, %v2248
        %v2281 = vadd.f32 %v2179, %v2249
        %v2282 = vadd.f32 %v2180, %v2250
        %v2283 = vadd.f32 %v2181, %v2251
        %v2284 = vld [vmem:[%s2182 + $0x5] sm:$0xff]
        %v2285 = vld [vmem:[%s2182 + $0xd] sm:$0xff]
        %v2286 = vld [vmem:[%s2182 + $0x25] sm:$0xff]
        %v2287 = vld [vmem:[%s2182 + $0x2d] sm:$0xff]
        %v2288 = vld [vmem:[%s2182 + $0x45] sm:$0xff]
        %v2289 = vld [vmem:[%s2182 + $0x4d] sm:$0xff]
        %v2290 = vld [vmem:[%s2182 + $0x65] sm:$0xff]
        %v2291 = vld [vmem:[%s2182 + $0x6d] sm:$0xff]
        %v2292 = vld [vmem:[%s2182 + $0x85] sm:$0xff]
        %v2293 = vld [vmem:[%s2182 + $0x8d] sm:$0xff]
        %v2294 = vld [vmem:[%s2182 + $0xa5] sm:$0xff]
        %v2295 = vld [vmem:[%s2182 + $0xad] sm:$0xff]
        %v2296 = vld [vmem:[%s2182 + $0xc5] sm:$0xff]
        %v2297 = vld [vmem:[%s2182 + $0xcd] sm:$0xff]
        %v2298 = vld [vmem:[%s2182 + $0xe5] sm:$0xff]
        %v2299 = vld [vmem:[%s2182 + $0xed] sm:$0xff]
        %v2300 = vld [vmem:[%s2182 + $0x105] sm:$0xff]
        %v2301 = vld [vmem:[%s2182 + $0x10d] sm:$0xff]
        %v2302 = vld [vmem:[%s2182 + $0x125] sm:$0xff]
        %v2303 = vld [vmem:[%s2182 + $0x12d] sm:$0xff]
        %v2304 = vld [vmem:[%s2182 + $0x145] sm:$0xff]
        %v2305 = vld [vmem:[%s2182 + $0x14d] sm:$0xff]
        %v2306 = vld [vmem:[%s2182 + $0x165] sm:$0xff]
        %v2307 = vld [vmem:[%s2182 + $0x16d] sm:$0xff]
        %v2308 = vld [vmem:[%s2182 + $0x185] sm:$0xff]
        %v2309 = vld [vmem:[%s2182 + $0x18d] sm:$0xff]
        %v2310 = vld [vmem:[%s2182 + $0x1a5] sm:$0xff]
        %v2311 = vld [vmem:[%s2182 + $0x1ad] sm:$0xff]
        %v2312 = vld [vmem:[%s2182 + $0x1c5] sm:$0xff]
        %v2313 = vld [vmem:[%s2182 + $0x1cd] sm:$0xff]
        %v2314 = vld [vmem:[%s2182 + $0x1e5] sm:$0xff]
        %v2315 = vld [vmem:[%s2182 + $0x1ed] sm:$0xff]
        %v2316 = vld [vmem:[%s233 + $0x13] sm:$0x1]
        %v2317 = vlaneseq
        %v2318 = vshrl.u32 %v2317, 7
        %v2319 = vsub.s32 0, %v2318
        %v2320 = vrot.slane %v2316, %v2319
        %v2321 = vmul.f32 %v2284, %v2320
        %v2322 = vmul.f32 %v2285, %v2320
        %v2323 = vmul.f32 %v2286, %v2320
        %v2324 = vmul.f32 %v2287, %v2320
        %v2325 = vmul.f32 %v2288, %v2320
        %v2326 = vmul.f32 %v2289, %v2320
        %v2327 = vmul.f32 %v2290, %v2320
        %v2328 = vmul.f32 %v2291, %v2320
        %v2329 = vmul.f32 %v2292, %v2320
        %v2330 = vmul.f32 %v2293, %v2320
        %v2331 = vmul.f32 %v2294, %v2320
        %v2332 = vmul.f32 %v2295, %v2320
        %v2333 = vmul.f32 %v2296, %v2320
        %v2334 = vmul.f32 %v2297, %v2320
        %v2335 = vmul.f32 %v2298, %v2320
        %v2336 = vmul.f32 %v2299, %v2320
        %v2337 = vmul.f32 %v2300, %v2320
        %v2338 = vmul.f32 %v2301, %v2320
        %v2339 = vmul.f32 %v2302, %v2320
        %v2340 = vmul.f32 %v2303, %v2320
        %v2341 = vmul.f32 %v2304, %v2320
        %v2342 = vmul.f32 %v2305, %v2320
        %v2343 = vmul.f32 %v2306, %v2320
        %v2344 = vmul.f32 %v2307, %v2320
        %v2345 = vmul.f32 %v2308, %v2320
        %v2346 = vmul.f32 %v2309, %v2320
        %v2347 = vmul.f32 %v2310, %v2320
        %v2348 = vmul.f32 %v2311, %v2320
        %v2349 = vmul.f32 %v2312, %v2320
        %v2350 = vmul.f32 %v2313, %v2320
        %v2351 = vmul.f32 %v2314, %v2320
        %v2352 = vmul.f32 %v2315, %v2320
        %v2353 = vadd.f32 %v2252, %v2321
        %v2354 = vadd.f32 %v2253, %v2322
        %v2355 = vadd.f32 %v2254, %v2323
        %v2356 = vadd.f32 %v2255, %v2324
        %v2357 = vadd.f32 %v2256, %v2325
        %v2358 = vadd.f32 %v2257, %v2326
        %v2359 = vadd.f32 %v2258, %v2327
        %v2360 = vadd.f32 %v2259, %v2328
        %v2361 = vadd.f32 %v2260, %v2329
        %v2362 = vadd.f32 %v2261, %v2330
        %v2363 = vadd.f32 %v2262, %v2331
        %v2364 = vadd.f32 %v2263, %v2332
        %v2365 = vadd.f32 %v2264, %v2333
        %v2366 = vadd.f32 %v2265, %v2334
        %v2367 = vadd.f32 %v2266, %v2335
        %v2368 = vadd.f32 %v2267, %v2336
        %v2369 = vadd.f32 %v2268, %v2337
        %v2370 = vadd.f32 %v2269, %v2338
        %v2371 = vadd.f32 %v2270, %v2339
        %v2372 = vadd.f32 %v2271, %v2340
        %v2373 = vadd.f32 %v2272, %v2341
        %v2374 = vadd.f32 %v2273, %v2342
        %v2375 = vadd.f32 %v2274, %v2343
        %v2376 = vadd.f32 %v2275, %v2344
        %v2377 = vadd.f32 %v2276, %v2345
        %v2378 = vadd.f32 %v2277, %v2346
        %v2379 = vadd.f32 %v2278, %v2347
        %v2380 = vadd.f32 %v2279, %v2348
        %v2381 = vadd.f32 %v2280, %v2349
        %v2382 = vadd.f32 %v2281, %v2350
        %v2383 = vadd.f32 %v2282, %v2351
        %v2384 = vadd.f32 %v2283, %v2352
        %v2385 = vld [vmem:[%s2182 + $0x6] sm:$0xff]
        %v2386 = vld [vmem:[%s2182 + $0xe] sm:$0xff]
        %v2387 = vld [vmem:[%s2182 + $0x26] sm:$0xff]
        %v2388 = vld [vmem:[%s2182 + $0x2e] sm:$0xff]
        %v2389 = vld [vmem:[%s2182 + $0x46] sm:$0xff]
        %v2390 = vld [vmem:[%s2182 + $0x4e] sm:$0xff]
        %v2391 = vld [vmem:[%s2182 + $0x66] sm:$0xff]
        %v2392 = vld [vmem:[%s2182 + $0x6e] sm:$0xff]
        %v2393 = vld [vmem:[%s2182 + $0x86] sm:$0xff]
        %v2394 = vld [vmem:[%s2182 + $0x8e] sm:$0xff]
        %v2395 = vld [vmem:[%s2182 + $0xa6] sm:$0xff]
        %v2396 = vld [vmem:[%s2182 + $0xae] sm:$0xff]
        %v2397 = vld [vmem:[%s2182 + $0xc6] sm:$0xff]
        %v2398 = vld [vmem:[%s2182 + $0xce] sm:$0xff]
        %v2399 = vld [vmem:[%s2182 + $0xe6] sm:$0xff]
        %v2400 = vld [vmem:[%s2182 + $0xee] sm:$0xff]
        %v2401 = vld [vmem:[%s2182 + $0x106] sm:$0xff]
        %v2402 = vld [vmem:[%s2182 + $0x10e] sm:$0xff]
        %v2403 = vld [vmem:[%s2182 + $0x126] sm:$0xff]
        %v2404 = vld [vmem:[%s2182 + $0x12e] sm:$0xff]
        %v2405 = vld [vmem:[%s2182 + $0x146] sm:$0xff]
        %v2406 = vld [vmem:[%s2182 + $0x14e] sm:$0xff]
        %v2407 = vld [vmem:[%s2182 + $0x166] sm:$0xff]
        %v2408 = vld [vmem:[%s2182 + $0x16e] sm:$0xff]
        %v2409 = vld [vmem:[%s2182 + $0x186] sm:$0xff]
        %v2410 = vld [vmem:[%s2182 + $0x18e] sm:$0xff]
        %v2411 = vld [vmem:[%s2182 + $0x1a6] sm:$0xff]
        %v2412 = vld [vmem:[%s2182 + $0x1ae] sm:$0xff]
        %v2413 = vld [vmem:[%s2182 + $0x1c6] sm:$0xff]
        %v2414 = vld [vmem:[%s2182 + $0x1ce] sm:$0xff]
        %v2415 = vld [vmem:[%s2182 + $0x1e6] sm:$0xff]
        %v2416 = vld [vmem:[%s2182 + $0x1ee] sm:$0xff]
        %v2417 = vld [vmem:[%s233 + $0x14] sm:$0x1]
        %v2418 = vlaneseq
        %v2419 = vshrl.u32 %v2418, 7
        %v2420 = vsub.s32 0, %v2419
        %v2421 = vrot.slane %v2417, %v2420
        %v2422 = vmul.f32 %v2385, %v2421
        %v2423 = vmul.f32 %v2386, %v2421
        %v2424 = vmul.f32 %v2387, %v2421
        %v2425 = vmul.f32 %v2388, %v2421
        %v2426 = vmul.f32 %v2389, %v2421
        %v2427 = vmul.f32 %v2390, %v2421
        %v2428 = vmul.f32 %v2391, %v2421
        %v2429 = vmul.f32 %v2392, %v2421
        %v2430 = vmul.f32 %v2393, %v2421
        %v2431 = vmul.f32 %v2394, %v2421
        %v2432 = vmul.f32 %v2395, %v2421
        %v2433 = vmul.f32 %v2396, %v2421
        %v2434 = vmul.f32 %v2397, %v2421
        %v2435 = vmul.f32 %v2398, %v2421
        %v2436 = vmul.f32 %v2399, %v2421
        %v2437 = vmul.f32 %v2400, %v2421
        %v2438 = vmul.f32 %v2401, %v2421
        %v2439 = vmul.f32 %v2402, %v2421
        %v2440 = vmul.f32 %v2403, %v2421
        %v2441 = vmul.f32 %v2404, %v2421
        %v2442 = vmul.f32 %v2405, %v2421
        %v2443 = vmul.f32 %v2406, %v2421
        %v2444 = vmul.f32 %v2407, %v2421
        %v2445 = vmul.f32 %v2408, %v2421
        %v2446 = vmul.f32 %v2409, %v2421
        %v2447 = vmul.f32 %v2410, %v2421
        %v2448 = vmul.f32 %v2411, %v2421
        %v2449 = vmul.f32 %v2412, %v2421
        %v2450 = vmul.f32 %v2413, %v2421
        %v2451 = vmul.f32 %v2414, %v2421
        %v2452 = vmul.f32 %v2415, %v2421
        %v2453 = vmul.f32 %v2416, %v2421
        %v2454 = vadd.f32 %v2353, %v2422
        %v2455 = vadd.f32 %v2354, %v2423
        %v2456 = vadd.f32 %v2355, %v2424
        %v2457 = vadd.f32 %v2356, %v2425
        %v2458 = vadd.f32 %v2357, %v2426
        %v2459 = vadd.f32 %v2358, %v2427
        %v2460 = vadd.f32 %v2359, %v2428
        %v2461 = vadd.f32 %v2360, %v2429
        %v2462 = vadd.f32 %v2361, %v2430
        %v2463 = vadd.f32 %v2362, %v2431
        %v2464 = vadd.f32 %v2363, %v2432
        %v2465 = vadd.f32 %v2364, %v2433
        %v2466 = vadd.f32 %v2365, %v2434
        %v2467 = vadd.f32 %v2366, %v2435
        %v2468 = vadd.f32 %v2367, %v2436
        %v2469 = vadd.f32 %v2368, %v2437
        %v2470 = vadd.f32 %v2369, %v2438
        %v2471 = vadd.f32 %v2370, %v2439
        %v2472 = vadd.f32 %v2371, %v2440
        %v2473 = vadd.f32 %v2372, %v2441
        %v2474 = vadd.f32 %v2373, %v2442
        %v2475 = vadd.f32 %v2374, %v2443
        %v2476 = vadd.f32 %v2375, %v2444
        %v2477 = vadd.f32 %v2376, %v2445
        %v2478 = vadd.f32 %v2377, %v2446
        %v2479 = vadd.f32 %v2378, %v2447
        %v2480 = vadd.f32 %v2379, %v2448
        %v2481 = vadd.f32 %v2380, %v2449
        %v2482 = vadd.f32 %v2381, %v2450
        %v2483 = vadd.f32 %v2382, %v2451
        %v2484 = vadd.f32 %v2383, %v2452
        %v2485 = vadd.f32 %v2384, %v2453
        %s2486 = scalar_lea.vmem [#allocation2], 224
        %v2487 = vld [vmem:[%s2486 + $0x5] sm:$0xff]
        %v2488 = vld [vmem:[%s2486 + $0xd] sm:$0xff]
        %v2489 = vld [vmem:[%s2486 + $0x25] sm:$0xff]
        %v2490 = vld [vmem:[%s2486 + $0x2d] sm:$0xff]
        %v2491 = vld [vmem:[%s2486 + $0x45] sm:$0xff]
        %v2492 = vld [vmem:[%s2486 + $0x4d] sm:$0xff]
        %v2493 = vld [vmem:[%s2486 + $0x65] sm:$0xff]
        %v2494 = vld [vmem:[%s2486 + $0x6d] sm:$0xff]
        %v2495 = vld [vmem:[%s2486 + $0x85] sm:$0xff]
        %v2496 = vld [vmem:[%s2486 + $0x8d] sm:$0xff]
        %v2497 = vld [vmem:[%s2486 + $0xa5] sm:$0xff]
        %v2498 = vld [vmem:[%s2486 + $0xad] sm:$0xff]
        %v2499 = vld [vmem:[%s2486 + $0xc5] sm:$0xff]
        %v2500 = vld [vmem:[%s2486 + $0xcd] sm:$0xff]
        %v2501 = vld [vmem:[%s2486 + $0xe5] sm:$0xff]
        %v2502 = vld [vmem:[%s2486 + $0xed] sm:$0xff]
        %v2503 = vld [vmem:[%s2486 + $0x105] sm:$0xff]
        %v2504 = vld [vmem:[%s2486 + $0x10d] sm:$0xff]
        %v2505 = vld [vmem:[%s2486 + $0x125] sm:$0xff]
        %v2506 = vld [vmem:[%s2486 + $0x12d] sm:$0xff]
        %v2507 = vld [vmem:[%s2486 + $0x145] sm:$0xff]
        %v2508 = vld [vmem:[%s2486 + $0x14d] sm:$0xff]
        %v2509 = vld [vmem:[%s2486 + $0x165] sm:$0xff]
        %v2510 = vld [vmem:[%s2486 + $0x16d] sm:$0xff]
        %v2511 = vld [vmem:[%s2486 + $0x185] sm:$0xff]
        %v2512 = vld [vmem:[%s2486 + $0x18d] sm:$0xff]
        %v2513 = vld [vmem:[%s2486 + $0x1a5] sm:$0xff]
        %v2514 = vld [vmem:[%s2486 + $0x1ad] sm:$0xff]
        %v2515 = vld [vmem:[%s2486 + $0x1c5] sm:$0xff]
        %v2516 = vld [vmem:[%s2486 + $0x1cd] sm:$0xff]
        %v2517 = vld [vmem:[%s2486 + $0x1e5] sm:$0xff]
        %v2518 = vld [vmem:[%s2486 + $0x1ed] sm:$0xff]
        %v2519 = vld [vmem:[%s233 + $0x15] sm:$0x1]
        %v2520 = vlaneseq
        %v2521 = vshrl.u32 %v2520, 7
        %v2522 = vsub.s32 0, %v2521
        %v2523 = vrot.slane %v2519, %v2522
        %v2524 = vmul.f32 %v2487, %v2523
        %v2525 = vmul.f32 %v2488, %v2523
        %v2526 = vmul.f32 %v2489, %v2523
        %v2527 = vmul.f32 %v2490, %v2523
        %v2528 = vmul.f32 %v2491, %v2523
        %v2529 = vmul.f32 %v2492, %v2523
        %v2530 = vmul.f32 %v2493, %v2523
        %v2531 = vmul.f32 %v2494, %v2523
        %v2532 = vmul.f32 %v2495, %v2523
        %v2533 = vmul.f32 %v2496, %v2523
        %v2534 = vmul.f32 %v2497, %v2523
        %v2535 = vmul.f32 %v2498, %v2523
        %v2536 = vmul.f32 %v2499, %v2523
        %v2537 = vmul.f32 %v2500, %v2523
        %v2538 = vmul.f32 %v2501, %v2523
        %v2539 = vmul.f32 %v2502, %v2523
        %v2540 = vmul.f32 %v2503, %v2523
        %v2541 = vmul.f32 %v2504, %v2523
        %v2542 = vmul.f32 %v2505, %v2523
        %v2543 = vmul.f32 %v2506, %v2523
        %v2544 = vmul.f32 %v2507, %v2523
        %v2545 = vmul.f32 %v2508, %v2523
        %v2546 = vmul.f32 %v2509, %v2523
        %v2547 = vmul.f32 %v2510, %v2523
        %v2548 = vmul.f32 %v2511, %v2523
        %v2549 = vmul.f32 %v2512, %v2523
        %v2550 = vmul.f32 %v2513, %v2523
        %v2551 = vmul.f32 %v2514, %v2523
        %v2552 = vmul.f32 %v2515, %v2523
        %v2553 = vmul.f32 %v2516, %v2523
        %v2554 = vmul.f32 %v2517, %v2523
        %v2555 = vmul.f32 %v2518, %v2523
        %v2556 = vadd.f32 %v2454, %v2524
        %v2557 = vadd.f32 %v2455, %v2525
        %v2558 = vadd.f32 %v2456, %v2526
        %v2559 = vadd.f32 %v2457, %v2527
        %v2560 = vadd.f32 %v2458, %v2528
        %v2561 = vadd.f32 %v2459, %v2529
        %v2562 = vadd.f32 %v2460, %v2530
        %v2563 = vadd.f32 %v2461, %v2531
        %v2564 = vadd.f32 %v2462, %v2532
        %v2565 = vadd.f32 %v2463, %v2533
        %v2566 = vadd.f32 %v2464, %v2534
        %v2567 = vadd.f32 %v2465, %v2535
        %v2568 = vadd.f32 %v2466, %v2536
        %v2569 = vadd.f32 %v2467, %v2537
        %v2570 = vadd.f32 %v2468, %v2538
        %v2571 = vadd.f32 %v2469, %v2539
        %v2572 = vadd.f32 %v2470, %v2540
        %v2573 = vadd.f32 %v2471, %v2541
        %v2574 = vadd.f32 %v2472, %v2542
        %v2575 = vadd.f32 %v2473, %v2543
        %v2576 = vadd.f32 %v2474, %v2544
        %v2577 = vadd.f32 %v2475, %v2545
        %v2578 = vadd.f32 %v2476, %v2546
        %v2579 = vadd.f32 %v2477, %v2547
        %v2580 = vadd.f32 %v2478, %v2548
        %v2581 = vadd.f32 %v2479, %v2549
        %v2582 = vadd.f32 %v2480, %v2550
        %v2583 = vadd.f32 %v2481, %v2551
        %v2584 = vadd.f32 %v2482, %v2552
        %v2585 = vadd.f32 %v2483, %v2553
        %v2586 = vadd.f32 %v2484, %v2554
        %v2587 = vadd.f32 %v2485, %v2555
        %s2588 = scalar_lea.vmem [#allocation2], 256
        %v2589 = vld [vmem:[%s2588 + $0x5] sm:$0xff]
        %v2590 = vld [vmem:[%s2588 + $0xd] sm:$0xff]
        %v2591 = vld [vmem:[%s2588 + $0x25] sm:$0xff]
        %v2592 = vld [vmem:[%s2588 + $0x2d] sm:$0xff]
        %v2593 = vld [vmem:[%s2588 + $0x45] sm:$0xff]
        %v2594 = vld [vmem:[%s2588 + $0x4d] sm:$0xff]
        %v2595 = vld [vmem:[%s2588 + $0x65] sm:$0xff]
        %v2596 = vld [vmem:[%s2588 + $0x6d] sm:$0xff]
        %v2597 = vld [vmem:[%s2588 + $0x85] sm:$0xff]
        %v2598 = vld [vmem:[%s2588 + $0x8d] sm:$0xff]
        %v2599 = vld [vmem:[%s2588 + $0xa5] sm:$0xff]
        %v2600 = vld [vmem:[%s2588 + $0xad] sm:$0xff]
        %v2601 = vld [vmem:[%s2588 + $0xc5] sm:$0xff]
        %v2602 = vld [vmem:[%s2588 + $0xcd] sm:$0xff]
        %v2603 = vld [vmem:[%s2588 + $0xe5] sm:$0xff]
        %v2604 = vld [vmem:[%s2588 + $0xed] sm:$0xff]
        %v2605 = vld [vmem:[%s2588 + $0x105] sm:$0xff]
        %v2606 = vld [vmem:[%s2588 + $0x10d] sm:$0xff]
        %v2607 = vld [vmem:[%s2588 + $0x125] sm:$0xff]
        %v2608 = vld [vmem:[%s2588 + $0x12d] sm:$0xff]
        %v2609 = vld [vmem:[%s2588 + $0x145] sm:$0xff]
        %v2610 = vld [vmem:[%s2588 + $0x14d] sm:$0xff]
        %v2611 = vld [vmem:[%s2588 + $0x165] sm:$0xff]
        %v2612 = vld [vmem:[%s2588 + $0x16d] sm:$0xff]
        %v2613 = vld [vmem:[%s2588 + $0x185] sm:$0xff]
        %v2614 = vld [vmem:[%s2588 + $0x18d] sm:$0xff]
        %v2615 = vld [vmem:[%s2588 + $0x1a5] sm:$0xff]
        %v2616 = vld [vmem:[%s2588 + $0x1ad] sm:$0xff]
        %v2617 = vld [vmem:[%s2588 + $0x1c5] sm:$0xff]
        %v2618 = vld [vmem:[%s2588 + $0x1cd] sm:$0xff]
        %v2619 = vld [vmem:[%s2588 + $0x1e5] sm:$0xff]
        %v2620 = vld [vmem:[%s2588 + $0x1ed] sm:$0xff]
        %v2621 = vld [vmem:[%s233 + $0x16] sm:$0x1]
        %v2622 = vlaneseq
        %v2623 = vshrl.u32 %v2622, 7
        %v2624 = vsub.s32 0, %v2623
        %v2625 = vrot.slane %v2621, %v2624
        %v2626 = vmul.f32 %v2589, %v2625
        %v2627 = vmul.f32 %v2590, %v2625
        %v2628 = vmul.f32 %v2591, %v2625
        %v2629 = vmul.f32 %v2592, %v2625
        %v2630 = vmul.f32 %v2593, %v2625
        %v2631 = vmul.f32 %v2594, %v2625
        %v2632 = vmul.f32 %v2595, %v2625
        %v2633 = vmul.f32 %v2596, %v2625
        %v2634 = vmul.f32 %v2597, %v2625
        %v2635 = vmul.f32 %v2598, %v2625
        %v2636 = vmul.f32 %v2599, %v2625
        %v2637 = vmul.f32 %v2600, %v2625
        %v2638 = vmul.f32 %v2601, %v2625
        %v2639 = vmul.f32 %v2602, %v2625
        %v2640 = vmul.f32 %v2603, %v2625
        %v2641 = vmul.f32 %v2604, %v2625
        %v2642 = vmul.f32 %v2605, %v2625
        %v2643 = vmul.f32 %v2606, %v2625
        %v2644 = vmul.f32 %v2607, %v2625
        %v2645 = vmul.f32 %v2608, %v2625
        %v2646 = vmul.f32 %v2609, %v2625
        %v2647 = vmul.f32 %v2610, %v2625
        %v2648 = vmul.f32 %v2611, %v2625
        %v2649 = vmul.f32 %v2612, %v2625
        %v2650 = vmul.f32 %v2613, %v2625
        %v2651 = vmul.f32 %v2614, %v2625
        %v2652 = vmul.f32 %v2615, %v2625
        %v2653 = vmul.f32 %v2616, %v2625
        %v2654 = vmul.f32 %v2617, %v2625
        %v2655 = vmul.f32 %v2618, %v2625
        %v2656 = vmul.f32 %v2619, %v2625
        %v2657 = vmul.f32 %v2620, %v2625
        %v2658 = vadd.f32 %v2556, %v2626
        %v2659 = vadd.f32 %v2557, %v2627
        %v2660 = vadd.f32 %v2558, %v2628
        %v2661 = vadd.f32 %v2559, %v2629
        %v2662 = vadd.f32 %v2560, %v2630
        %v2663 = vadd.f32 %v2561, %v2631
        %v2664 = vadd.f32 %v2562, %v2632
        %v2665 = vadd.f32 %v2563, %v2633
        %v2666 = vadd.f32 %v2564, %v2634
        %v2667 = vadd.f32 %v2565, %v2635
        %v2668 = vadd.f32 %v2566, %v2636
        %v2669 = vadd.f32 %v2567, %v2637
        %v2670 = vadd.f32 %v2568, %v2638
        %v2671 = vadd.f32 %v2569, %v2639
        %v2672 = vadd.f32 %v2570, %v2640
        %v2673 = vadd.f32 %v2571, %v2641
        %v2674 = vadd.f32 %v2572, %v2642
        %v2675 = vadd.f32 %v2573, %v2643
        %v2676 = vadd.f32 %v2574, %v2644
        %v2677 = vadd.f32 %v2575, %v2645
        %v2678 = vadd.f32 %v2576, %v2646
        %v2679 = vadd.f32 %v2577, %v2647
        %v2680 = vadd.f32 %v2578, %v2648
        %v2681 = vadd.f32 %v2579, %v2649
        %v2682 = vadd.f32 %v2580, %v2650
        %v2683 = vadd.f32 %v2581, %v2651
        %v2684 = vadd.f32 %v2582, %v2652
        %v2685 = vadd.f32 %v2583, %v2653
        %v2686 = vadd.f32 %v2584, %v2654
        %v2687 = vadd.f32 %v2585, %v2655
        %v2688 = vadd.f32 %v2586, %v2656
        %v2689 = vadd.f32 %v2587, %v2657
        %s2690 = scalar_lea.vmem [#allocation2], 288
        %v2691 = vld [vmem:[%s2690 + $0x5] sm:$0xff]
        %v2692 = vld [vmem:[%s2690 + $0xd] sm:$0xff]
        %v2693 = vld [vmem:[%s2690 + $0x25] sm:$0xff]
        %v2694 = vld [vmem:[%s2690 + $0x2d] sm:$0xff]
        %v2695 = vld [vmem:[%s2690 + $0x45] sm:$0xff]
        %v2696 = vld [vmem:[%s2690 + $0x4d] sm:$0xff]
        %v2697 = vld [vmem:[%s2690 + $0x65] sm:$0xff]
        %v2698 = vld [vmem:[%s2690 + $0x6d] sm:$0xff]
        %v2699 = vld [vmem:[%s2690 + $0x85] sm:$0xff]
        %v2700 = vld [vmem:[%s2690 + $0x8d] sm:$0xff]
        %v2701 = vld [vmem:[%s2690 + $0xa5] sm:$0xff]
        %v2702 = vld [vmem:[%s2690 + $0xad] sm:$0xff]
        %v2703 = vld [vmem:[%s2690 + $0xc5] sm:$0xff]
        %v2704 = vld [vmem:[%s2690 + $0xcd] sm:$0xff]
        %v2705 = vld [vmem:[%s2690 + $0xe5] sm:$0xff]
        %v2706 = vld [vmem:[%s2690 + $0xed] sm:$0xff]
        %v2707 = vld [vmem:[%s2690 + $0x105] sm:$0xff]
        %v2708 = vld [vmem:[%s2690 + $0x10d] sm:$0xff]
        %v2709 = vld [vmem:[%s2690 + $0x125] sm:$0xff]
        %v2710 = vld [vmem:[%s2690 + $0x12d] sm:$0xff]
        %v2711 = vld [vmem:[%s2690 + $0x145] sm:$0xff]
        %v2712 = vld [vmem:[%s2690 + $0x14d] sm:$0xff]
        %v2713 = vld [vmem:[%s2690 + $0x165] sm:$0xff]
        %v2714 = vld [vmem:[%s2690 + $0x16d] sm:$0xff]
        %v2715 = vld [vmem:[%s2690 + $0x185] sm:$0xff]
        %v2716 = vld [vmem:[%s2690 + $0x18d] sm:$0xff]
        %v2717 = vld [vmem:[%s2690 + $0x1a5] sm:$0xff]
        %v2718 = vld [vmem:[%s2690 + $0x1ad] sm:$0xff]
        %v2719 = vld [vmem:[%s2690 + $0x1c5] sm:$0xff]
        %v2720 = vld [vmem:[%s2690 + $0x1cd] sm:$0xff]
        %v2721 = vld [vmem:[%s2690 + $0x1e5] sm:$0xff]
        %v2722 = vld [vmem:[%s2690 + $0x1ed] sm:$0xff]
        %v2723 = vld [vmem:[%s233 + $0x17] sm:$0x1]
        %v2724 = vlaneseq
        %v2725 = vshrl.u32 %v2724, 7
        %v2726 = vsub.s32 0, %v2725
        %v2727 = vrot.slane %v2723, %v2726
        %v2728 = vmul.f32 %v2691, %v2727
        %v2729 = vmul.f32 %v2692, %v2727
        %v2730 = vmul.f32 %v2693, %v2727
        %v2731 = vmul.f32 %v2694, %v2727
        %v2732 = vmul.f32 %v2695, %v2727
        %v2733 = vmul.f32 %v2696, %v2727
        %v2734 = vmul.f32 %v2697, %v2727
        %v2735 = vmul.f32 %v2698, %v2727
        %v2736 = vmul.f32 %v2699, %v2727
        %v2737 = vmul.f32 %v2700, %v2727
        %v2738 = vmul.f32 %v2701, %v2727
        %v2739 = vmul.f32 %v2702, %v2727
        %v2740 = vmul.f32 %v2703, %v2727
        %v2741 = vmul.f32 %v2704, %v2727
        %v2742 = vmul.f32 %v2705, %v2727
        %v2743 = vmul.f32 %v2706, %v2727
        %v2744 = vmul.f32 %v2707, %v2727
        %v2745 = vmul.f32 %v2708, %v2727
        %v2746 = vmul.f32 %v2709, %v2727
        %v2747 = vmul.f32 %v2710, %v2727
        %v2748 = vmul.f32 %v2711, %v2727
        %v2749 = vmul.f32 %v2712, %v2727
        %v2750 = vmul.f32 %v2713, %v2727
        %v2751 = vmul.f32 %v2714, %v2727
        %v2752 = vmul.f32 %v2715, %v2727
        %v2753 = vmul.f32 %v2716, %v2727
        %v2754 = vmul.f32 %v2717, %v2727
        %v2755 = vmul.f32 %v2718, %v2727
        %v2756 = vmul.f32 %v2719, %v2727
        %v2757 = vmul.f32 %v2720, %v2727
        %v2758 = vmul.f32 %v2721, %v2727
        %v2759 = vmul.f32 %v2722, %v2727
        %v2760 = vadd.f32 %v2658, %v2728
        %v2761 = vadd.f32 %v2659, %v2729
        %v2762 = vadd.f32 %v2660, %v2730
        %v2763 = vadd.f32 %v2661, %v2731
        %v2764 = vadd.f32 %v2662, %v2732
        %v2765 = vadd.f32 %v2663, %v2733
        %v2766 = vadd.f32 %v2664, %v2734
        %v2767 = vadd.f32 %v2665, %v2735
        %v2768 = vadd.f32 %v2666, %v2736
        %v2769 = vadd.f32 %v2667, %v2737
        %v2770 = vadd.f32 %v2668, %v2738
        %v2771 = vadd.f32 %v2669, %v2739
        %v2772 = vadd.f32 %v2670, %v2740
        %v2773 = vadd.f32 %v2671, %v2741
        %v2774 = vadd.f32 %v2672, %v2742
        %v2775 = vadd.f32 %v2673, %v2743
        %v2776 = vadd.f32 %v2674, %v2744
        %v2777 = vadd.f32 %v2675, %v2745
        %v2778 = vadd.f32 %v2676, %v2746
        %v2779 = vadd.f32 %v2677, %v2747
        %v2780 = vadd.f32 %v2678, %v2748
        %v2781 = vadd.f32 %v2679, %v2749
        %v2782 = vadd.f32 %v2680, %v2750
        %v2783 = vadd.f32 %v2681, %v2751
        %v2784 = vadd.f32 %v2682, %v2752
        %v2785 = vadd.f32 %v2683, %v2753
        %v2786 = vadd.f32 %v2684, %v2754
        %v2787 = vadd.f32 %v2685, %v2755
        %v2788 = vadd.f32 %v2686, %v2756
        %v2789 = vadd.f32 %v2687, %v2757
        %v2790 = vadd.f32 %v2688, %v2758
        %v2791 = vadd.f32 %v2689, %v2759
        %s2792 = scalar_lea.vmem [#allocation2], 320
        %v2793 = vld [vmem:[%s2792 + $0x5] sm:$0xff]
        %v2794 = vld [vmem:[%s2792 + $0xd] sm:$0xff]
        %v2795 = vld [vmem:[%s2792 + $0x25] sm:$0xff]
        %v2796 = vld [vmem:[%s2792 + $0x2d] sm:$0xff]
        %v2797 = vld [vmem:[%s2792 + $0x45] sm:$0xff]
        %v2798 = vld [vmem:[%s2792 + $0x4d] sm:$0xff]
        %v2799 = vld [vmem:[%s2792 + $0x65] sm:$0xff]
        %v2800 = vld [vmem:[%s2792 + $0x6d] sm:$0xff]
        %v2801 = vld [vmem:[%s2792 + $0x85] sm:$0xff]
        %v2802 = vld [vmem:[%s2792 + $0x8d] sm:$0xff]
        %v2803 = vld [vmem:[%s2792 + $0xa5] sm:$0xff]
        %v2804 = vld [vmem:[%s2792 + $0xad] sm:$0xff]
        %v2805 = vld [vmem:[%s2792 + $0xc5] sm:$0xff]
        %v2806 = vld [vmem:[%s2792 + $0xcd] sm:$0xff]
        %v2807 = vld [vmem:[%s2792 + $0xe5] sm:$0xff]
        %v2808 = vld [vmem:[%s2792 + $0xed] sm:$0xff]
        %v2809 = vld [vmem:[%s2792 + $0x105] sm:$0xff]
        %v2810 = vld [vmem:[%s2792 + $0x10d] sm:$0xff]
        %v2811 = vld [vmem:[%s2792 + $0x125] sm:$0xff]
        %v2812 = vld [vmem:[%s2792 + $0x12d] sm:$0xff]
        %v2813 = vld [vmem:[%s2792 + $0x145] sm:$0xff]
        %v2814 = vld [vmem:[%s2792 + $0x14d] sm:$0xff]
        %v2815 = vld [vmem:[%s2792 + $0x165] sm:$0xff]
        %v2816 = vld [vmem:[%s2792 + $0x16d] sm:$0xff]
        %v2817 = vld [vmem:[%s2792 + $0x185] sm:$0xff]
        %v2818 = vld [vmem:[%s2792 + $0x18d] sm:$0xff]
        %v2819 = vld [vmem:[%s2792 + $0x1a5] sm:$0xff]
        %v2820 = vld [vmem:[%s2792 + $0x1ad] sm:$0xff]
        %v2821 = vld [vmem:[%s2792 + $0x1c5] sm:$0xff]
        %v2822 = vld [vmem:[%s2792 + $0x1cd] sm:$0xff]
        %v2823 = vld [vmem:[%s2792 + $0x1e5] sm:$0xff]
        %v2824 = vld [vmem:[%s2792 + $0x1ed] sm:$0xff]
        %v2825 = vld [vmem:[%s233 + $0x18] sm:$0x1]
        %v2826 = vlaneseq
        %v2827 = vshrl.u32 %v2826, 7
        %v2828 = vsub.s32 0, %v2827
        %v2829 = vrot.slane %v2825, %v2828
        %v2830 = vmul.f32 %v2793, %v2829
        %v2831 = vmul.f32 %v2794, %v2829
        %v2832 = vmul.f32 %v2795, %v2829
        %v2833 = vmul.f32 %v2796, %v2829
        %v2834 = vmul.f32 %v2797, %v2829
        %v2835 = vmul.f32 %v2798, %v2829
        %v2836 = vmul.f32 %v2799, %v2829
        %v2837 = vmul.f32 %v2800, %v2829
        %v2838 = vmul.f32 %v2801, %v2829
        %v2839 = vmul.f32 %v2802, %v2829
        %v2840 = vmul.f32 %v2803, %v2829
        %v2841 = vmul.f32 %v2804, %v2829
        %v2842 = vmul.f32 %v2805, %v2829
        %v2843 = vmul.f32 %v2806, %v2829
        %v2844 = vmul.f32 %v2807, %v2829
        %v2845 = vmul.f32 %v2808, %v2829
        %v2846 = vmul.f32 %v2809, %v2829
        %v2847 = vmul.f32 %v2810, %v2829
        %v2848 = vmul.f32 %v2811, %v2829
        %v2849 = vmul.f32 %v2812, %v2829
        %v2850 = vmul.f32 %v2813, %v2829
        %v2851 = vmul.f32 %v2814, %v2829
        %v2852 = vmul.f32 %v2815, %v2829
        %v2853 = vmul.f32 %v2816, %v2829
        %v2854 = vmul.f32 %v2817, %v2829
        %v2855 = vmul.f32 %v2818, %v2829
        %v2856 = vmul.f32 %v2819, %v2829
        %v2857 = vmul.f32 %v2820, %v2829
        %v2858 = vmul.f32 %v2821, %v2829
        %v2859 = vmul.f32 %v2822, %v2829
        %v2860 = vmul.f32 %v2823, %v2829
        %v2861 = vmul.f32 %v2824, %v2829
        %v2862 = vadd.f32 %v2760, %v2830
        %v2863 = vadd.f32 %v2761, %v2831
        %v2864 = vadd.f32 %v2762, %v2832
        %v2865 = vadd.f32 %v2763, %v2833
        %v2866 = vadd.f32 %v2764, %v2834
        %v2867 = vadd.f32 %v2765, %v2835
        %v2868 = vadd.f32 %v2766, %v2836
        %v2869 = vadd.f32 %v2767, %v2837
        %v2870 = vadd.f32 %v2768, %v2838
        %v2871 = vadd.f32 %v2769, %v2839
        %v2872 = vadd.f32 %v2770, %v2840
        %v2873 = vadd.f32 %v2771, %v2841
        %v2874 = vadd.f32 %v2772, %v2842
        %v2875 = vadd.f32 %v2773, %v2843
        %v2876 = vadd.f32 %v2774, %v2844
        %v2877 = vadd.f32 %v2775, %v2845
        %v2878 = vadd.f32 %v2776, %v2846
        %v2879 = vadd.f32 %v2777, %v2847
        %v2880 = vadd.f32 %v2778, %v2848
        %v2881 = vadd.f32 %v2779, %v2849
        %v2882 = vadd.f32 %v2780, %v2850
        %v2883 = vadd.f32 %v2781, %v2851
        %v2884 = vadd.f32 %v2782, %v2852
        %v2885 = vadd.f32 %v2783, %v2853
        %v2886 = vadd.f32 %v2784, %v2854
        %v2887 = vadd.f32 %v2785, %v2855
        %v2888 = vadd.f32 %v2786, %v2856
        %v2889 = vadd.f32 %v2787, %v2857
        %v2890 = vadd.f32 %v2788, %v2858
        %v2891 = vadd.f32 %v2789, %v2859
        %v2892 = vadd.f32 %v2790, %v2860
        %v2893 = vadd.f32 %v2791, %v2861
        %v2894 = vld [vmem:[%s236] sm:$0x1]
        %v2896 = vlaneseq
        %v2897 = vshrl.u32 %v2896, 7
        %v2898 = vsub.s32 0, %v2897
        %v2899 = vrot.slane %v2894, %v2898
        %v2901 = vadd.f32 %v2862, %v2899
        %v2902 = vadd.f32 %v2863, %v2899
        %v2903 = vadd.f32 %v2864, %v2899
        %v2904 = vadd.f32 %v2865, %v2899
        %v2905 = vadd.f32 %v2866, %v2899
        %v2906 = vadd.f32 %v2867, %v2899
        %v2907 = vadd.f32 %v2868, %v2899
        %v2908 = vadd.f32 %v2869, %v2899
        %v2909 = vadd.f32 %v2870, %v2899
        %v2910 = vadd.f32 %v2871, %v2899
        %v2911 = vadd.f32 %v2872, %v2899
        %v2912 = vadd.f32 %v2873, %v2899
        %v2913 = vadd.f32 %v2874, %v2899
        %v2914 = vadd.f32 %v2875, %v2899
        %v2915 = vadd.f32 %v2876, %v2899
        %v2916 = vadd.f32 %v2877, %v2899
        %v2917 = vadd.f32 %v2878, %v2899
        %v2918 = vadd.f32 %v2879, %v2899
        %v2919 = vadd.f32 %v2880, %v2899
        %v2920 = vadd.f32 %v2881, %v2899
        %v2921 = vadd.f32 %v2882, %v2899
        %v2922 = vadd.f32 %v2883, %v2899
        %v2923 = vadd.f32 %v2884, %v2899
        %v2924 = vadd.f32 %v2885, %v2899
        %v2925 = vadd.f32 %v2886, %v2899
        %v2926 = vadd.f32 %v2887, %v2899
        %v2927 = vadd.f32 %v2888, %v2899
        %v2928 = vadd.f32 %v2889, %v2899
        %v2929 = vadd.f32 %v2890, %v2899
        %v2930 = vadd.f32 %v2891, %v2899
        %v2931 = vadd.f32 %v2892, %v2899
        %v2932 = vadd.f32 %v2893, %v2899
        %2933 = vst.msk [vmem:[%s229] sm:$0xff] %vm237, %v2901
        %2934 = vst.msk [vmem:[%s229 + $0x8] sm:$0xff] %vm237, %v2902
        %2935 = vst.msk [vmem:[%s229 + $0x10] sm:$0xff] %vm237, %v2903
        %2936 = vst.msk [vmem:[%s229 + $0x18] sm:$0xff] %vm237, %v2904
        %2937 = vst.msk [vmem:[%s229 + $0x20] sm:$0xff] %vm237, %v2905
        %2938 = vst.msk [vmem:[%s229 + $0x28] sm:$0xff] %vm237, %v2906
        %2939 = vst.msk [vmem:[%s229 + $0x30] sm:$0xff] %vm237, %v2907
        %2940 = vst.msk [vmem:[%s229 + $0x38] sm:$0xff] %vm237, %v2908
        %2941 = vst.msk [vmem:[%s229 + $0x40] sm:$0xff] %vm237, %v2909
        %2942 = vst.msk [vmem:[%s229 + $0x48] sm:$0xff] %vm237, %v2910
        %2943 = vst.msk [vmem:[%s229 + $0x50] sm:$0xff] %vm237, %v2911
        %2944 = vst.msk [vmem:[%s229 + $0x58] sm:$0xff] %vm237, %v2912
        %2945 = vst.msk [vmem:[%s229 + $0x60] sm:$0xff] %vm237, %v2913
        %2946 = vst.msk [vmem:[%s229 + $0x68] sm:$0xff] %vm237, %v2914
        %2947 = vst.msk [vmem:[%s229 + $0x70] sm:$0xff] %vm237, %v2915
        %2948 = vst.msk [vmem:[%s229 + $0x78] sm:$0xff] %vm237, %v2916
        %2949 = vst.msk [vmem:[%s229 + $0x80] sm:$0xff] %vm237, %v2917
        %2950 = vst.msk [vmem:[%s229 + $0x88] sm:$0xff] %vm237, %v2918
        %2951 = vst.msk [vmem:[%s229 + $0x90] sm:$0xff] %vm237, %v2919
        %2952 = vst.msk [vmem:[%s229 + $0x98] sm:$0xff] %vm237, %v2920
        %2953 = vst.msk [vmem:[%s229 + $0xa0] sm:$0xff] %vm237, %v2921
        %2954 = vst.msk [vmem:[%s229 + $0xa8] sm:$0xff] %vm237, %v2922
        %2955 = vst.msk [vmem:[%s229 + $0xb0] sm:$0xff] %vm237, %v2923
        %2956 = vst.msk [vmem:[%s229 + $0xb8] sm:$0xff] %vm237, %v2924
        %2957 = vst.msk [vmem:[%s229 + $0xc0] sm:$0xff] %vm237, %v2925
        %2958 = vst.msk [vmem:[%s229 + $0xc8] sm:$0xff] %vm237, %v2926
        %2959 = vst.msk [vmem:[%s229 + $0xd0] sm:$0xff] %vm237, %v2927
        %2960 = vst.msk [vmem:[%s229 + $0xd8] sm:$0xff] %vm237, %v2928
        %2961 = vst.msk [vmem:[%s229 + $0xe0] sm:$0xff] %vm237, %v2929
        %2962 = vst.msk [vmem:[%s229 + $0xe8] sm:$0xff] %vm237, %v2930
        %2963 = vst.msk [vmem:[%s229 + $0xf0] sm:$0xff] %vm237, %v2931
        %2964 = vst.msk [vmem:[%s229 + $0xf8] sm:$0xff] %vm237, %v2932
        %s2965 = sand.u32 %s122, 1
        %s2966 = scalar_lea.sflag [#allocation5], %s2965
        %s2967 = sand.u32 %s122, 1
        %s2968 = smul.addr %s2967, 256
        %s2969 = scalar_lea.vmem [#allocation6], %s2968
        // Predicated region
        $region37: #{tpu_custom_call.1} parent=31 // pred_check
          %p2970 = pneg %p132
        $region38: #{tpu_custom_call.1} parent=31 // pred_check_branch
          %2972 = sbr.rel (%p2970) target = $region40
        $region39: #{tpu_custom_call.1} parent=31 // pred_region
          %s2974 = ssub.s32 4096, 4096
          %2975 = vsyncadd %s2966, %s2974
          %s2976 = smul.addr %s24, 32
          %s2977 = sadd.s32 %s25, %s2976
          %s2978 = smul.addr %s2977, 128
          %s2979 = scalar_lea.hbm %s3, %s2978
          %s2980 = sshll.u32 %s2969, 4
          %s2981 = int_to_ptr.vmem [resolvable:$true] %s2980
          %2986 = dma.vmem_to_hbm [thread:$0]  %s2981, 4096, %s2979, %s2966, 128, 128, 8
        $region40: #{tpu_custom_call.1} parent=31 // pred_fallthru
          _
      $region32: #{tpu_custom_call.1} parent=5 // pred_fallthru
        _
      %p2987 = scmp.le.s32.totalorder 2, %s15
      // Predicated region
      $region41: #{tpu_custom_call.1} parent=5 // pred_check
        %p2988 = pneg %p2987
      $region42: #{tpu_custom_call.1} parent=5 // pred_check_branch
        %2990 = sbr.rel (%p2988) target = $region44
      $region43: #{tpu_custom_call.1} parent=5 // pred_region
        %s2991 = ssub.s32 %s15, 2
        // Predicated region
        $region45: #{tpu_custom_call.1} parent=43 // pred_check
          %p2992 = pneg %p138
        $region46: #{tpu_custom_call.1} parent=43 // pred_check_branch
          %2994 = sbr.rel (%p2992) target = $region48
        $region47: #{tpu_custom_call.1} parent=43 // pred_region
          %s2995 = sand.u32 %s123, 1
          %s2996 = scalar_lea.sflag [#allocation5], %s2995
          %s2997 = sand.u32 %s123, 1
          %s2998 = smul.addr %s2997, 256
          %s2999 = scalar_lea.vmem [#allocation6], %s2998
          %3000 = dma.done %s2996, 4096
        $region48: #{tpu_custom_call.1} parent=43 // pred_fallthru
          _
      $region44: #{tpu_custom_call.1} parent=5 // pred_fallthru
        _
    $region6: #{tpu_custom_call.1} parent=1 // loop_footer
      %s19 = sadd.s32 1, %s15
    $region7: #{tpu_custom_call.1} parent=1 // loop_footer_branch
      %14 = sbr.rel target = $region3
    $region8: #{tpu_custom_call.1} parent=1 // loop_exit
      _
    %3001 = vsyncpa [#allocation4], 1
    %s3002 = scalar_lea.sflag [#allocation4], 1
    %3003 = vsyncpa %s3002, 1
    %3004 = vsyncpa [#allocation5], 1
    %s3005 = scalar_lea.sflag [#allocation5], 1
    %3006 = vsyncpa %s3005, 1

</llo_original>
